<compile_context>
chip_gen: v7x
topology: tpu7x:2x2x1
jax: 0.10.0
libtpu: 0.0.40
codegen_flags: <defaults>
</compile_context>

<pallas_src>
import math
import jax
import jax.numpy as jnp
from jax.experimental import pallas as pl
from jax.experimental.pallas import tpu as pltpu  # noqa: F401  (TPU backend)


def _round_up(v, m):
    return (v + m - 1) // m * m


# ---------------------------------------------------------------------------
# Kernel 1: conv1 (1->6, 5x5) + bias + ReLU + 2x2 max-pool
#   p1_ref : (4*Mp, 25)  im2col patches, 4 row-groups = the 2x2 pool offsets
#   w1_ref : (25, 6), b1_ref : (1, 6)
#   o_ref  : (Mp, 6)     pooled activations, rows ordered (n, u, v) (NHWC-flat)
# ---------------------------------------------------------------------------
def conv1_pool_kernel(p1_ref, w1_ref, b1_ref, o_ref):
    mp = o_ref.shape[0]                      # rows per pool-offset group (8-aligned)
    z = jnp.dot(p1_ref[...], w1_ref[...], preferred_element_type=jnp.float32)
    m = jnp.maximum(jnp.maximum(z[0 * mp:1 * mp], z[1 * mp:2 * mp]),
                    jnp.maximum(z[2 * mp:3 * mp], z[3 * mp:4 * mp]))
    o_ref[...] = jnp.maximum(m + b1_ref[...], 0.0)


# ---------------------------------------------------------------------------
# Kernel 2: conv2 (6->16, 5x5) + bias + ReLU + 2x2 max-pool + fc1 + fc2 + fc3
#   p2_ref : (4*25*NP, 150) im2col patches, 4 row-groups = pool offsets,
#            rows inside a group ordered (spatial s2 major, batch n minor,
#            n padded to NP = multiple of 8), cols ordered (kh, kw, c)
#   w2_ref : (150, 16), b2_ref : (1, 16)
#   fw1_ref: (25, 16, 120) = fc1 weight indexed [s2, c, out]  (flatten fused
#            as a sum of 25 per-spatial-position dots -> no in-kernel reshape)
#   fw2_ref: (120, 84), fw3_ref: (84, 10), biases (1, ...)
#   o_ref  : (NP, 10)
# ---------------------------------------------------------------------------
def conv2_pool_fc_kernel(p2_ref, w2_ref, b2_ref, fw1_ref, fb1_ref,
                         fw2_ref, fb2_ref, fw3_ref, fb3_ref, o_ref):
    npad = o_ref.shape[0]                    # padded batch (multiple of 8)
    g = 25 * npad                            # rows per pool-offset group
    z = jnp.dot(p2_ref[...], w2_ref[...], preferred_element_type=jnp.float32)
    m = jnp.maximum(jnp.maximum(z[0 * g:1 * g], z[1 * g:2 * g]),
                    jnp.maximum(z[2 * g:3 * g], z[3 * g:4 * g]))
    h2 = jnp.maximum(m + b2_ref[...], 0.0)   # (g, 16), rows = (s2, n)

    # fc1: joint contraction over (spatial, channel) as 25 aligned block dots.
    acc = jnp.zeros((npad, 120), dtype=jnp.float32)
    for s in range(25):
        acc = acc + jnp.dot(h2[s * npad:(s + 1) * npad, :], fw1_ref[s],
                            preferred_element_type=jnp.float32)
    h3 = jnp.maximum(acc + fb1_ref[...], 0.0)                        # (NP, 120)
    h4 = jnp.maximum(
        jnp.dot(h3, fw2_ref[...], preferred_element_type=jnp.float32)
        + fb2_ref[...], 0.0)                                         # (NP, 84)
    o_ref[...] = (jnp.dot(h4, fw3_ref[...], preferred_element_type=jnp.float32)
                  + fb3_ref[...])                                    # (NP, 10)


# ---------------------------------------------------------------------------
# pallas_call wrappers: tiny problem -> single full-array block, grid=(1,)
# ---------------------------------------------------------------------------
def _full_spec(arr):
    nd = arr.ndim
    return pl.BlockSpec(arr.shape, lambda i, _nd=nd: (0,) * _nd)


def conv1_pool(p1, w1, b1, mp):
    return pl.pallas_call(
        conv1_pool_kernel,
        out_shape=jax.ShapeDtypeStruct((mp, 6), jnp.float32),
        grid=(1,),
        in_specs=[_full_spec(p1), _full_spec(w1), _full_spec(b1)],
        out_specs=pl.BlockSpec((mp, 6), lambda i: (0, 0)),
    )(p1, w1, b1)


def conv2_pool_fc(p2, params, npad):
    args = (p2, params["w2"], params["b2"], params["fw1"], params["fb1"],
            params["fw2"], params["fb2"], params["fw3"], params["fb3"])
    return pl.pallas_call(
        conv2_pool_fc_kernel,
        out_shape=jax.ShapeDtypeStruct((npad, 10), jnp.float32),
        grid=(1,),
        in_specs=[_full_spec(a) for a in args],
        out_specs=pl.BlockSpec((npad, 10), lambda i: (0, 0)),
    )(*args)


# ---------------------------------------------------------------------------
# Forward pass (matches Net.forward semantics; external layout is NCHW)
# ---------------------------------------------------------------------------
def net_forward(x, params):
    N = x.shape[0]
    img = x[:, 0]                                            # (N, 32, 32)

    # ---- conv1 im2col, grouped by the 2x2 pool offset: static strided slices
    M1 = N * 14 * 14
    M1P = _round_up(M1, 8)
    groups = []
    for dh in (0, 1):
        for dw in (0, 1):
            cols = [img[:, dh + kh:dh + kh + 28:2, dw + kw:dw + kw + 28:2]
                    for kh in range(5) for kw in range(5)]   # 25 x (N,14,14)
            g = jnp.stack(cols, axis=-1).reshape(M1, 25)
            groups.append(jnp.pad(g, ((0, M1P - M1), (0, 0))))
    p1 = jnp.concatenate(groups, axis=0)                     # (4*M1P, 25)

    h1 = conv1_pool(p1, params["w1"], params["b1"], M1P)[:M1]
    h1 = h1.reshape(N, 14, 14, 6)                            # pooled NHWC map

    # ---- conv2 im2col, grouped by pool offset; rows (s2-major, n-minor pad 8)
    NP = _round_up(N, 8)
    groups = []
    for dh in (0, 1):
        for dw in (0, 1):
            cols = [h1[:, dh + kh:dh + kh + 10:2, dw + kw:dw + kw + 10:2, :]
                    for kh in range(5) for kw in range(5)]   # 25 x (N,5,5,6)
            g = jnp.stack(cols, axis=-2).reshape(N, 25, 150)  # cols=(kh,kw,c)
            g = jnp.transpose(g, (1, 0, 2))                   # (25, N, 150)
            g = jnp.pad(g, ((0, 0), (0, NP - N), (0, 0)))     # (25, NP, 150)
            groups.append(g.reshape(25 * NP, 150))
    p2 = jnp.concatenate(groups, axis=0)                      # (4*25*NP, 150)

    out = conv2_pool_fc(p2, params, NP)                       # (NP, 10)
    return out[:N]


# ---------------------------------------------------------------------------
# Parameter init (PyTorch default uniform init), with all layout reorderings
# (conv weight flattening, fc1 (c, ph, pw) flatten order, transposes) folded in.
# ---------------------------------------------------------------------------
def init_params(key):
    def u(k, shape, fan_in):
        bound = 1.0 / math.sqrt(fan_in)
        return jax.random.uniform(k, shape, jnp.float32, -bound, bound)

    ks = jax.random.split(key, 10)
    w1 = u(ks[0], (6, 1, 5, 5), 25)        # PyTorch (OC, C, kh, kw)
    b1 = u(ks[1], (1, 6), 25)
    w2 = u(ks[2], (16, 6, 5, 5), 150)
    b2 = u(ks[3], (1, 16), 150)
    fw1 = u(ks[4], (120, 400), 400)        # PyTorch feature index = c*25 + s2
    fb1 = u(ks[5], (1, 120), 400)
    fw2 = u(ks[6], (84, 120), 120)
    fb2 = u(ks[7], (1, 84), 120)
    fw3 = u(ks[8], (10, 84), 84)
    fb3 = u(ks[9], (1, 10), 84)

    return dict(
        w1=w1.reshape(6, 25).T,                                    # (25, 6), rows (kh,kw)
        b1=b1,
        w2=jnp.transpose(w2, (2, 3, 1, 0)).reshape(150, 16),       # rows (kh,kw,c)
        b2=b2,
        fw1=jnp.transpose(fw1.reshape(120, 16, 25), (2, 1, 0)),    # (25, 16, 120)
        fb1=fb1,
        fw2=fw2.T, fb2=fb2,
        fw3=fw3.T, fb3=fb3,
    )


if __name__ == "__main__":
    key = jax.random.PRNGKey(0)
    kx, kp = jax.random.split(key)
    # Architecture requires 32x32 input so the flattened features are 16*5*5.
    x = jax.random.normal(kx, (2, 1, 32, 32), dtype=jnp.float32)
    params = init_params(kp)

    out = jax.block_until_ready(jax.jit(net_forward)(x, params))
    assert out.shape == (2, 10) and out.dtype == jnp.float32
    print("KERNEL_OK")
</pallas_src>

<mosaic_0001>
module attributes {stable_mosaic.version = 11 : i64} {
  func.func @conv1_pool_kernel(%arg0: i32, %arg1: memref<1568x25xf32, #tpu.memory_space<vmem>>, %arg2: memref<25x6xf32, #tpu.memory_space<vmem>>, %arg3: memref<1x6xf32, #tpu.memory_space<vmem>>, %arg4: memref<392x6xf32, #tpu.memory_space<vmem>>) attributes {dimension_semantics = [#tpu.dimension_semantics<arbitrary>], iteration_bounds = array<i64: 1>, scalar_prefetch = 0 : i64, scratch_operands = 0 : i64, tpu.core_type = #tpu.core_type<tc>, window_params = [{pipeline_mode = #tpu.pipeline_mode<synchronous>, transform_indices = @transform_0, window_bounds = array<i64: 1568, 25>}, {pipeline_mode = #tpu.pipeline_mode<synchronous>, transform_indices = @transform_1, window_bounds = array<i64: 25, 6>}, {pipeline_mode = #tpu.pipeline_mode<synchronous>, transform_indices = @transform_2, window_bounds = array<i64: 1, 6>}, {pipeline_mode = #tpu.pipeline_mode<synchronous>, transform_indices = @transform_3, window_bounds = array<i64: 392, 6>}]} {
    %c0 = arith.constant 0 : index
    %c0_0 = arith.constant 0 : index
    %0 = vector.load %arg1[%c0, %c0_0] : memref<1568x25xf32, #tpu.memory_space<vmem>>, vector<1568x25xf32>
    %c0_1 = arith.constant 0 : index
    %c0_2 = arith.constant 0 : index
    %1 = vector.load %arg2[%c0_1, %c0_2] : memref<25x6xf32, #tpu.memory_space<vmem>>, vector<25x6xf32>
    %cst = arith.constant dense<0.000000e+00> : vector<1568x6xf32>
    %2 = tpu.matmul %0, %1, %cst {dimension_numbers = #tpu.dot_dimension_numbers<[1], [0], [0], [1], [0, 0, 1, 1], [], []>} : vector<1568x25xf32>, vector<25x6xf32>, vector<1568x6xf32> -> vector<1568x6xf32>
    %3 = vector.extract_strided_slice %2 {offsets = [0, 0], sizes = [392, 6], strides = [1, 1]} : vector<1568x6xf32> to vector<392x6xf32>
    %4 = vector.extract_strided_slice %2 {offsets = [392, 0], sizes = [392, 6], strides = [1, 1]} : vector<1568x6xf32> to vector<392x6xf32>
    %5 = arith.maximumf %3, %4 : vector<392x6xf32>
    %6 = vector.extract_strided_slice %2 {offsets = [784, 0], sizes = [392, 6], strides = [1, 1]} : vector<1568x6xf32> to vector<392x6xf32>
    %7 = vector.extract_strided_slice %2 {offsets = [1176, 0], sizes = [392, 6], strides = [1, 1]} : vector<1568x6xf32> to vector<392x6xf32>
    %8 = arith.maximumf %6, %7 : vector<392x6xf32>
    %9 = arith.maximumf %5, %8 : vector<392x6xf32>
    %c0_3 = arith.constant 0 : index
    %c0_4 = arith.constant 0 : index
    %10 = vector.load %arg3[%c0_3, %c0_4] : memref<1x6xf32, #tpu.memory_space<vmem>>, vector<1x6xf32>
    %11 = vector.broadcast %10 : vector<1x6xf32> to vector<392x6xf32>
    %12 = arith.addf %9, %11 : vector<392x6xf32>
    %cst_5 = arith.constant 0.000000e+00 : f32
    %13 = vector.broadcast %cst_5 : f32 to vector<392x6xf32>
    %14 = arith.maximumf %12, %13 : vector<392x6xf32>
    %c0_6 = arith.constant 0 : index
    %c0_7 = arith.constant 0 : index
    %15 = vector.load %arg4[%c0_6, %c0_7] : memref<392x6xf32, #tpu.memory_space<vmem>>, vector<392x6xf32>
    tpu.vector_store %arg4[%c0_6, %c0_7], %14 {strides = array<i32>} : memref<392x6xf32, #tpu.memory_space<vmem>>, vector<392x6xf32>,
    return
  }
  func.func @transform_0(%arg0: i32) -> (i32, i32) {
    %c0_i32 = arith.constant 0 : i32
    %c0_i32_0 = arith.constant 0 : i32
    %c0_i32_1 = arith.constant 0 : i32
    return %c0_i32, %c0_i32_0 : i32, i32
  }
  func.func @transform_1(%arg0: i32) -> (i32, i32) {
    %c0_i32 = arith.constant 0 : i32
    %c0_i32_0 = arith.constant 0 : i32
    %c0_i32_1 = arith.constant 0 : i32
    return %c0_i32, %c0_i32_0 : i32, i32
  }
  func.func @transform_2(%arg0: i32) -> (i32, i32) {
    %c0_i32 = arith.constant 0 : i32
    %c0_i32_0 = arith.constant 0 : i32
    %c0_i32_1 = arith.constant 0 : i32
    return %c0_i32, %c0_i32_0 : i32, i32
  }
  func.func @transform_3(%arg0: i32) -> (i32, i32) {
    %c0_i32 = arith.constant 0 : i32
    %c0_i32_0 = arith.constant 0 : i32
    %c0_i32_1 = arith.constant 0 : i32
    return %c0_i32, %c0_i32_0 : i32, i32
  }
}

module attributes {stable_mosaic.version = 11 : i64} {
  func.func @conv2_pool_fc_kernel(%arg0: i32, %arg1: memref<800x150xf32, #tpu.memory_space<vmem>>, %arg2: memref<150x16xf32, #tpu.memory_space<vmem>>, %arg3: memref<1x16xf32, #tpu.memory_space<vmem>>, %arg4: memref<25x16x120xf32, #tpu.memory_space<vmem>>, %arg5: memref<1x120xf32, #tpu.memory_space<vmem>>, %arg6: memref<120x84xf32, #tpu.memory_space<vmem>>, %arg7: memref<1x84xf32, #tpu.memory_space<vmem>>, %arg8: memref<84x10xf32, #tpu.memory_space<vmem>>, %arg9: memref<1x10xf32, #tpu.memory_space<vmem>>, %arg10: memref<8x10xf32, #tpu.memory_space<vmem>>) attributes {dimension_semantics = [#tpu.dimension_semantics<arbitrary>], iteration_bounds = array<i64: 1>, scalar_prefetch = 0 : i64, scratch_operands = 0 : i64, tpu.core_type = #tpu.core_type<tc>, window_params = [{pipeline_mode = #tpu.pipeline_mode<synchronous>, transform_indices = @transform_0, window_bounds = array<i64: 800, 150>}, {pipeline_mode = #tpu.pipeline_mode<synchronous>, transform_indices = @transform_1, window_bounds = array<i64: 150, 16>}, {pipeline_mode = #tpu.pipeline_mode<synchronous>, transform_indices = @transform_2, window_bounds = array<i64: 1, 16>}, {pipeline_mode = #tpu.pipeline_mode<synchronous>, transform_indices = @transform_3, window_bounds = array<i64: 25, 16, 120>}, {pipeline_mode = #tpu.pipeline_mode<synchronous>, transform_indices = @transform_4, window_bounds = array<i64: 1, 120>}, {pipeline_mode = #tpu.pipeline_mode<synchronous>, transform_indices = @transform_5, window_bounds = array<i64: 120, 84>}, {pipeline_mode = #tpu.pipeline_mode<synchronous>, transform_indices = @transform_6, window_bounds = array<i64: 1, 84>}, {pipeline_mode = #tpu.pipeline_mode<synchronous>, transform_indices = @transform_7, window_bounds = array<i64: 84, 10>}, {pipeline_mode = #tpu.pipeline_mode<synchronous>, transform_indices = @transform_8, window_bounds = array<i64: 1, 10>}, {pipeline_mode = #tpu.pipeline_mode<synchronous>, transform_indices = @transform_9, window_bounds = array<i64: 8, 10>}]} {
    %c0 = arith.constant 0 : index
    %c0_0 = arith.constant 0 : index
    %0 = vector.load %arg1[%c0, %c0_0] : memref<800x150xf32, #tpu.memory_space<vmem>>, vector<800x150xf32>
    %c0_1 = arith.constant 0 : index
    %c0_2 = arith.constant 0 : index
    %1 = vector.load %arg2[%c0_1, %c0_2] : memref<150x16xf32, #tpu.memory_space<vmem>>, vector<150x16xf32>
    %cst = arith.constant dense<0.000000e+00> : vector<800x16xf32>
    %2 = tpu.matmul %0, %1, %cst {dimension_numbers = #tpu.dot_dimension_numbers<[1], [0], [0], [1], [0, 0, 1, 1], [], []>} : vector<800x150xf32>, vector<150x16xf32>, vector<800x16xf32> -> vector<800x16xf32>
    %3 = vector.extract_strided_slice %2 {offsets = [0, 0], sizes = [200, 16], strides = [1, 1]} : vector<800x16xf32> to vector<200x16xf32>
    %4 = vector.extract_strided_slice %2 {offsets = [200, 0], sizes = [200, 16], strides = [1, 1]} : vector<800x16xf32> to vector<200x16xf32>
    %5 = arith.maximumf %3, %4 : vector<200x16xf32>
    %6 = vector.extract_strided_slice %2 {offsets = [400, 0], sizes = [200, 16], strides = [1, 1]} : vector<800x16xf32> to vector<200x16xf32>
    %7 = vector.extract_strided_slice %2 {offsets = [600, 0], sizes = [200, 16], strides = [1, 1]} : vector<800x16xf32> to vector<200x16xf32>
    %8 = arith.maximumf %6, %7 : vector<200x16xf32>
    %9 = arith.maximumf %5, %8 : vector<200x16xf32>
    %c0_3 = arith.constant 0 : index
    %c0_4 = arith.constant 0 : index
    %10 = vector.load %arg3[%c0_3, %c0_4] : memref<1x16xf32, #tpu.memory_space<vmem>>, vector<1x16xf32>
    %11 = vector.broadcast %10 : vector<1x16xf32> to vector<200x16xf32>
    %12 = arith.addf %9, %11 : vector<200x16xf32>
    %cst_5 = arith.constant 0.000000e+00 : f32
    %13 = vector.broadcast %cst_5 : f32 to vector<200x16xf32>
    %14 = arith.maximumf %12, %13 : vector<200x16xf32>
    %cst_6 = arith.constant 0.000000e+00 : f32
    %15 = vector.broadcast %cst_6 : f32 to vector<8x120xf32>
    %16 = vector.extract_strided_slice %14 {offsets = [0, 0], sizes = [8, 16], strides = [1, 1]} : vector<200x16xf32> to vector<8x16xf32>
    %c0_7 = arith.constant 0 : index
    %c0_8 = arith.constant 0 : index
    %c0_9 = arith.constant 0 : index
    %17 = vector.load %arg4[%c0_7, %c0_8, %c0_9] : memref<25x16x120xf32, #tpu.memory_space<vmem>>, vector<1x16x120xf32>
    %18 = vector.shape_cast %17 : vector<1x16x120xf32> to vector<16x120xf32>
    %cst_10 = arith.constant dense<0.000000e+00> : vector<8x120xf32>
    %19 = tpu.matmul %16, %18, %cst_10 {dimension_numbers = #tpu.dot_dimension_numbers<[1], [0], [0], [1], [0, 0, 1, 1], [], []>} : vector<8x16xf32>, vector<16x120xf32>, vector<8x120xf32> -> vector<8x120xf32>
    %20 = arith.addf %15, %19 : vector<8x120xf32>
    %21 = vector.extract_strided_slice %14 {offsets = [8, 0], sizes = [8, 16], strides = [1, 1]} : vector<200x16xf32> to vector<8x16xf32>
    %c1 = arith.constant 1 : index
    %c0_11 = arith.constant 0 : index
    %c0_12 = arith.constant 0 : index
    %22 = vector.load %arg4[%c1, %c0_11, %c0_12] : memref<25x16x120xf32, #tpu.memory_space<vmem>>, vector<1x16x120xf32>
    %23 = vector.shape_cast %22 : vector<1x16x120xf32> to vector<16x120xf32>
    %cst_13 = arith.constant dense<0.000000e+00> : vector<8x120xf32>
    %24 = tpu.matmul %21, %23, %cst_13 {dimension_numbers = #tpu.dot_dimension_numbers<[1], [0], [0], [1], [0, 0, 1, 1], [], []>} : vector<8x16xf32>, vector<16x120xf32>, vector<8x120xf32> -> vector<8x120xf32>
    %25 = arith.addf %20, %24 : vector<8x120xf32>
    %26 = vector.extract_strided_slice %14 {offsets = [16, 0], sizes = [8, 16], strides = [1, 1]} : vector<200x16xf32> to vector<8x16xf32>
    %c2 = arith.constant 2 : index
    %c0_14 = arith.constant 0 : index
    %c0_15 = arith.constant 0 : index
    %27 = vector.load %arg4[%c2, %c0_14, %c0_15] : memref<25x16x120xf32, #tpu.memory_space<vmem>>, vector<1x16x120xf32>
    %28 = vector.shape_cast %27 : vector<1x16x120xf32> to vector<16x120xf32>
    %cst_16 = arith.constant dense<0.000000e+00> : vector<8x120xf32>
    %29 = tpu.matmul %26, %28, %cst_16 {dimension_numbers = #tpu.dot_dimension_numbers<[1], [0], [0], [1], [0, 0, 1, 1], [], []>} : vector<8x16xf32>, vector<16x120xf32>, vector<8x120xf32> -> vector<8x120xf32>
    %30 = arith.addf %25, %29 : vector<8x120xf32>
    %31 = vector.extract_strided_slice %14 {offsets = [24, 0], sizes = [8, 16], strides = [1, 1]} : vector<200x16xf32> to vector<8x16xf32>
    %c3 = arith.constant 3 : index
    %c0_17 = arith.constant 0 : index
    %c0_18 = arith.constant 0 : index
    %32 = vector.load %arg4[%c3, %c0_17, %c0_18] : memref<25x16x120xf32, #tpu.memory_space<vmem>>, vector<1x16x120xf32>
    %33 = vector.shape_cast %32 : vector<1x16x120xf32> to vector<16x120xf32>
    %cst_19 = arith.constant dense<0.000000e+00> : vector<8x120xf32>
    %34 = tpu.matmul %31, %33, %cst_19 {dimension_numbers = #tpu.dot_dimension_numbers<[1], [0], [0], [1], [0, 0, 1, 1], [], []>} : vector<8x16xf32>, vector<16x120xf32>, vector<8x120xf32> -> vector<8x120xf32>
    %35 = arith.addf %30, %34 : vector<8x120xf32>
    %36 = vector.extract_strided_slice %14 {offsets = [32, 0], sizes = [8, 16], strides = [1, 1]} : vector<200x16xf32> to vector<8x16xf32>
    %c4 = arith.constant 4 : index
    %c0_20 = arith.constant 0 : index
    %c0_21 = arith.constant 0 : index
    %37 = vector.load %arg4[%c4, %c0_20, %c0_21] : memref<25x16x120xf32, #tpu.memory_space<vmem>>, vector<1x16x120xf32>
    %38 = vector.shape_cast %37 : vector<1x16x120xf32> to vector<16x120xf32>
    %cst_22 = arith.constant dense<0.000000e+00> : vector<8x120xf32>
    %39 = tpu.matmul %36, %38, %cst_22 {dimension_numbers = #tpu.dot_dimension_numbers<[1], [0], [0], [1], [0, 0, 1, 1], [], []>} : vector<8x16xf32>, vector<16x120xf32>, vector<8x120xf32> -> vector<8x120xf32>
    %40 = arith.addf %35, %39 : vector<8x120xf32>
    %41 = vector.extract_strided_slice %14 {offsets = [40, 0], sizes = [8, 16], strides = [1, 1]} : vector<200x16xf32> to vector<8x16xf32>
    %c5 = arith.constant 5 : index
    %c0_23 = arith.constant 0 : index
    %c0_24 = arith.constant 0 : index
    %42 = vector.load %arg4[%c5, %c0_23, %c0_24] : memref<25x16x120xf32, #tpu.memory_space<vmem>>, vector<1x16x120xf32>
    %43 = vector.shape_cast %42 : vector<1x16x120xf32> to vector<16x120xf32>
    %cst_25 = arith.constant dense<0.000000e+00> : vector<8x120xf32>
    %44 = tpu.matmul %41, %43, %cst_25 {dimension_numbers = #tpu.dot_dimension_numbers<[1], [0], [0], [1], [0, 0, 1, 1], [], []>} : vector<8x16xf32>, vector<16x120xf32>, vector<8x120xf32> -> vector<8x120xf32>
    %45 = arith.addf %40, %44 : vector<8x120xf32>
    %46 = vector.extract_strided_slice %14 {offsets = [48, 0], sizes = [8, 16], strides = [1, 1]} : vector<200x16xf32> to vector<8x16xf32>
    %c6 = arith.constant 6 : index
    %c0_26 = arith.constant 0 : index
    %c0_27 = arith.constant 0 : index
    %47 = vector.load %arg4[%c6, %c0_26, %c0_27] : memref<25x16x120xf32, #tpu.memory_space<vmem>>, vector<1x16x120xf32>
    %48 = vector.shape_cast %47 : vector<1x16x120xf32> to vector<16x120xf32>
    %cst_28 = arith.constant dense<0.000000e+00> : vector<8x120xf32>
    %49 = tpu.matmul %46, %48, %cst_28 {dimension_numbers = #tpu.dot_dimension_numbers<[1], [0], [0], [1], [0, 0, 1, 1], [], []>} : vector<8x16xf32>, vector<16x120xf32>, vector<8x120xf32> -> vector<8x120xf32>
    %50 = arith.addf %45, %49 : vector<8x120xf32>
    %51 = vector.extract_strided_slice %14 {offsets = [56, 0], sizes = [8, 16], strides = [1, 1]} : vector<200x16xf32> to vector<8x16xf32>
    %c7 = arith.constant 7 : index
    %c0_29 = arith.constant 0 : index
    %c0_30 = arith.constant 0 : index
    %52 = vector.load %arg4[%c7, %c0_29, %c0_30] : memref<25x16x120xf32, #tpu.memory_space<vmem>>, vector<1x16x120xf32>
    %53 = vector.shape_cast %52 : vector<1x16x120xf32> to vector<16x120xf32>
    %cst_31 = arith.constant dense<0.000000e+00> : vector<8x120xf32>
    %54 = tpu.matmul %51, %53, %cst_31 {dimension_numbers = #tpu.dot_dimension_numbers<[1], [0], [0], [1], [0, 0, 1, 1], [], []>} : vector<8x16xf32>, vector<16x120xf32>, vector<8x120xf32> -> vector<8x120xf32>
    %55 = arith.addf %50, %54 : vector<8x120xf32>
    %56 = vector.extract_strided_slice %14 {offsets = [64, 0], sizes = [8, 16], strides = [1, 1]} : vector<200x16xf32> to vector<8x16xf32>
    %c8 = arith.constant 8 : index
    %c0_32 = arith.constant 0 : index
    %c0_33 = arith.constant 0 : index
    %57 = vector.load %arg4[%c8, %c0_32, %c0_33] : memref<25x16x120xf32, #tpu.memory_space<vmem>>, vector<1x16x120xf32>
    %58 = vector.shape_cast %57 : vector<1x16x120xf32> to vector<16x120xf32>
    %cst_34 = arith.constant dense<0.000000e+00> : vector<8x120xf32>
    %59 = tpu.matmul %56, %58, %cst_34 {dimension_numbers = #tpu.dot_dimension_numbers<[1], [0], [0], [1], [0, 0, 1, 1], [], []>} : vector<8x16xf32>, vector<16x120xf32>, vector<8x120xf32> -> vector<8x120xf32>
    %60 = arith.addf %55, %59 : vector<8x120xf32>
    %61 = vector.extract_strided_slice %14 {offsets = [72, 0], sizes = [8, 16], strides = [1, 1]} : vector<200x16xf32> to vector<8x16xf32>
    %c9 = arith.constant 9 : index
    %c0_35 = arith.constant 0 : index
    %c0_36 = arith.constant 0 : index
    %62 = vector.load %arg4[%c9, %c0_35, %c0_36] : memref<25x16x120xf32, #tpu.memory_space<vmem>>, vector<1x16x120xf32>
    %63 = vector.shape_cast %62 : vector<1x16x120xf32> to vector<16x120xf32>
    %cst_37 = arith.constant dense<0.000000e+00> : vector<8x120xf32>
    %64 = tpu.matmul %61, %63, %cst_37 {dimension_numbers = #tpu.dot_dimension_numbers<[1], [0], [0], [1], [0, 0, 1, 1], [], []>} : vector<8x16xf32>, vector<16x120xf32>, vector<8x120xf32> -> vector<8x120xf32>
    %65 = arith.addf %60, %64 : vector<8x120xf32>
    %66 = vector.extract_strided_slice %14 {offsets = [80, 0], sizes = [8, 16], strides = [1, 1]} : vector<200x16xf32> to vector<8x16xf32>
    %c10 = arith.constant 10 : index
    %c0_38 = arith.constant 0 : index
    %c0_39 = arith.constant 0 : index
    %67 = vector.load %arg4[%c10, %c0_38, %c0_39] : memref<25x16x120xf32, #tpu.memory_space<vmem>>, vector<1x16x120xf32>
    %68 = vector.shape_cast %67 : vector<1x16x120xf32> to vector<16x120xf32>
    %cst_40 = arith.constant dense<0.000000e+00> : vector<8x120xf32>
    %69 = tpu.matmul %66, %68, %cst_40 {dimension_numbers = #tpu.dot_dimension_numbers<[1], [0], [0], [1], [0, 0, 1, 1], [], []>} : vector<8x16xf32>, vector<16x120xf32>, vector<8x120xf32> -> vector<8x120xf32>
    %70 = arith.addf %65, %69 : vector<8x120xf32>
    %71 = vector.extract_strided_slice %14 {offsets = [88, 0], sizes = [8, 16], strides = [1, 1]} : vector<200x16xf32> to vector<8x16xf32>
    %c11 = arith.constant 11 : index
    %c0_41 = arith.constant 0 : index
    %c0_42 = arith.constant 0 : index
    %72 = vector.load %arg4[%c11, %c0_41, %c0_42] : memref<25x16x120xf32, #tpu.memory_space<vmem>>, vector<1x16x120xf32>
    %73 = vector.shape_cast %72 : vector<1x16x120xf32> to vector<16x120xf32>
    %cst_43 = arith.constant dense<0.000000e+00> : vector<8x120xf32>
    %74 = tpu.matmul %71, %73, %cst_43 {dimension_numbers = #tpu.dot_dimension_numbers<[1], [0], [0], [1], [0, 0, 1, 1], [], []>} : vector<8x16xf32>, vector<16x120xf32>, vector<8x120xf32> -> vector<8x120xf32>
    %75 = arith.addf %70, %74 : vector<8x120xf32>
    %76 = vector.extract_strided_slice %14 {offsets = [96, 0], sizes = [8, 16], strides = [1, 1]} : vector<200x16xf32> to vector<8x16xf32>
    %c12 = arith.constant 12 : index
    %c0_44 = arith.constant 0 : index
    %c0_45 = arith.constant 0 : index
    %77 = vector.load %arg4[%c12, %c0_44, %c0_45] : memref<25x16x120xf32, #tpu.memory_space<vmem>>, vector<1x16x120xf32>
    %78 = vector.shape_cast %77 : vector<1x16x120xf32> to vector<16x120xf32>
    %cst_46 = arith.constant dense<0.000000e+00> : vector<8x120xf32>
    %79 = tpu.matmul %76, %78, %cst_46 {dimension_numbers = #tpu.dot_dimension_numbers<[1], [0], [0], [1], [0, 0, 1, 1], [], []>} : vector<8x16xf32>, vector<16x120xf32>, vector<8x120xf32> -> vector<8x120xf32>
    %80 = arith.addf %75, %79 : vector<8x120xf32>
    %81 = vector.extract_strided_slice %14 {offsets = [104, 0], sizes = [8, 16], strides = [1, 1]} : vector<200x16xf32> to vector<8x16xf32>
    %c13 = arith.constant 13 : index
    %c0_47 = arith.constant 0 : index
    %c0_48 = arith.constant 0 : index
    %82 = vector.load %arg4[%c13, %c0_47, %c0_48] : memref<25x16x120xf32, #tpu.memory_space<vmem>>, vector<1x16x120xf32>
    %83 = vector.shape_cast %82 : vector<1x16x120xf32> to vector<16x120xf32>
    %cst_49 = arith.constant dense<0.000000e+00> : vector<8x120xf32>
    %84 = tpu.matmul %81, %83, %cst_49 {dimension_numbers = #tpu.dot_dimension_numbers<[1], [0], [0], [1], [0, 0, 1, 1], [], []>} : vector<8x16xf32>, vector<16x120xf32>, vector<8x120xf32> -> vector<8x120xf32>
    %85 = arith.addf %80, %84 : vector<8x120xf32>
    %86 = vector.extract_strided_slice %14 {offsets = [112, 0], sizes = [8, 16], strides = [1, 1]} : vector<200x16xf32> to vector<8x16xf32>
    %c14 = arith.constant 14 : index
    %c0_50 = arith.constant 0 : index
    %c0_51 = arith.constant 0 : index
    %87 = vector.load %arg4[%c14, %c0_50, %c0_51] : memref<25x16x120xf32, #tpu.memory_space<vmem>>, vector<1x16x120xf32>
    %88 = vector.shape_cast %87 : vector<1x16x120xf32> to vector<16x120xf32>
    %cst_52 = arith.constant dense<0.000000e+00> : vector<8x120xf32>
    %89 = tpu.matmul %86, %88, %cst_52 {dimension_numbers = #tpu.dot_dimension_numbers<[1], [0], [0], [1], [0, 0, 1, 1], [], []>} : vector<8x16xf32>, vector<16x120xf32>, vector<8x120xf32> -> vector<8x120xf32>
    %90 = arith.addf %85, %89 : vector<8x120xf32>
    %91 = vector.extract_strided_slice %14 {offsets = [120, 0], sizes = [8, 16], strides = [1, 1]} : vector<200x16xf32> to vector<8x16xf32>
    %c15 = arith.constant 15 : index
    %c0_53 = arith.constant 0 : index
    %c0_54 = arith.constant 0 : index
    %92 = vector.load %arg4[%c15, %c0_53, %c0_54] : memref<25x16x120xf32, #tpu.memory_space<vmem>>, vector<1x16x120xf32>
    %93 = vector.shape_cast %92 : vector<1x16x120xf32> to vector<16x120xf32>
    %cst_55 = arith.constant dense<0.000000e+00> : vector<8x120xf32>
    %94 = tpu.matmul %91, %93, %cst_55 {dimension_numbers = #tpu.dot_dimension_numbers<[1], [0], [0], [1], [0, 0, 1, 1], [], []>} : vector<8x16xf32>, vector<16x120xf32>, vector<8x120xf32> -> vector<8x120xf32>
    %95 = arith.addf %90, %94 : vector<8x120xf32>
    %96 = vector.extract_strided_slice %14 {offsets = [128, 0], sizes = [8, 16], strides = [1, 1]} : vector<200x16xf32> to vector<8x16xf32>
    %c16 = arith.constant 16 : index
    %c0_56 = arith.constant 0 : index
    %c0_57 = arith.constant 0 : index
    %97 = vector.load %arg4[%c16, %c0_56, %c0_57] : memref<25x16x120xf32, #tpu.memory_space<vmem>>, vector<1x16x120xf32>
    %98 = vector.shape_cast %97 : vector<1x16x120xf32> to vector<16x120xf32>
    %cst_58 = arith.constant dense<0.000000e+00> : vector<8x120xf32>
    %99 = tpu.matmul %96, %98, %cst_58 {dimension_numbers = #tpu.dot_dimension_numbers<[1], [0], [0], [1], [0, 0, 1, 1], [], []>} : vector<8x16xf32>, vector<16x120xf32>, vector<8x120xf32> -> vector<8x120xf32>
    %100 = arith.addf %95, %99 : vector<8x120xf32>
    %101 = vector.extract_strided_slice %14 {offsets = [136, 0], sizes = [8, 16], strides = [1, 1]} : vector<200x16xf32> to vector<8x16xf32>
    %c17 = arith.constant 17 : index
    %c0_59 = arith.constant 0 : index
    %c0_60 = arith.constant 0 : index
    %102 = vector.load %arg4[%c17, %c0_59, %c0_60] : memref<25x16x120xf32, #tpu.memory_space<vmem>>, vector<1x16x120xf32>
    %103 = vector.shape_cast %102 : vector<1x16x120xf32> to vector<16x120xf32>
    %cst_61 = arith.constant dense<0.000000e+00> : vector<8x120xf32>
    %104 = tpu.matmul %101, %103, %cst_61 {dimension_numbers = #tpu.dot_dimension_numbers<[1], [0], [0], [1], [0, 0, 1, 1], [], []>} : vector<8x16xf32>, vector<16x120xf32>, vector<8x120xf32> -> vector<8x120xf32>
    %105 = arith.addf %100, %104 : vector<8x120xf32>
    %106 = vector.extract_strided_slice %14 {offsets = [144, 0], sizes = [8, 16], strides = [1, 1]} : vector<200x16xf32> to vector<8x16xf32>
    %c18 = arith.constant 18 : index
    %c0_62 = arith.constant 0 : index
    %c0_63 = arith.constant 0 : index
    %107 = vector.load %arg4[%c18, %c0_62, %c0_63] : memref<25x16x120xf32, #tpu.memory_space<vmem>>, vector<1x16x120xf32>
    %108 = vector.shape_cast %107 : vector<1x16x120xf32> to vector<16x120xf32>
    %cst_64 = arith.constant dense<0.000000e+00> : vector<8x120xf32>
    %109 = tpu.matmul %106, %108, %cst_64 {dimension_numbers = #tpu.dot_dimension_numbers<[1], [0], [0], [1], [0, 0, 1, 1], [], []>} : vector<8x16xf32>, vector<16x120xf32>, vector<8x120xf32> -> vector<8x120xf32>
    %110 = arith.addf %105, %109 : vector<8x120xf32>
    %111 = vector.extract_strided_slice %14 {offsets = [152, 0], sizes = [8, 16], strides = [1, 1]} : vector<200x16xf32> to vector<8x16xf32>
    %c19 = arith.constant 19 : index
    %c0_65 = arith.constant 0 : index
    %c0_66 = arith.constant 0 : index
    %112 = vector.load %arg4[%c19, %c0_65, %c0_66] : memref<25x16x120xf32, #tpu.memory_space<vmem>>, vector<1x16x120xf32>
    %113 = vector.shape_cast %112 : vector<1x16x120xf32> to vector<16x120xf32>
    %cst_67 = arith.constant dense<0.000000e+00> : vector<8x120xf32>
    %114 = tpu.matmul %111, %113, %cst_67 {dimension_numbers = #tpu.dot_dimension_numbers<[1], [0], [0], [1], [0, 0, 1, 1], [], []>} : vector<8x16xf32>, vector<16x120xf32>, vector<8x120xf32> -> vector<8x120xf32>
    %115 = arith.addf %110, %114 : vector<8x120xf32>
    %116 = vector.extract_strided_slice %14 {offsets = [160, 0], sizes = [8, 16], strides = [1, 1]} : vector<200x16xf32> to vector<8x16xf32>
    %c20 = arith.constant 20 : index
    %c0_68 = arith.constant 0 : index
    %c0_69 = arith.constant 0 : index
    %117 = vector.load %arg4[%c20, %c0_68, %c0_69] : memref<25x16x120xf32, #tpu.memory_space<vmem>>, vector<1x16x120xf32>
    %118 = vector.shape_cast %117 : vector<1x16x120xf32> to vector<16x120xf32>
    %cst_70 = arith.constant dense<0.000000e+00> : vector<8x120xf32>
    %119 = tpu.matmul %116, %118, %cst_70 {dimension_numbers = #tpu.dot_dimension_numbers<[1], [0], [0], [1], [0, 0, 1, 1], [], []>} : vector<8x16xf32>, vector<16x120xf32>, vector<8x120xf32> -> vector<8x120xf32>
    %120 = arith.addf %115, %119 : vector<8x120xf32>
    %121 = vector.extract_strided_slice %14 {offsets = [168, 0], sizes = [8, 16], strides = [1, 1]} : vector<200x16xf32> to vector<8x16xf32>
    %c21 = arith.constant 21 : index
    %c0_71 = arith.constant 0 : index
    %c0_72 = arith.constant 0 : index
    %122 = vector.load %arg4[%c21, %c0_71, %c0_72] : memref<25x16x120xf32, #tpu.memory_space<vmem>>, vector<1x16x120xf32>
    %123 = vector.shape_cast %122 : vector<1x16x120xf32> to vector<16x120xf32>
    %cst_73 = arith.constant dense<0.000000e+00> : vector<8x120xf32>
    %124 = tpu.matmul %121, %123, %cst_73 {dimension_numbers = #tpu.dot_dimension_numbers<[1], [0], [0], [1], [0, 0, 1, 1], [], []>} : vector<8x16xf32>, vector<16x120xf32>, vector<8x120xf32> -> vector<8x120xf32>
    %125 = arith.addf %120, %124 : vector<8x120xf32>
    %126 = vector.extract_strided_slice %14 {offsets = [176, 0], sizes = [8, 16], strides = [1, 1]} : vector<200x16xf32> to vector<8x16xf32>
    %c22 = arith.constant 22 : index
    %c0_74 = arith.constant 0 : index
    %c0_75 = arith.constant 0 : index
    %127 = vector.load %arg4[%c22, %c0_74, %c0_75] : memref<25x16x120xf32, #tpu.memory_space<vmem>>, vector<1x16x120xf32>
    %128 = vector.shape_cast %127 : vector<1x16x120xf32> to vector<16x120xf32>
    %cst_76 = arith.constant dense<0.000000e+00> : vector<8x120xf32>
    %129 = tpu.matmul %126, %128, %cst_76 {dimension_numbers = #tpu.dot_dimension_numbers<[1], [0], [0], [1], [0, 0, 1, 1], [], []>} : vector<8x16xf32>, vector<16x120xf32>, vector<8x120xf32> -> vector<8x120xf32>
    %130 = arith.addf %125, %129 : vector<8x120xf32>
    %131 = vector.extract_strided_slice %14 {offsets = [184, 0], sizes = [8, 16], strides = [1, 1]} : vector<200x16xf32> to vector<8x16xf32>
    %c23 = arith.constant 23 : index
    %c0_77 = arith.constant 0 : index
    %c0_78 = arith.constant 0 : index
    %132 = vector.load %arg4[%c23, %c0_77, %c0_78] : memref<25x16x120xf32, #tpu.memory_space<vmem>>, vector<1x16x120xf32>
    %133 = vector.shape_cast %132 : vector<1x16x120xf32> to vector<16x120xf32>
    %cst_79 = arith.constant dense<0.000000e+00> : vector<8x120xf32>
    %134 = tpu.matmul %131, %133, %cst_79 {dimension_numbers = #tpu.dot_dimension_numbers<[1], [0], [0], [1], [0, 0, 1, 1], [], []>} : vector<8x16xf32>, vector<16x120xf32>, vector<8x120xf32> -> vector<8x120xf32>
    %135 = arith.addf %130, %134 : vector<8x120xf32>
    %136 = vector.extract_strided_slice %14 {offsets = [192, 0], sizes = [8, 16], strides = [1, 1]} : vector<200x16xf32> to vector<8x16xf32>
    %c24 = arith.constant 24 : index
    %c0_80 = arith.constant 0 : index
    %c0_81 = arith.constant 0 : index
    %137 = vector.load %arg4[%c24, %c0_80, %c0_81] : memref<25x16x120xf32, #tpu.memory_space<vmem>>, vector<1x16x120xf32>
    %138 = vector.shape_cast %137 : vector<1x16x120xf32> to vector<16x120xf32>
    %cst_82 = arith.constant dense<0.000000e+00> : vector<8x120xf32>
    %139 = tpu.matmul %136, %138, %cst_82 {dimension_numbers = #tpu.dot_dimension_numbers<[1], [0], [0], [1], [0, 0, 1, 1], [], []>} : vector<8x16xf32>, vector<16x120xf32>, vector<8x120xf32> -> vector<8x120xf32>
    %140 = arith.addf %135, %139 : vector<8x120xf32>
    %c0_83 = arith.constant 0 : index
    %c0_84 = arith.constant 0 : index
    %141 = vector.load %arg5[%c0_83, %c0_84] : memref<1x120xf32, #tpu.memory_space<vmem>>, vector<1x120xf32>
    %142 = vector.broadcast %141 : vector<1x120xf32> to vector<8x120xf32>
    %143 = arith.addf %140, %142 : vector<8x120xf32>
    %cst_85 = arith.constant 0.000000e+00 : f32
    %144 = vector.broadcast %cst_85 : f32 to vector<8x120xf32>
    %145 = arith.maximumf %143, %144 : vector<8x120xf32>
    %c0_86 = arith.constant 0 : index
    %c0_87 = arith.constant 0 : index
    %146 = vector.load %arg6[%c0_86, %c0_87] : memref<120x84xf32, #tpu.memory_space<vmem>>, vector<120x84xf32>
    %cst_88 = arith.constant dense<0.000000e+00> : vector<8x84xf32>
    %147 = tpu.matmul %145, %146, %cst_88 {dimension_numbers = #tpu.dot_dimension_numbers<[1], [0], [0], [1], [0, 0, 1, 1], [], []>} : vector<8x120xf32>, vector<120x84xf32>, vector<8x84xf32> -> vector<8x84xf32>
    %c0_89 = arith.constant 0 : index
    %c0_90 = arith.constant 0 : index
    %148 = vector.load %arg7[%c0_89, %c0_90] : memref<1x84xf32, #tpu.memory_space<vmem>>, vector<1x84xf32>
    %149 = vector.broadcast %148 : vector<1x84xf32> to vector<8x84xf32>
    %150 = arith.addf %147, %149 : vector<8x84xf32>
    %cst_91 = arith.constant 0.000000e+00 : f32
    %151 = vector.broadcast %cst_91 : f32 to vector<8x84xf32>
    %152 = arith.maximumf %150, %151 : vector<8x84xf32>
    %c0_92 = arith.constant 0 : index
    %c0_93 = arith.constant 0 : index
    %153 = vector.load %arg8[%c0_92, %c0_93] : memref<84x10xf32, #tpu.memory_space<vmem>>, vector<84x10xf32>
    %cst_94 = arith.constant dense<0.000000e+00> : vector<8x10xf32>
    %154 = tpu.matmul %152, %153, %cst_94 {dimension_numbers = #tpu.dot_dimension_numbers<[1], [0], [0], [1], [0, 0, 1, 1], [], []>} : vector<8x84xf32>, vector<84x10xf32>, vector<8x10xf32> -> vector<8x10xf32>
    %c0_95 = arith.constant 0 : index
    %c0_96 = arith.constant 0 : index
    %155 = vector.load %arg9[%c0_95, %c0_96] : memref<1x10xf32, #tpu.memory_space<vmem>>, vector<1x10xf32>
    %156 = vector.broadcast %155 : vector<1x10xf32> to vector<8x10xf32>
    %157 = arith.addf %154, %156 : vector<8x10xf32>
    %c0_97 = arith.constant 0 : index
    %c0_98 = arith.constant 0 : index
    %158 = vector.load %arg10[%c0_97, %c0_98] : memref<8x10xf32, #tpu.memory_space<vmem>>, vector<8x10xf32>
    tpu.vector_store %arg10[%c0_97, %c0_98], %157 {strides = array<i32>} : memref<8x10xf32, #tpu.memory_space<vmem>>, vector<8x10xf32>,
    return
  }
  func.func @transform_0(%arg0: i32) -> (i32, i32) {
    %c0_i32 = arith.constant 0 : i32
    %c0_i32_0 = arith.constant 0 : i32
    %c0_i32_1 = arith.constant 0 : i32
    return %c0_i32, %c0_i32_0 : i32, i32
  }
  func.func @transform_1(%arg0: i32) -> (i32, i32) {
    %c0_i32 = arith.constant 0 : i32
    %c0_i32_0 = arith.constant 0 : i32
    %c0_i32_1 = arith.constant 0 : i32
    return %c0_i32, %c0_i32_0 : i32, i32
  }
  func.func @transform_2(%arg0: i32) -> (i32, i32) {
    %c0_i32 = arith.constant 0 : i32
    %c0_i32_0 = arith.constant 0 : i32
    %c0_i32_1 = arith.constant 0 : i32
    return %c0_i32, %c0_i32_0 : i32, i32
  }
  func.func @transform_3(%arg0: i32) -> (i32, i32, i32) {
    %c0_i32 = arith.constant 0 : i32
    %c0_i32_0 = arith.constant 0 : i32
    %c0_i32_1 = arith.constant 0 : i32
    %c0_i32_2 = arith.constant 0 : i32
    return %c0_i32, %c0_i32_0, %c0_i32_1 : i32, i32, i32
  }
  func.func @transform_4(%arg0: i32) -> (i32, i32) {
    %c0_i32 = arith.constant 0 : i32
    %c0_i32_0 = arith.constant 0 : i32
    %c0_i32_1 = arith.constant 0 : i32
    return %c0_i32, %c0_i32_0 : i32, i32
  }
  func.func @transform_5(%arg0: i32) -> (i32, i32) {
    %c0_i32 = arith.constant 0 : i32
    %c0_i32_0 = arith.constant 0 : i32
    %c0_i32_1 = arith.constant 0 : i32
    return %c0_i32, %c0_i32_0 : i32, i32
  }
  func.func @transform_6(%arg0: i32) -> (i32, i32) {
    %c0_i32 = arith.constant 0 : i32
    %c0_i32_0 = arith.constant 0 : i32
    %c0_i32_1 = arith.constant 0 : i32
    return %c0_i32, %c0_i32_0 : i32, i32
  }
  func.func @transform_7(%arg0: i32) -> (i32, i32) {
    %c0_i32 = arith.constant 0 : i32
    %c0_i32_0 = arith.constant 0 : i32
    %c0_i32_1 = arith.constant 0 : i32
    return %c0_i32, %c0_i32_0 : i32, i32
  }
  func.func @transform_8(%arg0: i32) -> (i32, i32) {
    %c0_i32 = arith.constant 0 : i32
    %c0_i32_0 = arith.constant 0 : i32
    %c0_i32_1 = arith.constant 0 : i32
    return %c0_i32, %c0_i32_0 : i32, i32
  }
  func.func @transform_9(%arg0: i32) -> (i32, i32) {
    %c0_i32 = arith.constant 0 : i32
    %c0_i32_0 = arith.constant 0 : i32
    %c0_i32_1 = arith.constant 0 : i32
    return %c0_i32, %c0_i32_0 : i32, i32
  }
}

</mosaic_0001>

<llo_original>
// kernel: net_forward.2
$region0: #{net_forward.2}
  #allocation0 [shape = 'u32[]', space=smem, size = 0x4, offset = 0x4, fixed_abs, tag = 'smem constant byte address 0x4 - core index']
  #allocation1 [shape = 'u32[144,128]{1,0:T(1,128)}', space=vmem, size = 0x12000, scoped, tag = 'internal scratch']
  %s0 = inlined_call_operand.vmem [shape: f32[1568,25], index: 0, kind: input, shape index: {}]
  %s1 = inlined_call_operand.vmem [shape: f32[25,6], index: 1, kind: input, shape index: {}]
  %s2 = inlined_call_operand.vmem [shape: f32[1,6], index: 2, kind: input, shape index: {}]
  %s3 = inlined_call_operand.vmem [shape: f32[392,6], index: 3, kind: output, shape index: {}]
  %s4 = sld [smem:[#allocation0]]
  $region22: #{net_forward.2} parent=0
    _
  %s6 = ssub.s32 1, %s4
  %s7 = scalar_select 0, %s6, %s4
  // Predicated region
  $region2: #{net_forward.2} parent=0 // pred_check
    _
  $region3: #{net_forward.2} parent=0 // pred_check_branch
    %9 = sbr.rel (0) target = $region5
  $region4: #{net_forward.2} parent=0 // pred_region
    _
  $region5: #{net_forward.2} parent=0 // pred_fallthru
    _
  // Predicated region
  $region6: #{net_forward.2} parent=0 // pred_check
    _
  $region7: #{net_forward.2} parent=0 // pred_check_branch
    %11 = sbr.rel (0) target = $region9
  $region8: #{net_forward.2} parent=0 // pred_region
    _
  $region9: #{net_forward.2} parent=0 // pred_fallthru
    _
  // Predicated region
  $region10: #{net_forward.2} parent=0 // pred_check
    _
  $region11: #{net_forward.2} parent=0 // pred_check_branch
    %13 = sbr.rel (0) target = $region13
  $region12: #{net_forward.2} parent=0 // pred_region
    _
  $region13: #{net_forward.2} parent=0 // pred_fallthru
    _
  %v14 = vld [vmem:[%s0] sm:$0xff]
  %v15 = vld [vmem:[%s0 + $0x8] sm:$0xff]
  %v16 = vld [vmem:[%s0 + $0x10] sm:$0xff]
  %v17 = vld [vmem:[%s0 + $0x18] sm:$0xff]
  %v18 = vld [vmem:[%s0 + $0x20] sm:$0xff]
  %v19 = vld [vmem:[%s0 + $0x28] sm:$0xff]
  %v20 = vld [vmem:[%s0 + $0x30] sm:$0xff]
  %v21 = vld [vmem:[%s0 + $0x38] sm:$0xff]
  %v22 = vld [vmem:[%s0 + $0x40] sm:$0xff]
  %v23 = vld [vmem:[%s0 + $0x48] sm:$0xff]
  %v24 = vld [vmem:[%s0 + $0x50] sm:$0xff]
  %v25 = vld [vmem:[%s0 + $0x58] sm:$0xff]
  %v26 = vld [vmem:[%s0 + $0x60] sm:$0xff]
  %v27 = vld [vmem:[%s0 + $0x68] sm:$0xff]
  %v28 = vld [vmem:[%s0 + $0x70] sm:$0xff]
  %v29 = vld [vmem:[%s0 + $0x78] sm:$0xff]
  %v30 = vld [vmem:[%s0 + $0x80] sm:$0xff]
  %v31 = vld [vmem:[%s0 + $0x88] sm:$0xff]
  %v32 = vld [vmem:[%s0 + $0x90] sm:$0xff]
  %v33 = vld [vmem:[%s0 + $0x98] sm:$0xff]
  %v34 = vld [vmem:[%s0 + $0xa0] sm:$0xff]
  %v35 = vld [vmem:[%s0 + $0xa8] sm:$0xff]
  %v36 = vld [vmem:[%s0 + $0xb0] sm:$0xff]
  %v37 = vld [vmem:[%s0 + $0xb8] sm:$0xff]
  %v38 = vld [vmem:[%s0 + $0xc0] sm:$0xff]
  %v39 = vld [vmem:[%s0 + $0xc8] sm:$0xff]
  %v40 = vld [vmem:[%s0 + $0xd0] sm:$0xff]
  %v41 = vld [vmem:[%s0 + $0xd8] sm:$0xff]
  %v42 = vld [vmem:[%s0 + $0xe0] sm:$0xff]
  %v43 = vld [vmem:[%s0 + $0xe8] sm:$0xff]
  %v44 = vld [vmem:[%s0 + $0xf0] sm:$0xff]
  %v45 = vld [vmem:[%s0 + $0xf8] sm:$0xff]
  %v46 = vld [vmem:[%s0 + $0x100] sm:$0xff]
  %v47 = vld [vmem:[%s0 + $0x108] sm:$0xff]
  %v48 = vld [vmem:[%s0 + $0x110] sm:$0xff]
  %v49 = vld [vmem:[%s0 + $0x118] sm:$0xff]
  %v50 = vld [vmem:[%s0 + $0x120] sm:$0xff]
  %v51 = vld [vmem:[%s0 + $0x128] sm:$0xff]
  %v52 = vld [vmem:[%s0 + $0x130] sm:$0xff]
  %v53 = vld [vmem:[%s0 + $0x138] sm:$0xff]
  %v54 = vld [vmem:[%s0 + $0x140] sm:$0xff]
  %v55 = vld [vmem:[%s0 + $0x148] sm:$0xff]
  %v56 = vld [vmem:[%s0 + $0x150] sm:$0xff]
  %v57 = vld [vmem:[%s0 + $0x158] sm:$0xff]
  %v58 = vld [vmem:[%s0 + $0x160] sm:$0xff]
  %v59 = vld [vmem:[%s0 + $0x168] sm:$0xff]
  %v60 = vld [vmem:[%s0 + $0x170] sm:$0xff]
  %v61 = vld [vmem:[%s0 + $0x178] sm:$0xff]
  %v62 = vld [vmem:[%s0 + $0x180] sm:$0xff]
  %v63 = vld [vmem:[%s0 + $0x188] sm:$0xff]
  %v64 = vld [vmem:[%s0 + $0x190] sm:$0xff]
  %v65 = vld [vmem:[%s0 + $0x198] sm:$0xff]
  %v66 = vld [vmem:[%s0 + $0x1a0] sm:$0xff]
  %v67 = vld [vmem:[%s0 + $0x1a8] sm:$0xff]
  %v68 = vld [vmem:[%s0 + $0x1b0] sm:$0xff]
  %v69 = vld [vmem:[%s0 + $0x1b8] sm:$0xff]
  %v70 = vld [vmem:[%s0 + $0x1c0] sm:$0xff]
  %v71 = vld [vmem:[%s0 + $0x1c8] sm:$0xff]
  %v72 = vld [vmem:[%s0 + $0x1d0] sm:$0xff]
  %v73 = vld [vmem:[%s0 + $0x1d8] sm:$0xff]
  %v74 = vld [vmem:[%s0 + $0x1e0] sm:$0xff]
  %v75 = vld [vmem:[%s0 + $0x1e8] sm:$0xff]
  %v76 = vld [vmem:[%s0 + $0x1f0] sm:$0xff]
  %v77 = vld [vmem:[%s0 + $0x1f8] sm:$0xff]
  %v78 = vld [vmem:[%s0 + $0x200] sm:$0xff]
  %v79 = vld [vmem:[%s0 + $0x208] sm:$0xff]
  %v80 = vld [vmem:[%s0 + $0x210] sm:$0xff]
  %v81 = vld [vmem:[%s0 + $0x218] sm:$0xff]
  %v82 = vld [vmem:[%s0 + $0x220] sm:$0xff]
  %v83 = vld [vmem:[%s0 + $0x228] sm:$0xff]
  %v84 = vld [vmem:[%s0 + $0x230] sm:$0xff]
  %v85 = vld [vmem:[%s0 + $0x238] sm:$0xff]
  %v86 = vld [vmem:[%s0 + $0x240] sm:$0xff]
  %v87 = vld [vmem:[%s0 + $0x248] sm:$0xff]
  %v88 = vld [vmem:[%s0 + $0x250] sm:$0xff]
  %v89 = vld [vmem:[%s0 + $0x258] sm:$0xff]
  %v90 = vld [vmem:[%s0 + $0x260] sm:$0xff]
  %v91 = vld [vmem:[%s0 + $0x268] sm:$0xff]
  %v92 = vld [vmem:[%s0 + $0x270] sm:$0xff]
  %v93 = vld [vmem:[%s0 + $0x278] sm:$0xff]
  %v94 = vld [vmem:[%s0 + $0x280] sm:$0xff]
  %v95 = vld [vmem:[%s0 + $0x288] sm:$0xff]
  %v96 = vld [vmem:[%s0 + $0x290] sm:$0xff]
  %v97 = vld [vmem:[%s0 + $0x298] sm:$0xff]
  %v98 = vld [vmem:[%s0 + $0x2a0] sm:$0xff]
  %v99 = vld [vmem:[%s0 + $0x2a8] sm:$0xff]
  %v100 = vld [vmem:[%s0 + $0x2b0] sm:$0xff]
  %v101 = vld [vmem:[%s0 + $0x2b8] sm:$0xff]
  %v102 = vld [vmem:[%s0 + $0x2c0] sm:$0xff]
  %v103 = vld [vmem:[%s0 + $0x2c8] sm:$0xff]
  %v104 = vld [vmem:[%s0 + $0x2d0] sm:$0xff]
  %v105 = vld [vmem:[%s0 + $0x2d8] sm:$0xff]
  %v106 = vld [vmem:[%s0 + $0x2e0] sm:$0xff]
  %v107 = vld [vmem:[%s0 + $0x2e8] sm:$0xff]
  %v108 = vld [vmem:[%s0 + $0x2f0] sm:$0xff]
  %v109 = vld [vmem:[%s0 + $0x2f8] sm:$0xff]
  %v110 = vld [vmem:[%s0 + $0x300] sm:$0xff]
  %v111 = vld [vmem:[%s0 + $0x308] sm:$0xff]
  %v112 = vld [vmem:[%s0 + $0x310] sm:$0xff]
  %v113 = vld [vmem:[%s0 + $0x318] sm:$0xff]
  %v114 = vld [vmem:[%s0 + $0x320] sm:$0xff]
  %v115 = vld [vmem:[%s0 + $0x328] sm:$0xff]
  %v116 = vld [vmem:[%s0 + $0x330] sm:$0xff]
  %v117 = vld [vmem:[%s0 + $0x338] sm:$0xff]
  %v118 = vld [vmem:[%s0 + $0x340] sm:$0xff]
  %v119 = vld [vmem:[%s0 + $0x348] sm:$0xff]
  %v120 = vld [vmem:[%s0 + $0x350] sm:$0xff]
  %v121 = vld [vmem:[%s0 + $0x358] sm:$0xff]
  %v122 = vld [vmem:[%s0 + $0x360] sm:$0xff]
  %v123 = vld [vmem:[%s0 + $0x368] sm:$0xff]
  %v124 = vld [vmem:[%s0 + $0x370] sm:$0xff]
  %v125 = vld [vmem:[%s0 + $0x378] sm:$0xff]
  %v126 = vld [vmem:[%s0 + $0x380] sm:$0xff]
  %v127 = vld [vmem:[%s0 + $0x388] sm:$0xff]
  %v128 = vld [vmem:[%s0 + $0x390] sm:$0xff]
  %v129 = vld [vmem:[%s0 + $0x398] sm:$0xff]
  %v130 = vld [vmem:[%s0 + $0x3a0] sm:$0xff]
  %v131 = vld [vmem:[%s0 + $0x3a8] sm:$0xff]
  %v132 = vld [vmem:[%s0 + $0x3b0] sm:$0xff]
  %v133 = vld [vmem:[%s0 + $0x3b8] sm:$0xff]
  %v134 = vld [vmem:[%s0 + $0x3c0] sm:$0xff]
  %v135 = vld [vmem:[%s0 + $0x3c8] sm:$0xff]
  %v136 = vld [vmem:[%s0 + $0x3d0] sm:$0xff]
  %v137 = vld [vmem:[%s0 + $0x3d8] sm:$0xff]
  %v138 = vld [vmem:[%s0 + $0x3e0] sm:$0xff]
  %v139 = vld [vmem:[%s0 + $0x3e8] sm:$0xff]
  %v140 = vld [vmem:[%s0 + $0x3f0] sm:$0xff]
  %v141 = vld [vmem:[%s0 + $0x3f8] sm:$0xff]
  %v142 = vld [vmem:[%s0 + $0x400] sm:$0xff]
  %v143 = vld [vmem:[%s0 + $0x408] sm:$0xff]
  %v144 = vld [vmem:[%s0 + $0x410] sm:$0xff]
  %v145 = vld [vmem:[%s0 + $0x418] sm:$0xff]
  %v146 = vld [vmem:[%s0 + $0x420] sm:$0xff]
  %v147 = vld [vmem:[%s0 + $0x428] sm:$0xff]
  %v148 = vld [vmem:[%s0 + $0x430] sm:$0xff]
  %v149 = vld [vmem:[%s0 + $0x438] sm:$0xff]
  %v150 = vld [vmem:[%s0 + $0x440] sm:$0xff]
  %v151 = vld [vmem:[%s0 + $0x448] sm:$0xff]
  %v152 = vld [vmem:[%s0 + $0x450] sm:$0xff]
  %v153 = vld [vmem:[%s0 + $0x458] sm:$0xff]
  %v154 = vld [vmem:[%s0 + $0x460] sm:$0xff]
  %v155 = vld [vmem:[%s0 + $0x468] sm:$0xff]
  %v156 = vld [vmem:[%s0 + $0x470] sm:$0xff]
  %v157 = vld [vmem:[%s0 + $0x478] sm:$0xff]
  %v158 = vld [vmem:[%s0 + $0x480] sm:$0xff]
  %v159 = vld [vmem:[%s0 + $0x488] sm:$0xff]
  %v160 = vld [vmem:[%s0 + $0x490] sm:$0xff]
  %v161 = vld [vmem:[%s0 + $0x498] sm:$0xff]
  %v162 = vld [vmem:[%s0 + $0x4a0] sm:$0xff]
  %v163 = vld [vmem:[%s0 + $0x4a8] sm:$0xff]
  %v164 = vld [vmem:[%s0 + $0x4b0] sm:$0xff]
  %v165 = vld [vmem:[%s0 + $0x4b8] sm:$0xff]
  %v166 = vld [vmem:[%s0 + $0x4c0] sm:$0xff]
  %v167 = vld [vmem:[%s0 + $0x4c8] sm:$0xff]
  %v168 = vld [vmem:[%s0 + $0x4d0] sm:$0xff]
  %v169 = vld [vmem:[%s0 + $0x4d8] sm:$0xff]
  %v170 = vld [vmem:[%s0 + $0x4e0] sm:$0xff]
  %v171 = vld [vmem:[%s0 + $0x4e8] sm:$0xff]
  %v172 = vld [vmem:[%s0 + $0x4f0] sm:$0xff]
  %v173 = vld [vmem:[%s0 + $0x4f8] sm:$0xff]
  %v174 = vld [vmem:[%s0 + $0x500] sm:$0xff]
  %v175 = vld [vmem:[%s0 + $0x508] sm:$0xff]
  %v176 = vld [vmem:[%s0 + $0x510] sm:$0xff]
  %v177 = vld [vmem:[%s0 + $0x518] sm:$0xff]
  %v178 = vld [vmem:[%s0 + $0x520] sm:$0xff]
  %v179 = vld [vmem:[%s0 + $0x528] sm:$0xff]
  %v180 = vld [vmem:[%s0 + $0x530] sm:$0xff]
  %v181 = vld [vmem:[%s0 + $0x538] sm:$0xff]
  %v182 = vld [vmem:[%s0 + $0x540] sm:$0xff]
  %v183 = vld [vmem:[%s0 + $0x548] sm:$0xff]
  %v184 = vld [vmem:[%s0 + $0x550] sm:$0xff]
  %v185 = vld [vmem:[%s0 + $0x558] sm:$0xff]
  %v186 = vld [vmem:[%s0 + $0x560] sm:$0xff]
  %v187 = vld [vmem:[%s0 + $0x568] sm:$0xff]
  %v188 = vld [vmem:[%s0 + $0x570] sm:$0xff]
  %v189 = vld [vmem:[%s0 + $0x578] sm:$0xff]
  %v190 = vld [vmem:[%s0 + $0x580] sm:$0xff]
  %v191 = vld [vmem:[%s0 + $0x588] sm:$0xff]
  %v192 = vld [vmem:[%s0 + $0x590] sm:$0xff]
  %v193 = vld [vmem:[%s0 + $0x598] sm:$0xff]
  %v194 = vld [vmem:[%s0 + $0x5a0] sm:$0xff]
  %v195 = vld [vmem:[%s0 + $0x5a8] sm:$0xff]
  %v196 = vld [vmem:[%s0 + $0x5b0] sm:$0xff]
  %v197 = vld [vmem:[%s0 + $0x5b8] sm:$0xff]
  %v198 = vld [vmem:[%s0 + $0x5c0] sm:$0xff]
  %v199 = vld [vmem:[%s0 + $0x5c8] sm:$0xff]
  %v200 = vld [vmem:[%s0 + $0x5d0] sm:$0xff]
  %v201 = vld [vmem:[%s0 + $0x5d8] sm:$0xff]
  %v202 = vld [vmem:[%s0 + $0x5e0] sm:$0xff]
  %v203 = vld [vmem:[%s0 + $0x5e8] sm:$0xff]
  %v204 = vld [vmem:[%s0 + $0x5f0] sm:$0xff]
  %v205 = vld [vmem:[%s0 + $0x5f8] sm:$0xff]
  %v206 = vld [vmem:[%s0 + $0x600] sm:$0xff]
  %v207 = vld [vmem:[%s0 + $0x608] sm:$0xff]
  %v208 = vld [vmem:[%s0 + $0x610] sm:$0xff]
  %v209 = vld [vmem:[%s0 + $0x618] sm:$0xff]
  %v210 = vld [vmem:[%s1] sm:$0xff]
  %v211 = vld [vmem:[%s1 + $0x8] sm:$0xff]
  %v212 = vld [vmem:[%s1 + $0x10] sm:$0xff]
  %v213 = vld [vmem:[%s1 + $0x18] sm:$0x1]
  %vm214 = vcmask 203776
  %v216 = vsel %vm214, %v14, 0
  %v219 = vsel %vm214, %v15, 0
  %v222 = vsel %vm214, %v16, 0
  %v225 = vsel %vm214, %v17, 0
  %v228 = vsel %vm214, %v18, 0
  %v231 = vsel %vm214, %v19, 0
  %v234 = vsel %vm214, %v20, 0
  %v237 = vsel %vm214, %v21, 0
  %v240 = vsel %vm214, %v22, 0
  %v243 = vsel %vm214, %v23, 0
  %v246 = vsel %vm214, %v24, 0
  %v249 = vsel %vm214, %v25, 0
  %v252 = vsel %vm214, %v26, 0
  %v255 = vsel %vm214, %v27, 0
  %v258 = vsel %vm214, %v28, 0
  %v261 = vsel %vm214, %v29, 0
  %v264 = vsel %vm214, %v30, 0
  %v267 = vsel %vm214, %v31, 0
  %v270 = vsel %vm214, %v32, 0
  %v273 = vsel %vm214, %v33, 0
  %v276 = vsel %vm214, %v34, 0
  %v279 = vsel %vm214, %v35, 0
  %v282 = vsel %vm214, %v36, 0
  %v285 = vsel %vm214, %v37, 0
  %v288 = vsel %vm214, %v38, 0
  %v291 = vsel %vm214, %v39, 0
  %v294 = vsel %vm214, %v40, 0
  %v297 = vsel %vm214, %v41, 0
  %v300 = vsel %vm214, %v42, 0
  %v303 = vsel %vm214, %v43, 0
  %v306 = vsel %vm214, %v44, 0
  %v309 = vsel %vm214, %v45, 0
  %v312 = vsel %vm214, %v46, 0
  %v315 = vsel %vm214, %v47, 0
  %v318 = vsel %vm214, %v48, 0
  %v321 = vsel %vm214, %v49, 0
  %v324 = vsel %vm214, %v50, 0
  %v327 = vsel %vm214, %v51, 0
  %v330 = vsel %vm214, %v52, 0
  %v333 = vsel %vm214, %v53, 0
  %v336 = vsel %vm214, %v54, 0
  %v339 = vsel %vm214, %v55, 0
  %v342 = vsel %vm214, %v56, 0
  %v345 = vsel %vm214, %v57, 0
  %v348 = vsel %vm214, %v58, 0
  %v351 = vsel %vm214, %v59, 0
  %v354 = vsel %vm214, %v60, 0
  %v357 = vsel %vm214, %v61, 0
  %v360 = vsel %vm214, %v62, 0
  %v363 = vsel %vm214, %v63, 0
  %v366 = vsel %vm214, %v64, 0
  %v369 = vsel %vm214, %v65, 0
  %v372 = vsel %vm214, %v66, 0
  %v375 = vsel %vm214, %v67, 0
  %v378 = vsel %vm214, %v68, 0
  %v381 = vsel %vm214, %v69, 0
  %v384 = vsel %vm214, %v70, 0
  %v387 = vsel %vm214, %v71, 0
  %v390 = vsel %vm214, %v72, 0
  %v393 = vsel %vm214, %v73, 0
  %v396 = vsel %vm214, %v74, 0
  %v399 = vsel %vm214, %v75, 0
  %v402 = vsel %vm214, %v76, 0
  %v405 = vsel %vm214, %v77, 0
  %v408 = vsel %vm214, %v78, 0
  %v411 = vsel %vm214, %v79, 0
  %v414 = vsel %vm214, %v80, 0
  %v417 = vsel %vm214, %v81, 0
  %v420 = vsel %vm214, %v82, 0
  %v423 = vsel %vm214, %v83, 0
  %v426 = vsel %vm214, %v84, 0
  %v429 = vsel %vm214, %v85, 0
  %v432 = vsel %vm214, %v86, 0
  %v435 = vsel %vm214, %v87, 0
  %v438 = vsel %vm214, %v88, 0
  %v441 = vsel %vm214, %v89, 0
  %v444 = vsel %vm214, %v90, 0
  %v447 = vsel %vm214, %v91, 0
  %v450 = vsel %vm214, %v92, 0
  %v453 = vsel %vm214, %v93, 0
  %v456 = vsel %vm214, %v94, 0
  %v459 = vsel %vm214, %v95, 0
  %v462 = vsel %vm214, %v96, 0
  %v465 = vsel %vm214, %v97, 0
  %v468 = vsel %vm214, %v98, 0
  %v471 = vsel %vm214, %v99, 0
  %v474 = vsel %vm214, %v100, 0
  %v477 = vsel %vm214, %v101, 0
  %v480 = vsel %vm214, %v102, 0
  %v483 = vsel %vm214, %v103, 0
  %v486 = vsel %vm214, %v104, 0
  %v489 = vsel %vm214, %v105, 0
  %v492 = vsel %vm214, %v106, 0
  %v495 = vsel %vm214, %v107, 0
  %v498 = vsel %vm214, %v108, 0
  %v501 = vsel %vm214, %v109, 0
  %v504 = vsel %vm214, %v110, 0
  %v507 = vsel %vm214, %v111, 0
  %v510 = vsel %vm214, %v112, 0
  %v513 = vsel %vm214, %v113, 0
  %v516 = vsel %vm214, %v114, 0
  %v519 = vsel %vm214, %v115, 0
  %v522 = vsel %vm214, %v116, 0
  %v525 = vsel %vm214, %v117, 0
  %v528 = vsel %vm214, %v118, 0
  %v531 = vsel %vm214, %v119, 0
  %v534 = vsel %vm214, %v120, 0
  %v537 = vsel %vm214, %v121, 0
  %v540 = vsel %vm214, %v122, 0
  %v543 = vsel %vm214, %v123, 0
  %v546 = vsel %vm214, %v124, 0
  %v549 = vsel %vm214, %v125, 0
  %v552 = vsel %vm214, %v126, 0
  %v555 = vsel %vm214, %v127, 0
  %v558 = vsel %vm214, %v128, 0
  %v561 = vsel %vm214, %v129, 0
  %v564 = vsel %vm214, %v130, 0
  %v567 = vsel %vm214, %v131, 0
  %v570 = vsel %vm214, %v132, 0
  %v573 = vsel %vm214, %v133, 0
  %v576 = vsel %vm214, %v134, 0
  %v579 = vsel %vm214, %v135, 0
  %v582 = vsel %vm214, %v136, 0
  %v585 = vsel %vm214, %v137, 0
  %v588 = vsel %vm214, %v138, 0
  %v591 = vsel %vm214, %v139, 0
  %v594 = vsel %vm214, %v140, 0
  %v597 = vsel %vm214, %v141, 0
  %v600 = vsel %vm214, %v142, 0
  %v603 = vsel %vm214, %v143, 0
  %v606 = vsel %vm214, %v144, 0
  %v609 = vsel %vm214, %v145, 0
  %v612 = vsel %vm214, %v146, 0
  %v615 = vsel %vm214, %v147, 0
  %v618 = vsel %vm214, %v148, 0
  %v621 = vsel %vm214, %v149, 0
  %v624 = vsel %vm214, %v150, 0
  %v627 = vsel %vm214, %v151, 0
  %v630 = vsel %vm214, %v152, 0
  %v633 = vsel %vm214, %v153, 0
  %v636 = vsel %vm214, %v154, 0
  %v639 = vsel %vm214, %v155, 0
  %v642 = vsel %vm214, %v156, 0
  %v645 = vsel %vm214, %v157, 0
  %v648 = vsel %vm214, %v158, 0
  %v651 = vsel %vm214, %v159, 0
  %v654 = vsel %vm214, %v160, 0
  %v657 = vsel %vm214, %v161, 0
  %v660 = vsel %vm214, %v162, 0
  %v663 = vsel %vm214, %v163, 0
  %v666 = vsel %vm214, %v164, 0
  %v669 = vsel %vm214, %v165, 0
  %v672 = vsel %vm214, %v166, 0
  %v675 = vsel %vm214, %v167, 0
  %v678 = vsel %vm214, %v168, 0
  %v681 = vsel %vm214, %v169, 0
  %v684 = vsel %vm214, %v170, 0
  %v687 = vsel %vm214, %v171, 0
  %v690 = vsel %vm214, %v172, 0
  %v693 = vsel %vm214, %v173, 0
  %v696 = vsel %vm214, %v174, 0
  %v699 = vsel %vm214, %v175, 0
  %v702 = vsel %vm214, %v176, 0
  %v705 = vsel %vm214, %v177, 0
  %v708 = vsel %vm214, %v178, 0
  %v711 = vsel %vm214, %v179, 0
  %v714 = vsel %vm214, %v180, 0
  %v717 = vsel %vm214, %v181, 0
  %v720 = vsel %vm214, %v182, 0
  %v723 = vsel %vm214, %v183, 0
  %v726 = vsel %vm214, %v184, 0
  %v729 = vsel %vm214, %v185, 0
  %v732 = vsel %vm214, %v186, 0
  %v735 = vsel %vm214, %v187, 0
  %v738 = vsel %vm214, %v188, 0
  %v741 = vsel %vm214, %v189, 0
  %v744 = vsel %vm214, %v190, 0
  %v747 = vsel %vm214, %v191, 0
  %v750 = vsel %vm214, %v192, 0
  %v753 = vsel %vm214, %v193, 0
  %v756 = vsel %vm214, %v194, 0
  %v759 = vsel %vm214, %v195, 0
  %v762 = vsel %vm214, %v196, 0
  %v765 = vsel %vm214, %v197, 0
  %v768 = vsel %vm214, %v198, 0
  %v771 = vsel %vm214, %v199, 0
  %v774 = vsel %vm214, %v200, 0
  %v777 = vsel %vm214, %v201, 0
  %v780 = vsel %vm214, %v202, 0
  %v783 = vsel %vm214, %v203, 0
  %v786 = vsel %vm214, %v204, 0
  %v789 = vsel %vm214, %v205, 0
  %v792 = vsel %vm214, %v206, 0
  %v795 = vsel %vm214, %v207, 0
  %v798 = vsel %vm214, %v208, 0
  %v801 = vsel %vm214, %v209, 0
  %vm803 = vcmask 1040384
  %v805 = vsel %vm803, %v213, 0
  %807 = vmatprep.subr.mxu0 0.0
  %808 = vmatpush1.msra.mxu0 %v210
  %809 = vmatprep.subr.mxu0 0.0
  %810 = vmatpush1.msra.mxu0 %v211
  %811 = vmatprep.subr.mxu0 0.0
  %812 = vmatpush1.msra.mxu0 %v212
  %813 = vmatprep.subr.mxu0 0.0
  %814 = vmatpush1.msra.mxu0 %v805
  %815 = vmatprep.subr.mxu0 0.0
  %816 = vmatpush1.msra.mxu0 0.0
  %817 = vmatprep.subr.mxu0 0.0
  %818 = vmatpush1.msra.mxu0 0.0
  %819 = vmatprep.subr.mxu0 0.0
  %820 = vmatpush1.msra.mxu0 0.0
  %821 = vmatprep.subr.mxu0 0.0
  %822 = vmatpush1.msra.mxu0 0.0
  %823 = vmatprep.subr.mxu0 0.0
  %824 = vmatpush1.msra.mxu0 0.0
  %825 = vmatprep.subr.mxu0 0.0
  %826 = vmatpush1.msra.mxu0 0.0
  %827 = vmatprep.subr.mxu0 0.0
  %828 = vmatpush1.msra.mxu0 0.0
  %829 = vmatprep.subr.mxu0 0.0
  %830 = vmatpush1.msra.mxu0 0.0
  %831 = vmatprep.subr.mxu0 0.0
  %832 = vmatpush1.msra.mxu0 0.0
  %833 = vmatprep.subr.mxu0 0.0
  %834 = vmatpush1.msra.mxu0 0.0
  %835 = vmatprep.subr.mxu0 0.0
  %836 = vmatpush1.msra.mxu0 0.0
  %837 = vmatprep.subr.mxu0 0.0
  %838 = vmatpush1.msra.mxu0 0.0
  %839 = vmatprep.subr.mxu0 0.0
  %840 = vmatpush1.msra.mxu0 0.0
  %841 = vmatprep.subr.mxu0 0.0
  %842 = vmatpush1.msra.mxu0 0.0
  %843 = vmatprep.subr.mxu0 0.0
  %844 = vmatpush1.msra.mxu0 0.0
  %845 = vmatprep.subr.mxu0 0.0
  %846 = vmatpush1.msra.mxu0 0.0
  %847 = vmatprep.subr.mxu0 0.0
  %848 = vmatpush1.msra.mxu0 0.0
  %849 = vmatprep.subr.mxu0 0.0
  %850 = vmatpush1.msra.mxu0 0.0
  %851 = vmatprep.subr.mxu0 0.0
  %852 = vmatpush1.msra.mxu0 0.0
  %853 = vmatprep.subr.mxu0 0.0
  %854 = vmatpush1.msra.mxu0 0.0
  %855 = vmatprep.subr.mxu0 0.0
  %856 = vmatpush1.msra.mxu0 0.0
  %857 = vmatprep.subr.mxu0 0.0
  %858 = vmatpush1.msra.mxu0 0.0
  %859 = vmatprep.subr.mxu0 0.0
  %860 = vmatpush1.msra.mxu0 0.0
  %861 = vmatprep.subr.mxu0 0.0
  %862 = vmatpush1.msra.mxu0 0.0
  %863 = vmatprep.subr.mxu0 0.0
  %864 = vmatpush1.msra.mxu0 0.0
  %865 = vmatprep.subr.mxu0 0.0
  %866 = vmatpush1.msra.mxu0 0.0
  %867 = vmatprep.subr.mxu0 0.0
  %868 = vmatpush1.msra.mxu0 0.0
  %869 = vmatprep.subr.mxu0 0.0
  %870 = vmatpush1.msra.mxu0 0.0
  %871 = vmatprep.mubr.f32.mxu0 0.0
  %872 = vmatmul.mubr.f32.gmra.mrb[0].mxu0 %v216
  %v873 = vpop.f32.mrb[0].mxu0
  %v874 = vadd.f32 0.0, %v873
  %v875 = vpop.f32.mrb[0].mxu0
  %876 = vmatprep.mubr.f32.mxu0 0.0
  %877 = vmatmul.mubr.f32.gmra.mrb[0].mxu0 %v219
  %v878 = vpop.f32.mrb[0].mxu0
  %v879 = vadd.f32 0.0, %v878
  %v880 = vpop.f32.mrb[0].mxu0
  %881 = vmatprep.mubr.f32.mxu0 0.0
  %882 = vmatmul.mubr.f32.gmra.mrb[0].mxu0 %v222
  %v883 = vpop.f32.mrb[0].mxu0
  %v884 = vadd.f32 0.0, %v883
  %v885 = vpop.f32.mrb[0].mxu0
  %886 = vmatprep.mubr.f32.mxu0 0.0
  %887 = vmatmul.mubr.f32.gmra.mrb[0].mxu0 %v225
  %v888 = vpop.f32.mrb[0].mxu0
  %v889 = vadd.f32 0.0, %v888
  %v890 = vpop.f32.mrb[0].mxu0
  %891 = vmatprep.mubr.f32.mxu0 0.0
  %892 = vmatmul.mubr.f32.gmra.mrb[0].mxu0 %v228
  %v893 = vpop.f32.mrb[0].mxu0
  %v894 = vadd.f32 0.0, %v893
  %v895 = vpop.f32.mrb[0].mxu0
  %896 = vmatprep.mubr.f32.mxu0 0.0
  %897 = vmatmul.mubr.f32.gmra.mrb[0].mxu0 %v231
  %v898 = vpop.f32.mrb[0].mxu0
  %v899 = vadd.f32 0.0, %v898
  %v900 = vpop.f32.mrb[0].mxu0
  %901 = vmatprep.mubr.f32.mxu0 0.0
  %902 = vmatmul.mubr.f32.gmra.mrb[0].mxu0 %v234
  %v903 = vpop.f32.mrb[0].mxu0
  %v904 = vadd.f32 0.0, %v903
  %v905 = vpop.f32.mrb[0].mxu0
  %906 = vmatprep.mubr.f32.mxu0 0.0
  %907 = vmatmul.mubr.f32.gmra.mrb[0].mxu0 %v237
  %v908 = vpop.f32.mrb[0].mxu0
  %v909 = vadd.f32 0.0, %v908
  %v910 = vpop.f32.mrb[0].mxu0
  %911 = vmatprep.mubr.f32.mxu0 0.0
  %912 = vmatmul.mubr.f32.gmra.mrb[0].mxu0 %v240
  %v913 = vpop.f32.mrb[0].mxu0
  %v914 = vadd.f32 0.0, %v913
  %v915 = vpop.f32.mrb[0].mxu0
  %916 = vmatprep.mubr.f32.mxu0 0.0
  %917 = vmatmul.mubr.f32.gmra.mrb[0].mxu0 %v243
  %v918 = vpop.f32.mrb[0].mxu0
  %v919 = vadd.f32 0.0, %v918
  %v920 = vpop.f32.mrb[0].mxu0
  %921 = vmatprep.mubr.f32.mxu0 0.0
  %922 = vmatmul.mubr.f32.gmra.mrb[0].mxu0 %v246
  %v923 = vpop.f32.mrb[0].mxu0
  %v924 = vadd.f32 0.0, %v923
  %v925 = vpop.f32.mrb[0].mxu0
  %926 = vmatprep.mubr.f32.mxu0 0.0
  %927 = vmatmul.mubr.f32.gmra.mrb[0].mxu0 %v249
  %v928 = vpop.f32.mrb[0].mxu0
  %v929 = vadd.f32 0.0, %v928
  %v930 = vpop.f32.mrb[0].mxu0
  %931 = vmatprep.mubr.f32.mxu0 0.0
  %932 = vmatmul.mubr.f32.gmra.mrb[0].mxu0 %v252
  %v933 = vpop.f32.mrb[0].mxu0
  %v934 = vadd.f32 0.0, %v933
  %v935 = vpop.f32.mrb[0].mxu0
  %936 = vmatprep.mubr.f32.mxu0 0.0
  %937 = vmatmul.mubr.f32.gmra.mrb[0].mxu0 %v255
  %v938 = vpop.f32.mrb[0].mxu0
  %v939 = vadd.f32 0.0, %v938
  %v940 = vpop.f32.mrb[0].mxu0
  %941 = vmatprep.mubr.f32.mxu0 0.0
  %942 = vmatmul.mubr.f32.gmra.mrb[0].mxu0 %v258
  %v943 = vpop.f32.mrb[0].mxu0
  %v944 = vadd.f32 0.0, %v943
  %v945 = vpop.f32.mrb[0].mxu0
  %946 = vmatprep.mubr.f32.mxu0 0.0
  %947 = vmatmul.mubr.f32.gmra.mrb[0].mxu0 %v261
  %v948 = vpop.f32.mrb[0].mxu0
  %v949 = vadd.f32 0.0, %v948
  %v950 = vpop.f32.mrb[0].mxu0
  %951 = vmatprep.mubr.f32.mxu0 0.0
  %952 = vmatmul.mubr.f32.gmra.mrb[0].mxu0 %v264
  %v953 = vpop.f32.mrb[0].mxu0
  %v954 = vadd.f32 0.0, %v953
  %v955 = vpop.f32.mrb[0].mxu0
  %956 = vmatprep.mubr.f32.mxu0 0.0
  %957 = vmatmul.mubr.f32.gmra.mrb[0].mxu0 %v267
  %v958 = vpop.f32.mrb[0].mxu0
  %v959 = vadd.f32 0.0, %v958
  %v960 = vpop.f32.mrb[0].mxu0
  %961 = vmatprep.mubr.f32.mxu0 0.0
  %962 = vmatmul.mubr.f32.gmra.mrb[0].mxu0 %v270
  %v963 = vpop.f32.mrb[0].mxu0
  %v964 = vadd.f32 0.0, %v963
  %v965 = vpop.f32.mrb[0].mxu0
  %966 = vmatprep.mubr.f32.mxu0 0.0
  %967 = vmatmul.mubr.f32.gmra.mrb[0].mxu0 %v273
  %v968 = vpop.f32.mrb[0].mxu0
  %v969 = vadd.f32 0.0, %v968
  %v970 = vpop.f32.mrb[0].mxu0
  %971 = vmatprep.mubr.f32.mxu0 0.0
  %972 = vmatmul.mubr.f32.gmra.mrb[0].mxu0 %v276
  %v973 = vpop.f32.mrb[0].mxu0
  %v974 = vadd.f32 0.0, %v973
  %v975 = vpop.f32.mrb[0].mxu0
  %976 = vmatprep.mubr.f32.mxu0 0.0
  %977 = vmatmul.mubr.f32.gmra.mrb[0].mxu0 %v279
  %v978 = vpop.f32.mrb[0].mxu0
  %v979 = vadd.f32 0.0, %v978
  %v980 = vpop.f32.mrb[0].mxu0
  %981 = vmatprep.mubr.f32.mxu0 0.0
  %982 = vmatmul.mubr.f32.gmra.mrb[0].mxu0 %v282
  %v983 = vpop.f32.mrb[0].mxu0
  %v984 = vadd.f32 0.0, %v983
  %v985 = vpop.f32.mrb[0].mxu0
  %986 = vmatprep.mubr.f32.mxu0 0.0
  %987 = vmatmul.mubr.f32.gmra.mrb[0].mxu0 %v285
  %v988 = vpop.f32.mrb[0].mxu0
  %v989 = vadd.f32 0.0, %v988
  %v990 = vpop.f32.mrb[0].mxu0
  %991 = vmatprep.mubr.f32.mxu0 0.0
  %992 = vmatmul.mubr.f32.gmra.mrb[0].mxu0 %v288
  %v993 = vpop.f32.mrb[0].mxu0
  %v994 = vadd.f32 0.0, %v993
  %v995 = vpop.f32.mrb[0].mxu0
  %996 = vmatprep.mubr.f32.mxu0 0.0
  %997 = vmatmul.mubr.f32.gmra.mrb[0].mxu0 %v291
  %v998 = vpop.f32.mrb[0].mxu0
  %v999 = vadd.f32 0.0, %v998
  %v1000 = vpop.f32.mrb[0].mxu0
  %1001 = vmatprep.mubr.f32.mxu0 0.0
  %1002 = vmatmul.mubr.f32.gmra.mrb[0].mxu0 %v294
  %v1003 = vpop.f32.mrb[0].mxu0
  %v1004 = vadd.f32 0.0, %v1003
  %v1005 = vpop.f32.mrb[0].mxu0
  %1006 = vmatprep.mubr.f32.mxu0 0.0
  %1007 = vmatmul.mubr.f32.gmra.mrb[0].mxu0 %v297
  %v1008 = vpop.f32.mrb[0].mxu0
  %v1009 = vadd.f32 0.0, %v1008
  %v1010 = vpop.f32.mrb[0].mxu0
  %1011 = vmatprep.mubr.f32.mxu0 0.0
  %1012 = vmatmul.mubr.f32.gmra.mrb[0].mxu0 %v300
  %v1013 = vpop.f32.mrb[0].mxu0
  %v1014 = vadd.f32 0.0, %v1013
  %v1015 = vpop.f32.mrb[0].mxu0
  %1016 = vmatprep.mubr.f32.mxu0 0.0
  %1017 = vmatmul.mubr.f32.gmra.mrb[0].mxu0 %v303
  %v1018 = vpop.f32.mrb[0].mxu0
  %v1019 = vadd.f32 0.0, %v1018
  %v1020 = vpop.f32.mrb[0].mxu0
  %1021 = vmatprep.mubr.f32.mxu0 0.0
  %1022 = vmatmul.mubr.f32.gmra.mrb[0].mxu0 %v306
  %v1023 = vpop.f32.mrb[0].mxu0
  %v1024 = vadd.f32 0.0, %v1023
  %v1025 = vpop.f32.mrb[0].mxu0
  %1026 = vmatprep.mubr.f32.mxu0 0.0
  %1027 = vmatmul.mubr.f32.gmra.mrb[0].mxu0 %v309
  %v1028 = vpop.f32.mrb[0].mxu0
  %v1029 = vadd.f32 0.0, %v1028
  %v1030 = vpop.f32.mrb[0].mxu0
  %1031 = vmatprep.mubr.f32.mxu0 0.0
  %1032 = vmatmul.mubr.f32.gmra.mrb[0].mxu0 %v312
  %v1033 = vpop.f32.mrb[0].mxu0
  %v1034 = vadd.f32 0.0, %v1033
  %v1035 = vpop.f32.mrb[0].mxu0
  %1036 = vmatprep.mubr.f32.mxu0 0.0
  %1037 = vmatmul.mubr.f32.gmra.mrb[0].mxu0 %v315
  %v1038 = vpop.f32.mrb[0].mxu0
  %v1039 = vadd.f32 0.0, %v1038
  %v1040 = vpop.f32.mrb[0].mxu0
  %1041 = vmatprep.mubr.f32.mxu0 0.0
  %1042 = vmatmul.mubr.f32.gmra.mrb[0].mxu0 %v318
  %v1043 = vpop.f32.mrb[0].mxu0
  %v1044 = vadd.f32 0.0, %v1043
  %v1045 = vpop.f32.mrb[0].mxu0
  %1046 = vmatprep.mubr.f32.mxu0 0.0
  %1047 = vmatmul.mubr.f32.gmra.mrb[0].mxu0 %v321
  %v1048 = vpop.f32.mrb[0].mxu0
  %v1049 = vadd.f32 0.0, %v1048
  %v1050 = vpop.f32.mrb[0].mxu0
  %1051 = vmatprep.mubr.f32.mxu0 0.0
  %1052 = vmatmul.mubr.f32.gmra.mrb[0].mxu0 %v324
  %v1053 = vpop.f32.mrb[0].mxu0
  %v1054 = vadd.f32 0.0, %v1053
  %v1055 = vpop.f32.mrb[0].mxu0
  %1056 = vmatprep.mubr.f32.mxu0 0.0
  %1057 = vmatmul.mubr.f32.gmra.mrb[0].mxu0 %v327
  %v1058 = vpop.f32.mrb[0].mxu0
  %v1059 = vadd.f32 0.0, %v1058
  %v1060 = vpop.f32.mrb[0].mxu0
  %1061 = vmatprep.mubr.f32.mxu0 0.0
  %1062 = vmatmul.mubr.f32.gmra.mrb[0].mxu0 %v330
  %v1063 = vpop.f32.mrb[0].mxu0
  %v1064 = vadd.f32 0.0, %v1063
  %v1065 = vpop.f32.mrb[0].mxu0
  %1066 = vmatprep.mubr.f32.mxu0 0.0
  %1067 = vmatmul.mubr.f32.gmra.mrb[0].mxu0 %v333
  %v1068 = vpop.f32.mrb[0].mxu0
  %v1069 = vadd.f32 0.0, %v1068
  %v1070 = vpop.f32.mrb[0].mxu0
  %1071 = vmatprep.mubr.f32.mxu0 0.0
  %1072 = vmatmul.mubr.f32.gmra.mrb[0].mxu0 %v336
  %v1073 = vpop.f32.mrb[0].mxu0
  %v1074 = vadd.f32 0.0, %v1073
  %v1075 = vpop.f32.mrb[0].mxu0
  %1076 = vmatprep.mubr.f32.mxu0 0.0
  %1077 = vmatmul.mubr.f32.gmra.mrb[0].mxu0 %v339
  %v1078 = vpop.f32.mrb[0].mxu0
  %v1079 = vadd.f32 0.0, %v1078
  %v1080 = vpop.f32.mrb[0].mxu0
  %1081 = vmatprep.mubr.f32.mxu0 0.0
  %1082 = vmatmul.mubr.f32.gmra.mrb[0].mxu0 %v342
  %v1083 = vpop.f32.mrb[0].mxu0
  %v1084 = vadd.f32 0.0, %v1083
  %v1085 = vpop.f32.mrb[0].mxu0
  %1086 = vmatprep.mubr.f32.mxu0 0.0
  %1087 = vmatmul.mubr.f32.gmra.mrb[0].mxu0 %v345
  %v1088 = vpop.f32.mrb[0].mxu0
  %v1089 = vadd.f32 0.0, %v1088
  %v1090 = vpop.f32.mrb[0].mxu0
  %1091 = vmatprep.mubr.f32.mxu0 0.0
  %1092 = vmatmul.mubr.f32.gmra.mrb[0].mxu0 %v348
  %v1093 = vpop.f32.mrb[0].mxu0
  %v1094 = vadd.f32 0.0, %v1093
  %v1095 = vpop.f32.mrb[0].mxu0
  %1096 = vmatprep.mubr.f32.mxu0 0.0
  %1097 = vmatmul.mubr.f32.gmra.mrb[0].mxu0 %v351
  %v1098 = vpop.f32.mrb[0].mxu0
  %v1099 = vadd.f32 0.0, %v1098
  %v1100 = vpop.f32.mrb[0].mxu0
  %1101 = vmatprep.mubr.f32.mxu0 0.0
  %1102 = vmatmul.mubr.f32.gmra.mrb[0].mxu0 %v354
  %v1103 = vpop.f32.mrb[0].mxu0
  %v1104 = vadd.f32 0.0, %v1103
  %v1105 = vpop.f32.mrb[0].mxu0
  %1106 = vmatprep.mubr.f32.mxu0 0.0
  %1107 = vmatmul.mubr.f32.gmra.mrb[0].mxu0 %v357
  %v1108 = vpop.f32.mrb[0].mxu0
  %v1109 = vadd.f32 0.0, %v1108
  %v1110 = vpop.f32.mrb[0].mxu0
  %1111 = vmatprep.mubr.f32.mxu0 0.0
  %1112 = vmatmul.mubr.f32.gmra.mrb[0].mxu0 %v360
  %v1113 = vpop.f32.mrb[0].mxu0
  %v1114 = vadd.f32 0.0, %v1113
  %v1115 = vpop.f32.mrb[0].mxu0
  %1116 = vmatprep.mubr.f32.mxu0 0.0
  %1117 = vmatmul.mubr.f32.gmra.mrb[0].mxu0 %v363
  %v1118 = vpop.f32.mrb[0].mxu0
  %v1119 = vadd.f32 0.0, %v1118
  %v1120 = vpop.f32.mrb[0].mxu0
  %1121 = vmatprep.mubr.f32.mxu0 0.0
  %1122 = vmatmul.mubr.f32.gmra.mrb[0].mxu0 %v366
  %v1123 = vpop.f32.mrb[0].mxu0
  %v1124 = vadd.f32 0.0, %v1123
  %v1125 = vpop.f32.mrb[0].mxu0
  %1126 = vmatprep.mubr.f32.mxu0 0.0
  %1127 = vmatmul.mubr.f32.gmra.mrb[0].mxu0 %v369
  %v1128 = vpop.f32.mrb[0].mxu0
  %v1129 = vadd.f32 0.0, %v1128
  %v1130 = vpop.f32.mrb[0].mxu0
  %1131 = vmatprep.mubr.f32.mxu0 0.0
  %1132 = vmatmul.mubr.f32.gmra.mrb[0].mxu0 %v372
  %v1133 = vpop.f32.mrb[0].mxu0
  %v1134 = vadd.f32 0.0, %v1133
  %v1135 = vpop.f32.mrb[0].mxu0
  %1136 = vmatprep.mubr.f32.mxu0 0.0
  %1137 = vmatmul.mubr.f32.gmra.mrb[0].mxu0 %v375
  %v1138 = vpop.f32.mrb[0].mxu0
  %v1139 = vadd.f32 0.0, %v1138
  %v1140 = vpop.f32.mrb[0].mxu0
  %1141 = vmatprep.mubr.f32.mxu0 0.0
  %1142 = vmatmul.mubr.f32.gmra.mrb[0].mxu0 %v378
  %v1143 = vpop.f32.mrb[0].mxu0
  %v1144 = vadd.f32 0.0, %v1143
  %v1145 = vpop.f32.mrb[0].mxu0
  %1146 = vmatprep.mubr.f32.mxu0 0.0
  %1147 = vmatmul.mubr.f32.gmra.mrb[0].mxu0 %v381
  %v1148 = vpop.f32.mrb[0].mxu0
  %v1149 = vadd.f32 0.0, %v1148
  %v1150 = vpop.f32.mrb[0].mxu0
  %1151 = vmatprep.mubr.f32.mxu0 0.0
  %1152 = vmatmul.mubr.f32.gmra.mrb[0].mxu0 %v384
  %v1153 = vpop.f32.mrb[0].mxu0
  %v1154 = vadd.f32 0.0, %v1153
  %v1155 = vpop.f32.mrb[0].mxu0
  %1156 = vmatprep.mubr.f32.mxu0 0.0
  %1157 = vmatmul.mubr.f32.gmra.mrb[0].mxu0 %v387
  %v1158 = vpop.f32.mrb[0].mxu0
  %v1159 = vadd.f32 0.0, %v1158
  %v1160 = vpop.f32.mrb[0].mxu0
  %1161 = vmatprep.mubr.f32.mxu0 0.0
  %1162 = vmatmul.mubr.f32.gmra.mrb[0].mxu0 %v390
  %v1163 = vpop.f32.mrb[0].mxu0
  %v1164 = vadd.f32 0.0, %v1163
  %v1165 = vpop.f32.mrb[0].mxu0
  %1166 = vmatprep.mubr.f32.mxu0 0.0
  %1167 = vmatmul.mubr.f32.gmra.mrb[0].mxu0 %v393
  %v1168 = vpop.f32.mrb[0].mxu0
  %v1169 = vadd.f32 0.0, %v1168
  %v1170 = vpop.f32.mrb[0].mxu0
  %1171 = vmatprep.mubr.f32.mxu0 0.0
  %1172 = vmatmul.mubr.f32.gmra.mrb[0].mxu0 %v396
  %v1173 = vpop.f32.mrb[0].mxu0
  %v1174 = vadd.f32 0.0, %v1173
  %v1175 = vpop.f32.mrb[0].mxu0
  %1176 = vmatprep.mubr.f32.mxu0 0.0
  %1177 = vmatmul.mubr.f32.gmra.mrb[0].mxu0 %v399
  %v1178 = vpop.f32.mrb[0].mxu0
  %v1179 = vadd.f32 0.0, %v1178
  %v1180 = vpop.f32.mrb[0].mxu0
  %1181 = vmatprep.mubr.f32.mxu0 0.0
  %1182 = vmatmul.mubr.f32.gmra.mrb[0].mxu0 %v402
  %v1183 = vpop.f32.mrb[0].mxu0
  %v1184 = vadd.f32 0.0, %v1183
  %v1185 = vpop.f32.mrb[0].mxu0
  %1186 = vmatprep.mubr.f32.mxu0 0.0
  %1187 = vmatmul.mubr.f32.gmra.mrb[0].mxu0 %v405
  %v1188 = vpop.f32.mrb[0].mxu0
  %v1189 = vadd.f32 0.0, %v1188
  %v1190 = vpop.f32.mrb[0].mxu0
  %1191 = vmatprep.mubr.f32.mxu0 0.0
  %1192 = vmatmul.mubr.f32.gmra.mrb[0].mxu0 %v408
  %v1193 = vpop.f32.mrb[0].mxu0
  %v1194 = vadd.f32 0.0, %v1193
  %v1195 = vpop.f32.mrb[0].mxu0
  %1196 = vmatprep.mubr.f32.mxu0 0.0
  %1197 = vmatmul.mubr.f32.gmra.mrb[0].mxu0 %v411
  %v1198 = vpop.f32.mrb[0].mxu0
  %v1199 = vadd.f32 0.0, %v1198
  %v1200 = vpop.f32.mrb[0].mxu0
  %1201 = vmatprep.mubr.f32.mxu0 0.0
  %1202 = vmatmul.mubr.f32.gmra.mrb[0].mxu0 %v414
  %v1203 = vpop.f32.mrb[0].mxu0
  %v1204 = vadd.f32 0.0, %v1203
  %v1205 = vpop.f32.mrb[0].mxu0
  %1206 = vmatprep.mubr.f32.mxu0 0.0
  %1207 = vmatmul.mubr.f32.gmra.mrb[0].mxu0 %v417
  %v1208 = vpop.f32.mrb[0].mxu0
  %v1209 = vadd.f32 0.0, %v1208
  %v1210 = vpop.f32.mrb[0].mxu0
  %1211 = vmatprep.mubr.f32.mxu0 0.0
  %1212 = vmatmul.mubr.f32.gmra.mrb[0].mxu0 %v420
  %v1213 = vpop.f32.mrb[0].mxu0
  %v1214 = vadd.f32 0.0, %v1213
  %v1215 = vpop.f32.mrb[0].mxu0
  %1216 = vmatprep.mubr.f32.mxu0 0.0
  %1217 = vmatmul.mubr.f32.gmra.mrb[0].mxu0 %v423
  %v1218 = vpop.f32.mrb[0].mxu0
  %v1219 = vadd.f32 0.0, %v1218
  %v1220 = vpop.f32.mrb[0].mxu0
  %1221 = vmatprep.mubr.f32.mxu0 0.0
  %1222 = vmatmul.mubr.f32.gmra.mrb[0].mxu0 %v426
  %v1223 = vpop.f32.mrb[0].mxu0
  %v1224 = vadd.f32 0.0, %v1223
  %v1225 = vpop.f32.mrb[0].mxu0
  %1226 = vmatprep.mubr.f32.mxu0 0.0
  %1227 = vmatmul.mubr.f32.gmra.mrb[0].mxu0 %v429
  %v1228 = vpop.f32.mrb[0].mxu0
  %v1229 = vadd.f32 0.0, %v1228
  %v1230 = vpop.f32.mrb[0].mxu0
  %1231 = vmatprep.mubr.f32.mxu0 0.0
  %1232 = vmatmul.mubr.f32.gmra.mrb[0].mxu0 %v432
  %v1233 = vpop.f32.mrb[0].mxu0
  %v1234 = vadd.f32 0.0, %v1233
  %v1235 = vpop.f32.mrb[0].mxu0
  %1236 = vmatprep.mubr.f32.mxu0 0.0
  %1237 = vmatmul.mubr.f32.gmra.mrb[0].mxu0 %v435
  %v1238 = vpop.f32.mrb[0].mxu0
  %v1239 = vadd.f32 0.0, %v1238
  %v1240 = vpop.f32.mrb[0].mxu0
  %1241 = vmatprep.mubr.f32.mxu0 0.0
  %1242 = vmatmul.mubr.f32.gmra.mrb[0].mxu0 %v438
  %v1243 = vpop.f32.mrb[0].mxu0
  %v1244 = vadd.f32 0.0, %v1243
  %v1245 = vpop.f32.mrb[0].mxu0
  %1246 = vmatprep.mubr.f32.mxu0 0.0
  %1247 = vmatmul.mubr.f32.gmra.mrb[0].mxu0 %v441
  %v1248 = vpop.f32.mrb[0].mxu0
  %v1249 = vadd.f32 0.0, %v1248
  %v1250 = vpop.f32.mrb[0].mxu0
  %1251 = vmatprep.mubr.f32.mxu0 0.0
  %1252 = vmatmul.mubr.f32.gmra.mrb[0].mxu0 %v444
  %v1253 = vpop.f32.mrb[0].mxu0
  %v1254 = vadd.f32 0.0, %v1253
  %v1255 = vpop.f32.mrb[0].mxu0
  %1256 = vmatprep.mubr.f32.mxu0 0.0
  %1257 = vmatmul.mubr.f32.gmra.mrb[0].mxu0 %v447
  %v1258 = vpop.f32.mrb[0].mxu0
  %v1259 = vadd.f32 0.0, %v1258
  %v1260 = vpop.f32.mrb[0].mxu0
  %1261 = vmatprep.mubr.f32.mxu0 0.0
  %1262 = vmatmul.mubr.f32.gmra.mrb[0].mxu0 %v450
  %v1263 = vpop.f32.mrb[0].mxu0
  %v1264 = vadd.f32 0.0, %v1263
  %v1265 = vpop.f32.mrb[0].mxu0
  %1266 = vmatprep.mubr.f32.mxu0 0.0
  %1267 = vmatmul.mubr.f32.gmra.mrb[0].mxu0 %v453
  %v1268 = vpop.f32.mrb[0].mxu0
  %v1269 = vadd.f32 0.0, %v1268
  %v1270 = vpop.f32.mrb[0].mxu0
  %1271 = vmatprep.mubr.f32.mxu0 0.0
  %1272 = vmatmul.mubr.f32.gmra.mrb[0].mxu0 %v456
  %v1273 = vpop.f32.mrb[0].mxu0
  %v1274 = vadd.f32 0.0, %v1273
  %v1275 = vpop.f32.mrb[0].mxu0
  %1276 = vmatprep.mubr.f32.mxu0 0.0
  %1277 = vmatmul.mubr.f32.gmra.mrb[0].mxu0 %v459
  %v1278 = vpop.f32.mrb[0].mxu0
  %v1279 = vadd.f32 0.0, %v1278
  %v1280 = vpop.f32.mrb[0].mxu0
  %1281 = vmatprep.mubr.f32.mxu0 0.0
  %1282 = vmatmul.mubr.f32.gmra.mrb[0].mxu0 %v462
  %v1283 = vpop.f32.mrb[0].mxu0
  %v1284 = vadd.f32 0.0, %v1283
  %v1285 = vpop.f32.mrb[0].mxu0
  %1286 = vmatprep.mubr.f32.mxu0 0.0
  %1287 = vmatmul.mubr.f32.gmra.mrb[0].mxu0 %v465
  %v1288 = vpop.f32.mrb[0].mxu0
  %v1289 = vadd.f32 0.0, %v1288
  %v1290 = vpop.f32.mrb[0].mxu0
  %1291 = vmatprep.mubr.f32.mxu0 0.0
  %1292 = vmatmul.mubr.f32.gmra.mrb[0].mxu0 %v468
  %v1293 = vpop.f32.mrb[0].mxu0
  %v1294 = vadd.f32 0.0, %v1293
  %v1295 = vpop.f32.mrb[0].mxu0
  %1296 = vmatprep.mubr.f32.mxu0 0.0
  %1297 = vmatmul.mubr.f32.gmra.mrb[0].mxu0 %v471
  %v1298 = vpop.f32.mrb[0].mxu0
  %v1299 = vadd.f32 0.0, %v1298
  %v1300 = vpop.f32.mrb[0].mxu0
  %1301 = vmatprep.mubr.f32.mxu0 0.0
  %1302 = vmatmul.mubr.f32.gmra.mrb[0].mxu0 %v474
  %v1303 = vpop.f32.mrb[0].mxu0
  %v1304 = vadd.f32 0.0, %v1303
  %v1305 = vpop.f32.mrb[0].mxu0
  %1306 = vmatprep.mubr.f32.mxu0 0.0
  %1307 = vmatmul.mubr.f32.gmra.mrb[0].mxu0 %v477
  %v1308 = vpop.f32.mrb[0].mxu0
  %v1309 = vadd.f32 0.0, %v1308
  %v1310 = vpop.f32.mrb[0].mxu0
  %1311 = vmatprep.mubr.f32.mxu0 0.0
  %1312 = vmatmul.mubr.f32.gmra.mrb[0].mxu0 %v480
  %v1313 = vpop.f32.mrb[0].mxu0
  %v1314 = vadd.f32 0.0, %v1313
  %v1315 = vpop.f32.mrb[0].mxu0
  %1316 = vmatprep.mubr.f32.mxu0 0.0
  %1317 = vmatmul.mubr.f32.gmra.mrb[0].mxu0 %v483
  %v1318 = vpop.f32.mrb[0].mxu0
  %v1319 = vadd.f32 0.0, %v1318
  %v1320 = vpop.f32.mrb[0].mxu0
  %1321 = vmatprep.mubr.f32.mxu0 0.0
  %1322 = vmatmul.mubr.f32.gmra.mrb[0].mxu0 %v486
  %v1323 = vpop.f32.mrb[0].mxu0
  %v1324 = vadd.f32 0.0, %v1323
  %v1325 = vpop.f32.mrb[0].mxu0
  %1326 = vmatprep.mubr.f32.mxu0 0.0
  %1327 = vmatmul.mubr.f32.gmra.mrb[0].mxu0 %v489
  %v1328 = vpop.f32.mrb[0].mxu0
  %v1329 = vadd.f32 0.0, %v1328
  %v1330 = vpop.f32.mrb[0].mxu0
  %1331 = vmatprep.mubr.f32.mxu0 0.0
  %1332 = vmatmul.mubr.f32.gmra.mrb[0].mxu0 %v492
  %v1333 = vpop.f32.mrb[0].mxu0
  %v1334 = vadd.f32 0.0, %v1333
  %v1335 = vpop.f32.mrb[0].mxu0
  %1336 = vmatprep.mubr.f32.mxu0 0.0
  %1337 = vmatmul.mubr.f32.gmra.mrb[0].mxu0 %v495
  %v1338 = vpop.f32.mrb[0].mxu0
  %v1339 = vadd.f32 0.0, %v1338
  %v1340 = vpop.f32.mrb[0].mxu0
  %1341 = vmatprep.mubr.f32.mxu0 0.0
  %1342 = vmatmul.mubr.f32.gmra.mrb[0].mxu0 %v498
  %v1343 = vpop.f32.mrb[0].mxu0
  %v1344 = vadd.f32 0.0, %v1343
  %v1345 = vpop.f32.mrb[0].mxu0
  %1346 = vmatprep.mubr.f32.mxu0 0.0
  %1347 = vmatmul.mubr.f32.gmra.mrb[0].mxu0 %v501
  %v1348 = vpop.f32.mrb[0].mxu0
  %v1349 = vadd.f32 0.0, %v1348
  %v1350 = vpop.f32.mrb[0].mxu0
  %1351 = vmatprep.mubr.f32.mxu0 0.0
  %1352 = vmatmul.mubr.f32.gmra.mrb[0].mxu0 %v504
  %v1353 = vpop.f32.mrb[0].mxu0
  %v1354 = vadd.f32 0.0, %v1353
  %v1355 = vpop.f32.mrb[0].mxu0
  %1356 = vmatprep.mubr.f32.mxu0 0.0
  %1357 = vmatmul.mubr.f32.gmra.mrb[0].mxu0 %v507
  %v1358 = vpop.f32.mrb[0].mxu0
  %v1359 = vadd.f32 0.0, %v1358
  %v1360 = vpop.f32.mrb[0].mxu0
  %1361 = vmatprep.mubr.f32.mxu0 0.0
  %1362 = vmatmul.mubr.f32.gmra.mrb[0].mxu0 %v510
  %v1363 = vpop.f32.mrb[0].mxu0
  %v1364 = vadd.f32 0.0, %v1363
  %v1365 = vpop.f32.mrb[0].mxu0
  %1366 = vmatprep.mubr.f32.mxu0 0.0
  %1367 = vmatmul.mubr.f32.gmra.mrb[0].mxu0 %v513
  %v1368 = vpop.f32.mrb[0].mxu0
  %v1369 = vadd.f32 0.0, %v1368
  %v1370 = vpop.f32.mrb[0].mxu0
  %1371 = vmatprep.mubr.f32.mxu0 0.0
  %1372 = vmatmul.mubr.f32.gmra.mrb[0].mxu0 %v516
  %v1373 = vpop.f32.mrb[0].mxu0
  %v1374 = vadd.f32 0.0, %v1373
  %v1375 = vpop.f32.mrb[0].mxu0
  %1376 = vmatprep.mubr.f32.mxu0 0.0
  %1377 = vmatmul.mubr.f32.gmra.mrb[0].mxu0 %v519
  %v1378 = vpop.f32.mrb[0].mxu0
  %v1379 = vadd.f32 0.0, %v1378
  %v1380 = vpop.f32.mrb[0].mxu0
  %1381 = vmatprep.mubr.f32.mxu0 0.0
  %1382 = vmatmul.mubr.f32.gmra.mrb[0].mxu0 %v522
  %v1383 = vpop.f32.mrb[0].mxu0
  %v1384 = vadd.f32 0.0, %v1383
  %v1385 = vpop.f32.mrb[0].mxu0
  %1386 = vmatprep.mubr.f32.mxu0 0.0
  %1387 = vmatmul.mubr.f32.gmra.mrb[0].mxu0 %v525
  %v1388 = vpop.f32.mrb[0].mxu0
  %v1389 = vadd.f32 0.0, %v1388
  %v1390 = vpop.f32.mrb[0].mxu0
  %1391 = vmatprep.mubr.f32.mxu0 0.0
  %1392 = vmatmul.mubr.f32.gmra.mrb[0].mxu0 %v528
  %v1393 = vpop.f32.mrb[0].mxu0
  %v1394 = vadd.f32 0.0, %v1393
  %v1395 = vpop.f32.mrb[0].mxu0
  %1396 = vmatprep.mubr.f32.mxu0 0.0
  %1397 = vmatmul.mubr.f32.gmra.mrb[0].mxu0 %v531
  %v1398 = vpop.f32.mrb[0].mxu0
  %v1399 = vadd.f32 0.0, %v1398
  %v1400 = vpop.f32.mrb[0].mxu0
  %1401 = vmatprep.mubr.f32.mxu0 0.0
  %1402 = vmatmul.mubr.f32.gmra.mrb[0].mxu0 %v534
  %v1403 = vpop.f32.mrb[0].mxu0
  %v1404 = vadd.f32 0.0, %v1403
  %v1405 = vpop.f32.mrb[0].mxu0
  %1406 = vmatprep.mubr.f32.mxu0 0.0
  %1407 = vmatmul.mubr.f32.gmra.mrb[0].mxu0 %v537
  %v1408 = vpop.f32.mrb[0].mxu0
  %v1409 = vadd.f32 0.0, %v1408
  %v1410 = vpop.f32.mrb[0].mxu0
  %1411 = vmatprep.mubr.f32.mxu0 0.0
  %1412 = vmatmul.mubr.f32.gmra.mrb[0].mxu0 %v540
  %v1413 = vpop.f32.mrb[0].mxu0
  %v1414 = vadd.f32 0.0, %v1413
  %v1415 = vpop.f32.mrb[0].mxu0
  %1416 = vmatprep.mubr.f32.mxu0 0.0
  %1417 = vmatmul.mubr.f32.gmra.mrb[0].mxu0 %v543
  %v1418 = vpop.f32.mrb[0].mxu0
  %v1419 = vadd.f32 0.0, %v1418
  %v1420 = vpop.f32.mrb[0].mxu0
  %1421 = vmatprep.mubr.f32.mxu0 0.0
  %1422 = vmatmul.mubr.f32.gmra.mrb[0].mxu0 %v546
  %v1423 = vpop.f32.mrb[0].mxu0
  %v1424 = vadd.f32 0.0, %v1423
  %v1425 = vpop.f32.mrb[0].mxu0
  %1426 = vmatprep.mubr.f32.mxu0 0.0
  %1427 = vmatmul.mubr.f32.gmra.mrb[0].mxu0 %v549
  %v1428 = vpop.f32.mrb[0].mxu0
  %v1429 = vadd.f32 0.0, %v1428
  %v1430 = vpop.f32.mrb[0].mxu0
  %1431 = vmatprep.mubr.f32.mxu0 0.0
  %1432 = vmatmul.mubr.f32.gmra.mrb[0].mxu0 %v552
  %v1433 = vpop.f32.mrb[0].mxu0
  %v1434 = vadd.f32 0.0, %v1433
  %v1435 = vpop.f32.mrb[0].mxu0
  %1436 = vmatprep.mubr.f32.mxu0 0.0
  %1437 = vmatmul.mubr.f32.gmra.mrb[0].mxu0 %v555
  %v1438 = vpop.f32.mrb[0].mxu0
  %v1439 = vadd.f32 0.0, %v1438
  %v1440 = vpop.f32.mrb[0].mxu0
  %1441 = vmatprep.mubr.f32.mxu0 0.0
  %1442 = vmatmul.mubr.f32.gmra.mrb[0].mxu0 %v558
  %v1443 = vpop.f32.mrb[0].mxu0
  %v1444 = vadd.f32 0.0, %v1443
  %v1445 = vpop.f32.mrb[0].mxu0
  %1446 = vmatprep.mubr.f32.mxu0 0.0
  %1447 = vmatmul.mubr.f32.gmra.mrb[0].mxu0 %v561
  %v1448 = vpop.f32.mrb[0].mxu0
  %v1449 = vadd.f32 0.0, %v1448
  %v1450 = vpop.f32.mrb[0].mxu0
  %1451 = vmatprep.mubr.f32.mxu0 0.0
  %1452 = vmatmul.mubr.f32.gmra.mrb[0].mxu0 %v564
  %v1453 = vpop.f32.mrb[0].mxu0
  %v1454 = vadd.f32 0.0, %v1453
  %v1455 = vpop.f32.mrb[0].mxu0
  %1456 = vmatprep.mubr.f32.mxu0 0.0
  %1457 = vmatmul.mubr.f32.gmra.mrb[0].mxu0 %v567
  %v1458 = vpop.f32.mrb[0].mxu0
  %v1459 = vadd.f32 0.0, %v1458
  %v1460 = vpop.f32.mrb[0].mxu0
  %1461 = vmatprep.mubr.f32.mxu0 0.0
  %1462 = vmatmul.mubr.f32.gmra.mrb[0].mxu0 %v570
  %v1463 = vpop.f32.mrb[0].mxu0
  %v1464 = vadd.f32 0.0, %v1463
  %v1465 = vpop.f32.mrb[0].mxu0
  %1466 = vmatprep.mubr.f32.mxu0 0.0
  %1467 = vmatmul.mubr.f32.gmra.mrb[0].mxu0 %v573
  %v1468 = vpop.f32.mrb[0].mxu0
  %v1469 = vadd.f32 0.0, %v1468
  %v1470 = vpop.f32.mrb[0].mxu0
  %1471 = vmatprep.mubr.f32.mxu0 0.0
  %1472 = vmatmul.mubr.f32.gmra.mrb[0].mxu0 %v576
  %v1473 = vpop.f32.mrb[0].mxu0
  %v1474 = vadd.f32 0.0, %v1473
  %v1475 = vpop.f32.mrb[0].mxu0
  %1476 = vmatprep.mubr.f32.mxu0 0.0
  %1477 = vmatmul.mubr.f32.gmra.mrb[0].mxu0 %v579
  %v1478 = vpop.f32.mrb[0].mxu0
  %v1479 = vadd.f32 0.0, %v1478
  %v1480 = vpop.f32.mrb[0].mxu0
  %1481 = vmatprep.mubr.f32.mxu0 0.0
  %1482 = vmatmul.mubr.f32.gmra.mrb[0].mxu0 %v582
  %v1483 = vpop.f32.mrb[0].mxu0
  %v1484 = vadd.f32 0.0, %v1483
  %v1485 = vpop.f32.mrb[0].mxu0
  %1486 = vmatprep.mubr.f32.mxu0 0.0
  %1487 = vmatmul.mubr.f32.gmra.mrb[0].mxu0 %v585
  %v1488 = vpop.f32.mrb[0].mxu0
  %v1489 = vadd.f32 0.0, %v1488
  %v1490 = vpop.f32.mrb[0].mxu0
  %1491 = vmatprep.mubr.f32.mxu0 0.0
  %1492 = vmatmul.mubr.f32.gmra.mrb[0].mxu0 %v588
  %v1493 = vpop.f32.mrb[0].mxu0
  %v1494 = vadd.f32 0.0, %v1493
  %v1495 = vpop.f32.mrb[0].mxu0
  %1496 = vmatprep.mubr.f32.mxu0 0.0
  %1497 = vmatmul.mubr.f32.gmra.mrb[0].mxu0 %v591
  %v1498 = vpop.f32.mrb[0].mxu0
  %v1499 = vadd.f32 0.0, %v1498
  %v1500 = vpop.f32.mrb[0].mxu0
  %1501 = vmatprep.mubr.f32.mxu0 0.0
  %1502 = vmatmul.mubr.f32.gmra.mrb[0].mxu0 %v594
  %v1503 = vpop.f32.mrb[0].mxu0
  %v1504 = vadd.f32 0.0, %v1503
  %v1505 = vpop.f32.mrb[0].mxu0
  %1506 = vmatprep.mubr.f32.mxu0 0.0
  %1507 = vmatmul.mubr.f32.gmra.mrb[0].mxu0 %v597
  %v1508 = vpop.f32.mrb[0].mxu0
  %v1509 = vadd.f32 0.0, %v1508
  %v1510 = vpop.f32.mrb[0].mxu0
  %1511 = vmatprep.mubr.f32.mxu0 0.0
  %1512 = vmatmul.mubr.f32.gmra.mrb[0].mxu0 %v600
  %v1513 = vpop.f32.mrb[0].mxu0
  %v1514 = vadd.f32 0.0, %v1513
  %v1515 = vpop.f32.mrb[0].mxu0
  %1516 = vmatprep.mubr.f32.mxu0 0.0
  %1517 = vmatmul.mubr.f32.gmra.mrb[0].mxu0 %v603
  %v1518 = vpop.f32.mrb[0].mxu0
  %v1519 = vadd.f32 0.0, %v1518
  %v1520 = vpop.f32.mrb[0].mxu0
  %1521 = vmatprep.mubr.f32.mxu0 0.0
  %1522 = vmatmul.mubr.f32.gmra.mrb[0].mxu0 %v606
  %v1523 = vpop.f32.mrb[0].mxu0
  %v1524 = vadd.f32 0.0, %v1523
  %v1525 = vpop.f32.mrb[0].mxu0
  %1526 = vmatprep.mubr.f32.mxu0 0.0
  %1527 = vmatmul.mubr.f32.gmra.mrb[0].mxu0 %v609
  %v1528 = vpop.f32.mrb[0].mxu0
  %v1529 = vadd.f32 0.0, %v1528
  %v1530 = vpop.f32.mrb[0].mxu0
  %1531 = vmatprep.mubr.f32.mxu0 0.0
  %1532 = vmatmul.mubr.f32.gmra.mrb[0].mxu0 %v612
  %v1533 = vpop.f32.mrb[0].mxu0
  %v1534 = vadd.f32 0.0, %v1533
  %v1535 = vpop.f32.mrb[0].mxu0
  %1536 = vmatprep.mubr.f32.mxu0 0.0
  %1537 = vmatmul.mubr.f32.gmra.mrb[0].mxu0 %v615
  %v1538 = vpop.f32.mrb[0].mxu0
  %v1539 = vadd.f32 0.0, %v1538
  %v1540 = vpop.f32.mrb[0].mxu0
  %1541 = vmatprep.mubr.f32.mxu0 0.0
  %1542 = vmatmul.mubr.f32.gmra.mrb[0].mxu0 %v618
  %v1543 = vpop.f32.mrb[0].mxu0
  %v1544 = vadd.f32 0.0, %v1543
  %v1545 = vpop.f32.mrb[0].mxu0
  %1546 = vmatprep.mubr.f32.mxu0 0.0
  %1547 = vmatmul.mubr.f32.gmra.mrb[0].mxu0 %v621
  %v1548 = vpop.f32.mrb[0].mxu0
  %v1549 = vadd.f32 0.0, %v1548
  %v1550 = vpop.f32.mrb[0].mxu0
  %1551 = vmatprep.mubr.f32.mxu0 0.0
  %1552 = vmatmul.mubr.f32.gmra.mrb[0].mxu0 %v624
  %v1553 = vpop.f32.mrb[0].mxu0
  %v1554 = vadd.f32 0.0, %v1553
  %v1555 = vpop.f32.mrb[0].mxu0
  %1556 = vmatprep.mubr.f32.mxu0 0.0
  %1557 = vmatmul.mubr.f32.gmra.mrb[0].mxu0 %v627
  %v1558 = vpop.f32.mrb[0].mxu0
  %v1559 = vadd.f32 0.0, %v1558
  %v1560 = vpop.f32.mrb[0].mxu0
  %1561 = vmatprep.mubr.f32.mxu0 0.0
  %1562 = vmatmul.mubr.f32.gmra.mrb[0].mxu0 %v630
  %v1563 = vpop.f32.mrb[0].mxu0
  %v1564 = vadd.f32 0.0, %v1563
  %v1565 = vpop.f32.mrb[0].mxu0
  %1566 = vmatprep.mubr.f32.mxu0 0.0
  %1567 = vmatmul.mubr.f32.gmra.mrb[0].mxu0 %v633
  %v1568 = vpop.f32.mrb[0].mxu0
  %v1569 = vadd.f32 0.0, %v1568
  %v1570 = vpop.f32.mrb[0].mxu0
  %1571 = vmatprep.mubr.f32.mxu0 0.0
  %1572 = vmatmul.mubr.f32.gmra.mrb[0].mxu0 %v636
  %v1573 = vpop.f32.mrb[0].mxu0
  %v1574 = vadd.f32 0.0, %v1573
  %v1575 = vpop.f32.mrb[0].mxu0
  %1576 = vmatprep.mubr.f32.mxu0 0.0
  %1577 = vmatmul.mubr.f32.gmra.mrb[0].mxu0 %v639
  %v1578 = vpop.f32.mrb[0].mxu0
  %v1579 = vadd.f32 0.0, %v1578
  %v1580 = vpop.f32.mrb[0].mxu0
  %1581 = vmatprep.mubr.f32.mxu0 0.0
  %1582 = vmatmul.mubr.f32.gmra.mrb[0].mxu0 %v642
  %v1583 = vpop.f32.mrb[0].mxu0
  %v1584 = vadd.f32 0.0, %v1583
  %v1585 = vpop.f32.mrb[0].mxu0
  %1586 = vmatprep.mubr.f32.mxu0 0.0
  %1587 = vmatmul.mubr.f32.gmra.mrb[0].mxu0 %v645
  %v1588 = vpop.f32.mrb[0].mxu0
  %v1589 = vadd.f32 0.0, %v1588
  %v1590 = vpop.f32.mrb[0].mxu0
  %1591 = vmatprep.mubr.f32.mxu0 0.0
  %1592 = vmatmul.mubr.f32.gmra.mrb[0].mxu0 %v648
  %v1593 = vpop.f32.mrb[0].mxu0
  %v1594 = vadd.f32 0.0, %v1593
  %v1595 = vpop.f32.mrb[0].mxu0
  %1596 = vmatprep.mubr.f32.mxu0 0.0
  %1597 = vmatmul.mubr.f32.gmra.mrb[0].mxu0 %v651
  %v1598 = vpop.f32.mrb[0].mxu0
  %v1599 = vadd.f32 0.0, %v1598
  %v1600 = vpop.f32.mrb[0].mxu0
  %1601 = vmatprep.mubr.f32.mxu0 0.0
  %1602 = vmatmul.mubr.f32.gmra.mrb[0].mxu0 %v654
  %v1603 = vpop.f32.mrb[0].mxu0
  %v1604 = vadd.f32 0.0, %v1603
  %v1605 = vpop.f32.mrb[0].mxu0
  %1606 = vmatprep.mubr.f32.mxu0 0.0
  %1607 = vmatmul.mubr.f32.gmra.mrb[0].mxu0 %v657
  %v1608 = vpop.f32.mrb[0].mxu0
  %v1609 = vadd.f32 0.0, %v1608
  %v1610 = vpop.f32.mrb[0].mxu0
  %1611 = vmatprep.mubr.f32.mxu0 0.0
  %1612 = vmatmul.mubr.f32.gmra.mrb[0].mxu0 %v660
  %v1613 = vpop.f32.mrb[0].mxu0
  %v1614 = vadd.f32 0.0, %v1613
  %v1615 = vpop.f32.mrb[0].mxu0
  %1616 = vmatprep.mubr.f32.mxu0 0.0
  %1617 = vmatmul.mubr.f32.gmra.mrb[0].mxu0 %v663
  %v1618 = vpop.f32.mrb[0].mxu0
  %v1619 = vadd.f32 0.0, %v1618
  %v1620 = vpop.f32.mrb[0].mxu0
  %1621 = vmatprep.mubr.f32.mxu0 0.0
  %1622 = vmatmul.mubr.f32.gmra.mrb[0].mxu0 %v666
  %v1623 = vpop.f32.mrb[0].mxu0
  %v1624 = vadd.f32 0.0, %v1623
  %v1625 = vpop.f32.mrb[0].mxu0
  %1626 = vmatprep.mubr.f32.mxu0 0.0
  %1627 = vmatmul.mubr.f32.gmra.mrb[0].mxu0 %v669
  %v1628 = vpop.f32.mrb[0].mxu0
  %v1629 = vadd.f32 0.0, %v1628
  %v1630 = vpop.f32.mrb[0].mxu0
  %1631 = vmatprep.mubr.f32.mxu0 0.0
  %1632 = vmatmul.mubr.f32.gmra.mrb[0].mxu0 %v672
  %v1633 = vpop.f32.mrb[0].mxu0
  %v1634 = vadd.f32 0.0, %v1633
  %v1635 = vpop.f32.mrb[0].mxu0
  %1636 = vmatprep.mubr.f32.mxu0 0.0
  %1637 = vmatmul.mubr.f32.gmra.mrb[0].mxu0 %v675
  %v1638 = vpop.f32.mrb[0].mxu0
  %v1639 = vadd.f32 0.0, %v1638
  %v1640 = vpop.f32.mrb[0].mxu0
  %1641 = vmatprep.mubr.f32.mxu0 0.0
  %1642 = vmatmul.mubr.f32.gmra.mrb[0].mxu0 %v678
  %v1643 = vpop.f32.mrb[0].mxu0
  %v1644 = vadd.f32 0.0, %v1643
  %v1645 = vpop.f32.mrb[0].mxu0
  %1646 = vmatprep.mubr.f32.mxu0 0.0
  %1647 = vmatmul.mubr.f32.gmra.mrb[0].mxu0 %v681
  %v1648 = vpop.f32.mrb[0].mxu0
  %v1649 = vadd.f32 0.0, %v1648
  %v1650 = vpop.f32.mrb[0].mxu0
  %1651 = vmatprep.mubr.f32.mxu0 0.0
  %1652 = vmatmul.mubr.f32.gmra.mrb[0].mxu0 %v684
  %v1653 = vpop.f32.mrb[0].mxu0
  %v1654 = vadd.f32 0.0, %v1653
  %v1655 = vpop.f32.mrb[0].mxu0
  %1656 = vmatprep.mubr.f32.mxu0 0.0
  %1657 = vmatmul.mubr.f32.gmra.mrb[0].mxu0 %v687
  %v1658 = vpop.f32.mrb[0].mxu0
  %v1659 = vadd.f32 0.0, %v1658
  %v1660 = vpop.f32.mrb[0].mxu0
  %1661 = vmatprep.mubr.f32.mxu0 0.0
  %1662 = vmatmul.mubr.f32.gmra.mrb[0].mxu0 %v690
  %v1663 = vpop.f32.mrb[0].mxu0
  %v1664 = vadd.f32 0.0, %v1663
  %v1665 = vpop.f32.mrb[0].mxu0
  %1666 = vmatprep.mubr.f32.mxu0 0.0
  %1667 = vmatmul.mubr.f32.gmra.mrb[0].mxu0 %v693
  %v1668 = vpop.f32.mrb[0].mxu0
  %v1669 = vadd.f32 0.0, %v1668
  %v1670 = vpop.f32.mrb[0].mxu0
  %1671 = vmatprep.mubr.f32.mxu0 0.0
  %1672 = vmatmul.mubr.f32.gmra.mrb[0].mxu0 %v696
  %v1673 = vpop.f32.mrb[0].mxu0
  %v1674 = vadd.f32 0.0, %v1673
  %v1675 = vpop.f32.mrb[0].mxu0
  %1676 = vmatprep.mubr.f32.mxu0 0.0
  %1677 = vmatmul.mubr.f32.gmra.mrb[0].mxu0 %v699
  %v1678 = vpop.f32.mrb[0].mxu0
  %v1679 = vadd.f32 0.0, %v1678
  %v1680 = vpop.f32.mrb[0].mxu0
  %1681 = vmatprep.mubr.f32.mxu0 0.0
  %1682 = vmatmul.mubr.f32.gmra.mrb[0].mxu0 %v702
  %v1683 = vpop.f32.mrb[0].mxu0
  %v1684 = vadd.f32 0.0, %v1683
  %v1685 = vpop.f32.mrb[0].mxu0
  %1686 = vmatprep.mubr.f32.mxu0 0.0
  %1687 = vmatmul.mubr.f32.gmra.mrb[0].mxu0 %v705
  %v1688 = vpop.f32.mrb[0].mxu0
  %v1689 = vadd.f32 0.0, %v1688
  %v1690 = vpop.f32.mrb[0].mxu0
  %1691 = vmatprep.mubr.f32.mxu0 0.0
  %1692 = vmatmul.mubr.f32.gmra.mrb[0].mxu0 %v708
  %v1693 = vpop.f32.mrb[0].mxu0
  %v1694 = vadd.f32 0.0, %v1693
  %v1695 = vpop.f32.mrb[0].mxu0
  %1696 = vmatprep.mubr.f32.mxu0 0.0
  %1697 = vmatmul.mubr.f32.gmra.mrb[0].mxu0 %v711
  %v1698 = vpop.f32.mrb[0].mxu0
  %v1699 = vadd.f32 0.0, %v1698
  %v1700 = vpop.f32.mrb[0].mxu0
  %1701 = vmatprep.mubr.f32.mxu0 0.0
  %1702 = vmatmul.mubr.f32.gmra.mrb[0].mxu0 %v714
  %v1703 = vpop.f32.mrb[0].mxu0
  %v1704 = vadd.f32 0.0, %v1703
  %v1705 = vpop.f32.mrb[0].mxu0
  %1706 = vmatprep.mubr.f32.mxu0 0.0
  %1707 = vmatmul.mubr.f32.gmra.mrb[0].mxu0 %v717
  %v1708 = vpop.f32.mrb[0].mxu0
  %v1709 = vadd.f32 0.0, %v1708
  %v1710 = vpop.f32.mrb[0].mxu0
  %1711 = vmatprep.mubr.f32.mxu0 0.0
  %1712 = vmatmul.mubr.f32.gmra.mrb[0].mxu0 %v720
  %v1713 = vpop.f32.mrb[0].mxu0
  %v1714 = vadd.f32 0.0, %v1713
  %v1715 = vpop.f32.mrb[0].mxu0
  %1716 = vmatprep.mubr.f32.mxu0 0.0
  %1717 = vmatmul.mubr.f32.gmra.mrb[0].mxu0 %v723
  %v1718 = vpop.f32.mrb[0].mxu0
  %v1719 = vadd.f32 0.0, %v1718
  %v1720 = vpop.f32.mrb[0].mxu0
  %1721 = vmatprep.mubr.f32.mxu0 0.0
  %1722 = vmatmul.mubr.f32.gmra.mrb[0].mxu0 %v726
  %v1723 = vpop.f32.mrb[0].mxu0
  %v1724 = vadd.f32 0.0, %v1723
  %v1725 = vpop.f32.mrb[0].mxu0
  %1726 = vmatprep.mubr.f32.mxu0 0.0
  %1727 = vmatmul.mubr.f32.gmra.mrb[0].mxu0 %v729
  %v1728 = vpop.f32.mrb[0].mxu0
  %v1729 = vadd.f32 0.0, %v1728
  %v1730 = vpop.f32.mrb[0].mxu0
  %1731 = vmatprep.mubr.f32.mxu0 0.0
  %1732 = vmatmul.mubr.f32.gmra.mrb[0].mxu0 %v732
  %v1733 = vpop.f32.mrb[0].mxu0
  %v1734 = vadd.f32 0.0, %v1733
  %v1735 = vpop.f32.mrb[0].mxu0
  %1736 = vmatprep.mubr.f32.mxu0 0.0
  %1737 = vmatmul.mubr.f32.gmra.mrb[0].mxu0 %v735
  %v1738 = vpop.f32.mrb[0].mxu0
  %v1739 = vadd.f32 0.0, %v1738
  %v1740 = vpop.f32.mrb[0].mxu0
  %1741 = vmatprep.mubr.f32.mxu0 0.0
  %1742 = vmatmul.mubr.f32.gmra.mrb[0].mxu0 %v738
  %v1743 = vpop.f32.mrb[0].mxu0
  %v1744 = vadd.f32 0.0, %v1743
  %v1745 = vpop.f32.mrb[0].mxu0
  %1746 = vmatprep.mubr.f32.mxu0 0.0
  %1747 = vmatmul.mubr.f32.gmra.mrb[0].mxu0 %v741
  %v1748 = vpop.f32.mrb[0].mxu0
  %v1749 = vadd.f32 0.0, %v1748
  %v1750 = vpop.f32.mrb[0].mxu0
  %1751 = vmatprep.mubr.f32.mxu0 0.0
  %1752 = vmatmul.mubr.f32.gmra.mrb[0].mxu0 %v744
  %v1753 = vpop.f32.mrb[0].mxu0
  %v1754 = vadd.f32 0.0, %v1753
  %v1755 = vpop.f32.mrb[0].mxu0
  %1756 = vmatprep.mubr.f32.mxu0 0.0
  %1757 = vmatmul.mubr.f32.gmra.mrb[0].mxu0 %v747
  %v1758 = vpop.f32.mrb[0].mxu0
  %v1759 = vadd.f32 0.0, %v1758
  %v1760 = vpop.f32.mrb[0].mxu0
  %1761 = vmatprep.mubr.f32.mxu0 0.0
  %1762 = vmatmul.mubr.f32.gmra.mrb[0].mxu0 %v750
  %v1763 = vpop.f32.mrb[0].mxu0
  %v1764 = vadd.f32 0.0, %v1763
  %v1765 = vpop.f32.mrb[0].mxu0
  %1766 = vmatprep.mubr.f32.mxu0 0.0
  %1767 = vmatmul.mubr.f32.gmra.mrb[0].mxu0 %v753
  %v1768 = vpop.f32.mrb[0].mxu0
  %v1769 = vadd.f32 0.0, %v1768
  %v1770 = vpop.f32.mrb[0].mxu0
  %1771 = vmatprep.mubr.f32.mxu0 0.0
  %1772 = vmatmul.mubr.f32.gmra.mrb[0].mxu0 %v756
  %v1773 = vpop.f32.mrb[0].mxu0
  %v1774 = vadd.f32 0.0, %v1773
  %v1775 = vpop.f32.mrb[0].mxu0
  %1776 = vmatprep.mubr.f32.mxu0 0.0
  %1777 = vmatmul.mubr.f32.gmra.mrb[0].mxu0 %v759
  %v1778 = vpop.f32.mrb[0].mxu0
  %v1779 = vadd.f32 0.0, %v1778
  %v1780 = vpop.f32.mrb[0].mxu0
  %1781 = vmatprep.mubr.f32.mxu0 0.0
  %1782 = vmatmul.mubr.f32.gmra.mrb[0].mxu0 %v762
  %v1783 = vpop.f32.mrb[0].mxu0
  %v1784 = vadd.f32 0.0, %v1783
  %v1785 = vpop.f32.mrb[0].mxu0
  %1786 = vmatprep.mubr.f32.mxu0 0.0
  %1787 = vmatmul.mubr.f32.gmra.mrb[0].mxu0 %v765
  %v1788 = vpop.f32.mrb[0].mxu0
  %v1789 = vadd.f32 0.0, %v1788
  %v1790 = vpop.f32.mrb[0].mxu0
  %1791 = vmatprep.mubr.f32.mxu0 0.0
  %1792 = vmatmul.mubr.f32.gmra.mrb[0].mxu0 %v768
  %v1793 = vpop.f32.mrb[0].mxu0
  %v1794 = vadd.f32 0.0, %v1793
  %v1795 = vpop.f32.mrb[0].mxu0
  %1796 = vmatprep.mubr.f32.mxu0 0.0
  %1797 = vmatmul.mubr.f32.gmra.mrb[0].mxu0 %v771
  %v1798 = vpop.f32.mrb[0].mxu0
  %v1799 = vadd.f32 0.0, %v1798
  %v1800 = vpop.f32.mrb[0].mxu0
  %1801 = vmatprep.mubr.f32.mxu0 0.0
  %1802 = vmatmul.mubr.f32.gmra.mrb[0].mxu0 %v774
  %v1803 = vpop.f32.mrb[0].mxu0
  %v1804 = vadd.f32 0.0, %v1803
  %v1805 = vpop.f32.mrb[0].mxu0
  %1806 = vmatprep.mubr.f32.mxu0 0.0
  %1807 = vmatmul.mubr.f32.gmra.mrb[0].mxu0 %v777
  %v1808 = vpop.f32.mrb[0].mxu0
  %v1809 = vadd.f32 0.0, %v1808
  %v1810 = vpop.f32.mrb[0].mxu0
  %1811 = vmatprep.mubr.f32.mxu0 0.0
  %1812 = vmatmul.mubr.f32.gmra.mrb[0].mxu0 %v780
  %v1813 = vpop.f32.mrb[0].mxu0
  %v1814 = vadd.f32 0.0, %v1813
  %v1815 = vpop.f32.mrb[0].mxu0
  %1816 = vmatprep.mubr.f32.mxu0 0.0
  %1817 = vmatmul.mubr.f32.gmra.mrb[0].mxu0 %v783
  %v1818 = vpop.f32.mrb[0].mxu0
  %v1819 = vadd.f32 0.0, %v1818
  %v1820 = vpop.f32.mrb[0].mxu0
  %1821 = vmatprep.mubr.f32.mxu0 0.0
  %1822 = vmatmul.mubr.f32.gmra.mrb[0].mxu0 %v786
  %v1823 = vpop.f32.mrb[0].mxu0
  %v1824 = vadd.f32 0.0, %v1823
  %v1825 = vpop.f32.mrb[0].mxu0
  %1826 = vmatprep.mubr.f32.mxu0 0.0
  %1827 = vmatmul.mubr.f32.gmra.mrb[0].mxu0 %v789
  %v1828 = vpop.f32.mrb[0].mxu0
  %v1829 = vadd.f32 0.0, %v1828
  %v1830 = vpop.f32.mrb[0].mxu0
  %1831 = vmatprep.mubr.f32.mxu0 0.0
  %1832 = vmatmul.mubr.f32.gmra.mrb[0].mxu0 %v792
  %v1833 = vpop.f32.mrb[0].mxu0
  %v1834 = vadd.f32 0.0, %v1833
  %v1835 = vpop.f32.mrb[0].mxu0
  %1836 = vmatprep.mubr.f32.mxu0 0.0
  %1837 = vmatmul.mubr.f32.gmra.mrb[0].mxu0 %v795
  %v1838 = vpop.f32.mrb[0].mxu0
  %v1839 = vadd.f32 0.0, %v1838
  %v1840 = vpop.f32.mrb[0].mxu0
  %1841 = vmatprep.mubr.f32.mxu0 0.0
  %1842 = vmatmul.mubr.f32.gmra.mrb[0].mxu0 %v798
  %v1843 = vpop.f32.mrb[0].mxu0
  %v1844 = vadd.f32 0.0, %v1843
  %v1845 = vpop.f32.mrb[0].mxu0
  %1846 = vmatprep.mubr.f32.mxu0 0.0
  %1847 = vmatmul.mubr.f32.gmra.mrb[0].mxu0 %v801
  %v1848 = vpop.f32.mrb[0].mxu0
  %v1849 = vadd.f32 0.0, %v1848
  %v1850 = vpop.f32.mrb[0].mxu0
  %1851 = vdwg.mxu0
  %v1852 = vmax.f32 %v874, %v1119
  %v1853 = vmax.f32 %v879, %v1124
  %v1854 = vmax.f32 %v884, %v1129
  %v1855 = vmax.f32 %v889, %v1134
  %v1856 = vmax.f32 %v894, %v1139
  %v1857 = vmax.f32 %v899, %v1144
  %v1858 = vmax.f32 %v904, %v1149
  %v1859 = vmax.f32 %v909, %v1154
  %v1860 = vmax.f32 %v914, %v1159
  %v1861 = vmax.f32 %v919, %v1164
  %v1862 = vmax.f32 %v924, %v1169
  %v1863 = vmax.f32 %v929, %v1174
  %v1864 = vmax.f32 %v934, %v1179
  %v1865 = vmax.f32 %v939, %v1184
  %v1866 = vmax.f32 %v944, %v1189
  %v1867 = vmax.f32 %v949, %v1194
  %v1868 = vmax.f32 %v954, %v1199
  %v1869 = vmax.f32 %v959, %v1204
  %v1870 = vmax.f32 %v964, %v1209
  %v1871 = vmax.f32 %v969, %v1214
  %v1872 = vmax.f32 %v974, %v1219
  %v1873 = vmax.f32 %v979, %v1224
  %v1874 = vmax.f32 %v984, %v1229
  %v1875 = vmax.f32 %v989, %v1234
  %v1876 = vmax.f32 %v994, %v1239
  %v1877 = vmax.f32 %v999, %v1244
  %v1878 = vmax.f32 %v1004, %v1249
  %v1879 = vmax.f32 %v1009, %v1254
  %v1880 = vmax.f32 %v1014, %v1259
  %v1881 = vmax.f32 %v1019, %v1264
  %v1882 = vmax.f32 %v1024, %v1269
  %v1883 = vmax.f32 %v1029, %v1274
  %v1884 = vmax.f32 %v1034, %v1279
  %v1885 = vmax.f32 %v1039, %v1284
  %v1886 = vmax.f32 %v1044, %v1289
  %v1887 = vmax.f32 %v1049, %v1294
  %v1888 = vmax.f32 %v1054, %v1299
  %v1889 = vmax.f32 %v1059, %v1304
  %v1890 = vmax.f32 %v1064, %v1309
  %v1891 = vmax.f32 %v1069, %v1314
  %v1892 = vmax.f32 %v1074, %v1319
  %v1893 = vmax.f32 %v1079, %v1324
  %v1894 = vmax.f32 %v1084, %v1329
  %v1895 = vmax.f32 %v1089, %v1334
  %v1896 = vmax.f32 %v1094, %v1339
  %v1897 = vmax.f32 %v1099, %v1344
  %v1898 = vmax.f32 %v1104, %v1349
  %v1899 = vmax.f32 %v1109, %v1354
  %v1900 = vmax.f32 %v1114, %v1359
  %v1901 = vmax.f32 %v1364, %v1609
  %v1902 = vmax.f32 %v1369, %v1614
  %v1903 = vmax.f32 %v1374, %v1619
  %v1904 = vmax.f32 %v1379, %v1624
  %v1905 = vmax.f32 %v1384, %v1629
  %v1906 = vmax.f32 %v1389, %v1634
  %v1907 = vmax.f32 %v1394, %v1639
  %v1908 = vmax.f32 %v1399, %v1644
  %v1909 = vmax.f32 %v1404, %v1649
  %v1910 = vmax.f32 %v1409, %v1654
  %v1911 = vmax.f32 %v1414, %v1659
  %v1912 = vmax.f32 %v1419, %v1664
  %v1913 = vmax.f32 %v1424, %v1669
  %v1914 = vmax.f32 %v1429, %v1674
  %v1915 = vmax.f32 %v1434, %v1679
  %v1916 = vmax.f32 %v1439, %v1684
  %v1917 = vmax.f32 %v1444, %v1689
  %v1918 = vmax.f32 %v1449, %v1694
  %v1919 = vmax.f32 %v1454, %v1699
  %v1920 = vmax.f32 %v1459, %v1704
  %v1921 = vmax.f32 %v1464, %v1709
  %v1922 = vmax.f32 %v1469, %v1714
  %v1923 = vmax.f32 %v1474, %v1719
  %v1924 = vmax.f32 %v1479, %v1724
  %v1925 = vmax.f32 %v1484, %v1729
  %v1926 = vmax.f32 %v1489, %v1734
  %v1927 = vmax.f32 %v1494, %v1739
  %v1928 = vmax.f32 %v1499, %v1744
  %v1929 = vmax.f32 %v1504, %v1749
  %v1930 = vmax.f32 %v1509, %v1754
  %v1931 = vmax.f32 %v1514, %v1759
  %v1932 = vmax.f32 %v1519, %v1764
  %v1933 = vmax.f32 %v1524, %v1769
  %v1934 = vmax.f32 %v1529, %v1774
  %v1935 = vmax.f32 %v1534, %v1779
  %v1936 = vmax.f32 %v1539, %v1784
  %v1937 = vmax.f32 %v1544, %v1789
  %v1938 = vmax.f32 %v1549, %v1794
  %v1939 = vmax.f32 %v1554, %v1799
  %v1940 = vmax.f32 %v1559, %v1804
  %v1941 = vmax.f32 %v1564, %v1809
  %v1942 = vmax.f32 %v1569, %v1814
  %v1943 = vmax.f32 %v1574, %v1819
  %v1944 = vmax.f32 %v1579, %v1824
  %v1945 = vmax.f32 %v1584, %v1829
  %v1946 = vmax.f32 %v1589, %v1834
  %v1947 = vmax.f32 %v1594, %v1839
  %v1948 = vmax.f32 %v1599, %v1844
  %v1949 = vmax.f32 %v1604, %v1849
  %v1950 = vmax.f32 %v1852, %v1901
  %v1951 = vmax.f32 %v1853, %v1902
  %v1952 = vmax.f32 %v1854, %v1903
  %v1953 = vmax.f32 %v1855, %v1904
  %v1954 = vmax.f32 %v1856, %v1905
  %v1955 = vmax.f32 %v1857, %v1906
  %v1956 = vmax.f32 %v1858, %v1907
  %v1957 = vmax.f32 %v1859, %v1908
  %v1958 = vmax.f32 %v1860, %v1909
  %v1959 = vmax.f32 %v1861, %v1910
  %v1960 = vmax.f32 %v1862, %v1911
  %v1961 = vmax.f32 %v1863, %v1912
  %v1962 = vmax.f32 %v1864, %v1913
  %v1963 = vmax.f32 %v1865, %v1914
  %v1964 = vmax.f32 %v1866, %v1915
  %v1965 = vmax.f32 %v1867, %v1916
  %v1966 = vmax.f32 %v1868, %v1917
  %v1967 = vmax.f32 %v1869, %v1918
  %v1968 = vmax.f32 %v1870, %v1919
  %v1969 = vmax.f32 %v1871, %v1920
  %v1970 = vmax.f32 %v1872, %v1921
  %v1971 = vmax.f32 %v1873, %v1922
  %v1972 = vmax.f32 %v1874, %v1923
  %v1973 = vmax.f32 %v1875, %v1924
  %v1974 = vmax.f32 %v1876, %v1925
  %v1975 = vmax.f32 %v1877, %v1926
  %v1976 = vmax.f32 %v1878, %v1927
  %v1977 = vmax.f32 %v1879, %v1928
  %v1978 = vmax.f32 %v1880, %v1929
  %v1979 = vmax.f32 %v1881, %v1930
  %v1980 = vmax.f32 %v1882, %v1931
  %v1981 = vmax.f32 %v1883, %v1932
  %v1982 = vmax.f32 %v1884, %v1933
  %v1983 = vmax.f32 %v1885, %v1934
  %v1984 = vmax.f32 %v1886, %v1935
  %v1985 = vmax.f32 %v1887, %v1936
  %v1986 = vmax.f32 %v1888, %v1937
  %v1987 = vmax.f32 %v1889, %v1938
  %v1988 = vmax.f32 %v1890, %v1939
  %v1989 = vmax.f32 %v1891, %v1940
  %v1990 = vmax.f32 %v1892, %v1941
  %v1991 = vmax.f32 %v1893, %v1942
  %v1992 = vmax.f32 %v1894, %v1943
  %v1993 = vmax.f32 %v1895, %v1944
  %v1994 = vmax.f32 %v1896, %v1945
  %v1995 = vmax.f32 %v1897, %v1946
  %v1996 = vmax.f32 %v1898, %v1947
  %v1997 = vmax.f32 %v1899, %v1948
  %v1998 = vmax.f32 %v1900, %v1949
  %v1999 = vld [vmem:[%s2] sm:$0x1]
  %v2001 = vlaneseq
  %v2002 = vshrl.u32 %v2001, 7
  %v2003 = vsub.s32 0, %v2002
  %v2004 = vrot.slane %v1999, %v2003
  %v2006 = vadd.f32 %v1950, %v2004
  %v2007 = vadd.f32 %v1951, %v2004
  %v2008 = vadd.f32 %v1952, %v2004
  %v2009 = vadd.f32 %v1953, %v2004
  %v2010 = vadd.f32 %v1954, %v2004
  %v2011 = vadd.f32 %v1955, %v2004
  %v2012 = vadd.f32 %v1956, %v2004
  %v2013 = vadd.f32 %v1957, %v2004
  %v2014 = vadd.f32 %v1958, %v2004
  %v2015 = vadd.f32 %v1959, %v2004
  %v2016 = vadd.f32 %v1960, %v2004
  %v2017 = vadd.f32 %v1961, %v2004
  %v2018 = vadd.f32 %v1962, %v2004
  %v2019 = vadd.f32 %v1963, %v2004
  %v2020 = vadd.f32 %v1964, %v2004
  %v2021 = vadd.f32 %v1965, %v2004
  %v2022 = vadd.f32 %v1966, %v2004
  %v2023 = vadd.f32 %v1967, %v2004
  %v2024 = vadd.f32 %v1968, %v2004
  %v2025 = vadd.f32 %v1969, %v2004
  %v2026 = vadd.f32 %v1970, %v2004
  %v2027 = vadd.f32 %v1971, %v2004
  %v2028 = vadd.f32 %v1972, %v2004
  %v2029 = vadd.f32 %v1973, %v2004
  %v2030 = vadd.f32 %v1974, %v2004
  %v2031 = vadd.f32 %v1975, %v2004
  %v2032 = vadd.f32 %v1976, %v2004
  %v2033 = vadd.f32 %v1977, %v2004
  %v2034 = vadd.f32 %v1978, %v2004
  %v2035 = vadd.f32 %v1979, %v2004
  %v2036 = vadd.f32 %v1980, %v2004
  %v2037 = vadd.f32 %v1981, %v2004
  %v2038 = vadd.f32 %v1982, %v2004
  %v2039 = vadd.f32 %v1983, %v2004
  %v2040 = vadd.f32 %v1984, %v2004
  %v2041 = vadd.f32 %v1985, %v2004
  %v2042 = vadd.f32 %v1986, %v2004
  %v2043 = vadd.f32 %v1987, %v2004
  %v2044 = vadd.f32 %v1988, %v2004
  %v2045 = vadd.f32 %v1989, %v2004
  %v2046 = vadd.f32 %v1990, %v2004
  %v2047 = vadd.f32 %v1991, %v2004
  %v2048 = vadd.f32 %v1992, %v2004
  %v2049 = vadd.f32 %v1993, %v2004
  %v2050 = vadd.f32 %v1994, %v2004
  %v2051 = vadd.f32 %v1995, %v2004
  %v2052 = vadd.f32 %v1996, %v2004
  %v2053 = vadd.f32 %v1997, %v2004
  %v2054 = vadd.f32 %v1998, %v2004
  %v2055 = vmax.f32 %v2006, 0.0
  %v2056 = vmax.f32 %v2007, 0.0
  %v2057 = vmax.f32 %v2008, 0.0
  %v2058 = vmax.f32 %v2009, 0.0
  %v2059 = vmax.f32 %v2010, 0.0
  %v2060 = vmax.f32 %v2011, 0.0
  %v2061 = vmax.f32 %v2012, 0.0
  %v2062 = vmax.f32 %v2013, 0.0
  %v2063 = vmax.f32 %v2014, 0.0
  %v2064 = vmax.f32 %v2015, 0.0
  %v2065 = vmax.f32 %v2016, 0.0
  %v2066 = vmax.f32 %v2017, 0.0
  %v2067 = vmax.f32 %v2018, 0.0
  %v2068 = vmax.f32 %v2019, 0.0
  %v2069 = vmax.f32 %v2020, 0.0
  %v2070 = vmax.f32 %v2021, 0.0
  %v2071 = vmax.f32 %v2022, 0.0
  %v2072 = vmax.f32 %v2023, 0.0
  %v2073 = vmax.f32 %v2024, 0.0
  %v2074 = vmax.f32 %v2025, 0.0
  %v2075 = vmax.f32 %v2026, 0.0
  %v2076 = vmax.f32 %v2027, 0.0
  %v2077 = vmax.f32 %v2028, 0.0
  %v2078 = vmax.f32 %v2029, 0.0
  %v2079 = vmax.f32 %v2030, 0.0
  %v2080 = vmax.f32 %v2031, 0.0
  %v2081 = vmax.f32 %v2032, 0.0
  %v2082 = vmax.f32 %v2033, 0.0
  %v2083 = vmax.f32 %v2034, 0.0
  %v2084 = vmax.f32 %v2035, 0.0
  %v2085 = vmax.f32 %v2036, 0.0
  %v2086 = vmax.f32 %v2037, 0.0
  %v2087 = vmax.f32 %v2038, 0.0
  %v2088 = vmax.f32 %v2039, 0.0
  %v2089 = vmax.f32 %v2040, 0.0
  %v2090 = vmax.f32 %v2041, 0.0
  %v2091 = vmax.f32 %v2042, 0.0
  %v2092 = vmax.f32 %v2043, 0.0
  %v2093 = vmax.f32 %v2044, 0.0
  %v2094 = vmax.f32 %v2045, 0.0
  %v2095 = vmax.f32 %v2046, 0.0
  %v2096 = vmax.f32 %v2047, 0.0
  %v2097 = vmax.f32 %v2048, 0.0
  %v2098 = vmax.f32 %v2049, 0.0
  %v2099 = vmax.f32 %v2050, 0.0
  %v2100 = vmax.f32 %v2051, 0.0
  %v2101 = vmax.f32 %v2052, 0.0
  %v2102 = vmax.f32 %v2053, 0.0
  %v2103 = vmax.f32 %v2054, 0.0
  %vm2104 = vcmask 48128
  %2105 = vst.msk [vmem:[%s3] sm:$0xff] %vm2104, %v2055
  %2106 = vst.msk [vmem:[%s3 + $0x8] sm:$0xff] %vm2104, %v2056
  %2107 = vst.msk [vmem:[%s3 + $0x10] sm:$0xff] %vm2104, %v2057
  %2108 = vst.msk [vmem:[%s3 + $0x18] sm:$0xff] %vm2104, %v2058
  %2109 = vst.msk [vmem:[%s3 + $0x20] sm:$0xff] %vm2104, %v2059
  %2110 = vst.msk [vmem:[%s3 + $0x28] sm:$0xff] %vm2104, %v2060
  %2111 = vst.msk [vmem:[%s3 + $0x30] sm:$0xff] %vm2104, %v2061
  %2112 = vst.msk [vmem:[%s3 + $0x38] sm:$0xff] %vm2104, %v2062
  %2113 = vst.msk [vmem:[%s3 + $0x40] sm:$0xff] %vm2104, %v2063
  %2114 = vst.msk [vmem:[%s3 + $0x48] sm:$0xff] %vm2104, %v2064
  %2115 = vst.msk [vmem:[%s3 + $0x50] sm:$0xff] %vm2104, %v2065
  %2116 = vst.msk [vmem:[%s3 + $0x58] sm:$0xff] %vm2104, %v2066
  %2117 = vst.msk [vmem:[%s3 + $0x60] sm:$0xff] %vm2104, %v2067
  %2118 = vst.msk [vmem:[%s3 + $0x68] sm:$0xff] %vm2104, %v2068
  %2119 = vst.msk [vmem:[%s3 + $0x70] sm:$0xff] %vm2104, %v2069
  %2120 = vst.msk [vmem:[%s3 + $0x78] sm:$0xff] %vm2104, %v2070
  %2121 = vst.msk [vmem:[%s3 + $0x80] sm:$0xff] %vm2104, %v2071
  %2122 = vst.msk [vmem:[%s3 + $0x88] sm:$0xff] %vm2104, %v2072
  %2123 = vst.msk [vmem:[%s3 + $0x90] sm:$0xff] %vm2104, %v2073
  %2124 = vst.msk [vmem:[%s3 + $0x98] sm:$0xff] %vm2104, %v2074
  %2125 = vst.msk [vmem:[%s3 + $0xa0] sm:$0xff] %vm2104, %v2075
  %2126 = vst.msk [vmem:[%s3 + $0xa8] sm:$0xff] %vm2104, %v2076
  %2127 = vst.msk [vmem:[%s3 + $0xb0] sm:$0xff] %vm2104, %v2077
  %2128 = vst.msk [vmem:[%s3 + $0xb8] sm:$0xff] %vm2104, %v2078
  %2129 = vst.msk [vmem:[%s3 + $0xc0] sm:$0xff] %vm2104, %v2079
  %2130 = vst.msk [vmem:[%s3 + $0xc8] sm:$0xff] %vm2104, %v2080
  %2131 = vst.msk [vmem:[%s3 + $0xd0] sm:$0xff] %vm2104, %v2081
  %2132 = vst.msk [vmem:[%s3 + $0xd8] sm:$0xff] %vm2104, %v2082
  %2133 = vst.msk [vmem:[%s3 + $0xe0] sm:$0xff] %vm2104, %v2083
  %2134 = vst.msk [vmem:[%s3 + $0xe8] sm:$0xff] %vm2104, %v2084
  %2135 = vst.msk [vmem:[%s3 + $0xf0] sm:$0xff] %vm2104, %v2085
  %2136 = vst.msk [vmem:[%s3 + $0xf8] sm:$0xff] %vm2104, %v2086
  %2137 = vst.msk [vmem:[%s3 + $0x100] sm:$0xff] %vm2104, %v2087
  %2138 = vst.msk [vmem:[%s3 + $0x108] sm:$0xff] %vm2104, %v2088
  %2139 = vst.msk [vmem:[%s3 + $0x110] sm:$0xff] %vm2104, %v2089
  %2140 = vst.msk [vmem:[%s3 + $0x118] sm:$0xff] %vm2104, %v2090
  %2141 = vst.msk [vmem:[%s3 + $0x120] sm:$0xff] %vm2104, %v2091
  %2142 = vst.msk [vmem:[%s3 + $0x128] sm:$0xff] %vm2104, %v2092
  %2143 = vst.msk [vmem:[%s3 + $0x130] sm:$0xff] %vm2104, %v2093
  %2144 = vst.msk [vmem:[%s3 + $0x138] sm:$0xff] %vm2104, %v2094
  %2145 = vst.msk [vmem:[%s3 + $0x140] sm:$0xff] %vm2104, %v2095
  %2146 = vst.msk [vmem:[%s3 + $0x148] sm:$0xff] %vm2104, %v2096
  %2147 = vst.msk [vmem:[%s3 + $0x150] sm:$0xff] %vm2104, %v2097
  %2148 = vst.msk [vmem:[%s3 + $0x158] sm:$0xff] %vm2104, %v2098
  %2149 = vst.msk [vmem:[%s3 + $0x160] sm:$0xff] %vm2104, %v2099
  %2150 = vst.msk [vmem:[%s3 + $0x168] sm:$0xff] %vm2104, %v2100
  %2151 = vst.msk [vmem:[%s3 + $0x170] sm:$0xff] %vm2104, %v2101
  %2152 = vst.msk [vmem:[%s3 + $0x178] sm:$0xff] %vm2104, %v2102
  %2153 = vst.msk [vmem:[%s3 + $0x180] sm:$0xff] %vm2104, %v2103
  // Predicated region
  $region14: #{net_forward.2} parent=0 // pred_check
    _
  $region15: #{net_forward.2} parent=0 // pred_check_branch
    %2155 = sbr.rel (0) target = $region17
  $region16: #{net_forward.2} parent=0 // pred_region
    _
  $region17: #{net_forward.2} parent=0 // pred_fallthru
    _
  // Predicated region
  $region18: #{net_forward.2} parent=0 // pred_check
    _
  $region19: #{net_forward.2} parent=0 // pred_check_branch
    %2157 = sbr.rel (0) target = $region21
  $region20: #{net_forward.2} parent=0 // pred_region
    _
  $region21: #{net_forward.2} parent=0 // pred_fallthru
    _

// kernel: net_forward.3
$region0: #{net_forward.3}
  #allocation0 [shape = 'u32[]', space=smem, size = 0x4, offset = 0x4, fixed_abs, tag = 'smem constant byte address 0x4 - core index']
  #allocation1 [shape = 'u32[144,128]{1,0:T(1,128)}', space=vmem, size = 0x12000, scoped, tag = 'internal scratch']
  %s0 = inlined_call_operand.vmem [shape: f32[800,150], index: 0, kind: input, shape index: {}]
  %s1 = inlined_call_operand.vmem [shape: f32[150,16], index: 1, kind: input, shape index: {}]
  %s2 = inlined_call_operand.vmem [shape: f32[1,16], index: 2, kind: input, shape index: {}]
  %s3 = inlined_call_operand.vmem [shape: f32[25,16,120], index: 3, kind: input, shape index: {}]
  %s4 = inlined_call_operand.vmem [shape: f32[1,120], index: 4, kind: input, shape index: {}]
  %s5 = inlined_call_operand.vmem [shape: f32[120,84], index: 5, kind: input, shape index: {}]
  %s6 = inlined_call_operand.vmem [shape: f32[1,84], index: 6, kind: input, shape index: {}]
  %s7 = inlined_call_operand.vmem [shape: f32[84,10], index: 7, kind: input, shape index: {}]
  %s8 = inlined_call_operand.vmem [shape: f32[1,10], index: 8, kind: input, shape index: {}]
  %s9 = inlined_call_operand.vmem [shape: f32[8,10], index: 9, kind: output, shape index: {}]
  %s10 = sld [smem:[#allocation0]]
  $region46: #{net_forward.3} parent=0
    _
  %s12 = ssub.s32 1, %s10
  %s13 = scalar_select 0, %s12, %s10
  // Predicated region
  $region2: #{net_forward.3} parent=0 // pred_check
    _
  $region3: #{net_forward.3} parent=0 // pred_check_branch
    %15 = sbr.rel (0) target = $region5
  $region4: #{net_forward.3} parent=0 // pred_region
    _
  $region5: #{net_forward.3} parent=0 // pred_fallthru
    _
  // Predicated region
  $region6: #{net_forward.3} parent=0 // pred_check
    _
  $region7: #{net_forward.3} parent=0 // pred_check_branch
    %17 = sbr.rel (0) target = $region9
  $region8: #{net_forward.3} parent=0 // pred_region
    _
  $region9: #{net_forward.3} parent=0 // pred_fallthru
    _
  // Predicated region
  $region10: #{net_forward.3} parent=0 // pred_check
    _
  $region11: #{net_forward.3} parent=0 // pred_check_branch
    %19 = sbr.rel (0) target = $region13
  $region12: #{net_forward.3} parent=0 // pred_region
    _
  $region13: #{net_forward.3} parent=0 // pred_fallthru
    _
  // Predicated region
  $region14: #{net_forward.3} parent=0 // pred_check
    _
  $region15: #{net_forward.3} parent=0 // pred_check_branch
    %21 = sbr.rel (0) target = $region17
  $region16: #{net_forward.3} parent=0 // pred_region
    _
  $region17: #{net_forward.3} parent=0 // pred_fallthru
    _
  // Predicated region
  $region18: #{net_forward.3} parent=0 // pred_check
    _
  $region19: #{net_forward.3} parent=0 // pred_check_branch
    %23 = sbr.rel (0) target = $region21
  $region20: #{net_forward.3} parent=0 // pred_region
    _
  $region21: #{net_forward.3} parent=0 // pred_fallthru
    _
  // Predicated region
  $region22: #{net_forward.3} parent=0 // pred_check
    _
  $region23: #{net_forward.3} parent=0 // pred_check_branch
    %25 = sbr.rel (0) target = $region25
  $region24: #{net_forward.3} parent=0 // pred_region
    _
  $region25: #{net_forward.3} parent=0 // pred_fallthru
    _
  // Predicated region
  $region26: #{net_forward.3} parent=0 // pred_check
    _
  $region27: #{net_forward.3} parent=0 // pred_check_branch
    %27 = sbr.rel (0) target = $region29
  $region28: #{net_forward.3} parent=0 // pred_region
    _
  $region29: #{net_forward.3} parent=0 // pred_fallthru
    _
  // Predicated region
  $region30: #{net_forward.3} parent=0 // pred_check
    _
  $region31: #{net_forward.3} parent=0 // pred_check_branch
    %29 = sbr.rel (0) target = $region33
  $region32: #{net_forward.3} parent=0 // pred_region
    _
  $region33: #{net_forward.3} parent=0 // pred_fallthru
    _
  // Predicated region
  $region34: #{net_forward.3} parent=0 // pred_check
    _
  $region35: #{net_forward.3} parent=0 // pred_check_branch
    %31 = sbr.rel (0) target = $region37
  $region36: #{net_forward.3} parent=0 // pred_region
    _
  $region37: #{net_forward.3} parent=0 // pred_fallthru
    _
  %v32 = vld [vmem:[%s0] sm:$0xff]
  %v33 = vld [vmem:[%s0 + $0x8] sm:$0xff]
  %v34 = vld [vmem:[%s0 + $0x10] sm:$0xff]
  %v35 = vld [vmem:[%s0 + $0x18] sm:$0xff]
  %v36 = vld [vmem:[%s0 + $0x20] sm:$0xff]
  %v37 = vld [vmem:[%s0 + $0x28] sm:$0xff]
  %v38 = vld [vmem:[%s0 + $0x30] sm:$0xff]
  %v39 = vld [vmem:[%s0 + $0x38] sm:$0xff]
  %v40 = vld [vmem:[%s0 + $0x40] sm:$0xff]
  %v41 = vld [vmem:[%s0 + $0x48] sm:$0xff]
  %v42 = vld [vmem:[%s0 + $0x50] sm:$0xff]
  %v43 = vld [vmem:[%s0 + $0x58] sm:$0xff]
  %v44 = vld [vmem:[%s0 + $0x60] sm:$0xff]
  %v45 = vld [vmem:[%s0 + $0x68] sm:$0xff]
  %v46 = vld [vmem:[%s0 + $0x70] sm:$0xff]
  %v47 = vld [vmem:[%s0 + $0x78] sm:$0xff]
  %v48 = vld [vmem:[%s0 + $0x80] sm:$0xff]
  %v49 = vld [vmem:[%s0 + $0x88] sm:$0xff]
  %v50 = vld [vmem:[%s0 + $0x90] sm:$0xff]
  %v51 = vld [vmem:[%s0 + $0x98] sm:$0xff]
  %v52 = vld [vmem:[%s0 + $0xa0] sm:$0xff]
  %v53 = vld [vmem:[%s0 + $0xa8] sm:$0xff]
  %v54 = vld [vmem:[%s0 + $0xb0] sm:$0xff]
  %v55 = vld [vmem:[%s0 + $0xb8] sm:$0xff]
  %v56 = vld [vmem:[%s0 + $0xc0] sm:$0xff]
  %v57 = vld [vmem:[%s0 + $0xc8] sm:$0xff]
  %v58 = vld [vmem:[%s0 + $0xd0] sm:$0xff]
  %v59 = vld [vmem:[%s0 + $0xd8] sm:$0xff]
  %v60 = vld [vmem:[%s0 + $0xe0] sm:$0xff]
  %v61 = vld [vmem:[%s0 + $0xe8] sm:$0xff]
  %v62 = vld [vmem:[%s0 + $0xf0] sm:$0xff]
  %v63 = vld [vmem:[%s0 + $0xf8] sm:$0xff]
  %v64 = vld [vmem:[%s0 + $0x100] sm:$0xff]
  %v65 = vld [vmem:[%s0 + $0x108] sm:$0xff]
  %v66 = vld [vmem:[%s0 + $0x110] sm:$0xff]
  %v67 = vld [vmem:[%s0 + $0x118] sm:$0xff]
  %v68 = vld [vmem:[%s0 + $0x120] sm:$0xff]
  %v69 = vld [vmem:[%s0 + $0x128] sm:$0xff]
  %v70 = vld [vmem:[%s0 + $0x130] sm:$0xff]
  %v71 = vld [vmem:[%s0 + $0x138] sm:$0xff]
  %v72 = vld [vmem:[%s0 + $0x140] sm:$0xff]
  %v73 = vld [vmem:[%s0 + $0x148] sm:$0xff]
  %v74 = vld [vmem:[%s0 + $0x150] sm:$0xff]
  %v75 = vld [vmem:[%s0 + $0x158] sm:$0xff]
  %v76 = vld [vmem:[%s0 + $0x160] sm:$0xff]
  %v77 = vld [vmem:[%s0 + $0x168] sm:$0xff]
  %v78 = vld [vmem:[%s0 + $0x170] sm:$0xff]
  %v79 = vld [vmem:[%s0 + $0x178] sm:$0xff]
  %v80 = vld [vmem:[%s0 + $0x180] sm:$0xff]
  %v81 = vld [vmem:[%s0 + $0x188] sm:$0xff]
  %v82 = vld [vmem:[%s0 + $0x190] sm:$0xff]
  %v83 = vld [vmem:[%s0 + $0x198] sm:$0xff]
  %v84 = vld [vmem:[%s0 + $0x1a0] sm:$0xff]
  %v85 = vld [vmem:[%s0 + $0x1a8] sm:$0xff]
  %v86 = vld [vmem:[%s0 + $0x1b0] sm:$0xff]
  %v87 = vld [vmem:[%s0 + $0x1b8] sm:$0xff]
  %v88 = vld [vmem:[%s0 + $0x1c0] sm:$0xff]
  %v89 = vld [vmem:[%s0 + $0x1c8] sm:$0xff]
  %v90 = vld [vmem:[%s0 + $0x1d0] sm:$0xff]
  %v91 = vld [vmem:[%s0 + $0x1d8] sm:$0xff]
  %v92 = vld [vmem:[%s0 + $0x1e0] sm:$0xff]
  %v93 = vld [vmem:[%s0 + $0x1e8] sm:$0xff]
  %v94 = vld [vmem:[%s0 + $0x1f0] sm:$0xff]
  %v95 = vld [vmem:[%s0 + $0x1f8] sm:$0xff]
  %v96 = vld [vmem:[%s0 + $0x200] sm:$0xff]
  %v97 = vld [vmem:[%s0 + $0x208] sm:$0xff]
  %v98 = vld [vmem:[%s0 + $0x210] sm:$0xff]
  %v99 = vld [vmem:[%s0 + $0x218] sm:$0xff]
  %v100 = vld [vmem:[%s0 + $0x220] sm:$0xff]
  %v101 = vld [vmem:[%s0 + $0x228] sm:$0xff]
  %v102 = vld [vmem:[%s0 + $0x230] sm:$0xff]
  %v103 = vld [vmem:[%s0 + $0x238] sm:$0xff]
  %v104 = vld [vmem:[%s0 + $0x240] sm:$0xff]
  %v105 = vld [vmem:[%s0 + $0x248] sm:$0xff]
  %v106 = vld [vmem:[%s0 + $0x250] sm:$0xff]
  %v107 = vld [vmem:[%s0 + $0x258] sm:$0xff]
  %v108 = vld [vmem:[%s0 + $0x260] sm:$0xff]
  %v109 = vld [vmem:[%s0 + $0x268] sm:$0xff]
  %v110 = vld [vmem:[%s0 + $0x270] sm:$0xff]
  %v111 = vld [vmem:[%s0 + $0x278] sm:$0xff]
  %v112 = vld [vmem:[%s0 + $0x280] sm:$0xff]
  %v113 = vld [vmem:[%s0 + $0x288] sm:$0xff]
  %v114 = vld [vmem:[%s0 + $0x290] sm:$0xff]
  %v115 = vld [vmem:[%s0 + $0x298] sm:$0xff]
  %v116 = vld [vmem:[%s0 + $0x2a0] sm:$0xff]
  %v117 = vld [vmem:[%s0 + $0x2a8] sm:$0xff]
  %v118 = vld [vmem:[%s0 + $0x2b0] sm:$0xff]
  %v119 = vld [vmem:[%s0 + $0x2b8] sm:$0xff]
  %v120 = vld [vmem:[%s0 + $0x2c0] sm:$0xff]
  %v121 = vld [vmem:[%s0 + $0x2c8] sm:$0xff]
  %v122 = vld [vmem:[%s0 + $0x2d0] sm:$0xff]
  %v123 = vld [vmem:[%s0 + $0x2d8] sm:$0xff]
  %v124 = vld [vmem:[%s0 + $0x2e0] sm:$0xff]
  %v125 = vld [vmem:[%s0 + $0x2e8] sm:$0xff]
  %v126 = vld [vmem:[%s0 + $0x2f0] sm:$0xff]
  %v127 = vld [vmem:[%s0 + $0x2f8] sm:$0xff]
  %v128 = vld [vmem:[%s0 + $0x300] sm:$0xff]
  %v129 = vld [vmem:[%s0 + $0x308] sm:$0xff]
  %v130 = vld [vmem:[%s0 + $0x310] sm:$0xff]
  %v131 = vld [vmem:[%s0 + $0x318] sm:$0xff]
  %v132 = vld [vmem:[%s0 + $0x320] sm:$0xff]
  %v133 = vld [vmem:[%s0 + $0x328] sm:$0xff]
  %v134 = vld [vmem:[%s0 + $0x330] sm:$0xff]
  %v135 = vld [vmem:[%s0 + $0x338] sm:$0xff]
  %v136 = vld [vmem:[%s0 + $0x340] sm:$0xff]
  %v137 = vld [vmem:[%s0 + $0x348] sm:$0xff]
  %v138 = vld [vmem:[%s0 + $0x350] sm:$0xff]
  %v139 = vld [vmem:[%s0 + $0x358] sm:$0xff]
  %v140 = vld [vmem:[%s0 + $0x360] sm:$0xff]
  %v141 = vld [vmem:[%s0 + $0x368] sm:$0xff]
  %v142 = vld [vmem:[%s0 + $0x370] sm:$0xff]
  %v143 = vld [vmem:[%s0 + $0x378] sm:$0xff]
  %v144 = vld [vmem:[%s0 + $0x380] sm:$0xff]
  %v145 = vld [vmem:[%s0 + $0x388] sm:$0xff]
  %v146 = vld [vmem:[%s0 + $0x390] sm:$0xff]
  %v147 = vld [vmem:[%s0 + $0x398] sm:$0xff]
  %v148 = vld [vmem:[%s0 + $0x3a0] sm:$0xff]
  %v149 = vld [vmem:[%s0 + $0x3a8] sm:$0xff]
  %v150 = vld [vmem:[%s0 + $0x3b0] sm:$0xff]
  %v151 = vld [vmem:[%s0 + $0x3b8] sm:$0xff]
  %v152 = vld [vmem:[%s0 + $0x3c0] sm:$0xff]
  %v153 = vld [vmem:[%s0 + $0x3c8] sm:$0xff]
  %v154 = vld [vmem:[%s0 + $0x3d0] sm:$0xff]
  %v155 = vld [vmem:[%s0 + $0x3d8] sm:$0xff]
  %v156 = vld [vmem:[%s0 + $0x3e0] sm:$0xff]
  %v157 = vld [vmem:[%s0 + $0x3e8] sm:$0xff]
  %v158 = vld [vmem:[%s0 + $0x3f0] sm:$0xff]
  %v159 = vld [vmem:[%s0 + $0x3f8] sm:$0xff]
  %v160 = vld [vmem:[%s0 + $0x400] sm:$0xff]
  %v161 = vld [vmem:[%s0 + $0x408] sm:$0xff]
  %v162 = vld [vmem:[%s0 + $0x410] sm:$0xff]
  %v163 = vld [vmem:[%s0 + $0x418] sm:$0xff]
  %v164 = vld [vmem:[%s0 + $0x420] sm:$0xff]
  %v165 = vld [vmem:[%s0 + $0x428] sm:$0xff]
  %v166 = vld [vmem:[%s0 + $0x430] sm:$0xff]
  %v167 = vld [vmem:[%s0 + $0x438] sm:$0xff]
  %v168 = vld [vmem:[%s0 + $0x440] sm:$0xff]
  %v169 = vld [vmem:[%s0 + $0x448] sm:$0xff]
  %v170 = vld [vmem:[%s0 + $0x450] sm:$0xff]
  %v171 = vld [vmem:[%s0 + $0x458] sm:$0xff]
  %v172 = vld [vmem:[%s0 + $0x460] sm:$0xff]
  %v173 = vld [vmem:[%s0 + $0x468] sm:$0xff]
  %v174 = vld [vmem:[%s0 + $0x470] sm:$0xff]
  %v175 = vld [vmem:[%s0 + $0x478] sm:$0xff]
  %v176 = vld [vmem:[%s0 + $0x480] sm:$0xff]
  %v177 = vld [vmem:[%s0 + $0x488] sm:$0xff]
  %v178 = vld [vmem:[%s0 + $0x490] sm:$0xff]
  %v179 = vld [vmem:[%s0 + $0x498] sm:$0xff]
  %v180 = vld [vmem:[%s0 + $0x4a0] sm:$0xff]
  %v181 = vld [vmem:[%s0 + $0x4a8] sm:$0xff]
  %v182 = vld [vmem:[%s0 + $0x4b0] sm:$0xff]
  %v183 = vld [vmem:[%s0 + $0x4b8] sm:$0xff]
  %v184 = vld [vmem:[%s0 + $0x4c0] sm:$0xff]
  %v185 = vld [vmem:[%s0 + $0x4c8] sm:$0xff]
  %v186 = vld [vmem:[%s0 + $0x4d0] sm:$0xff]
  %v187 = vld [vmem:[%s0 + $0x4d8] sm:$0xff]
  %v188 = vld [vmem:[%s0 + $0x4e0] sm:$0xff]
  %v189 = vld [vmem:[%s0 + $0x4e8] sm:$0xff]
  %v190 = vld [vmem:[%s0 + $0x4f0] sm:$0xff]
  %v191 = vld [vmem:[%s0 + $0x4f8] sm:$0xff]
  %v192 = vld [vmem:[%s0 + $0x500] sm:$0xff]
  %v193 = vld [vmem:[%s0 + $0x508] sm:$0xff]
  %v194 = vld [vmem:[%s0 + $0x510] sm:$0xff]
  %v195 = vld [vmem:[%s0 + $0x518] sm:$0xff]
  %v196 = vld [vmem:[%s0 + $0x520] sm:$0xff]
  %v197 = vld [vmem:[%s0 + $0x528] sm:$0xff]
  %v198 = vld [vmem:[%s0 + $0x530] sm:$0xff]
  %v199 = vld [vmem:[%s0 + $0x538] sm:$0xff]
  %v200 = vld [vmem:[%s0 + $0x540] sm:$0xff]
  %v201 = vld [vmem:[%s0 + $0x548] sm:$0xff]
  %v202 = vld [vmem:[%s0 + $0x550] sm:$0xff]
  %v203 = vld [vmem:[%s0 + $0x558] sm:$0xff]
  %v204 = vld [vmem:[%s0 + $0x560] sm:$0xff]
  %v205 = vld [vmem:[%s0 + $0x568] sm:$0xff]
  %v206 = vld [vmem:[%s0 + $0x570] sm:$0xff]
  %v207 = vld [vmem:[%s0 + $0x578] sm:$0xff]
  %v208 = vld [vmem:[%s0 + $0x580] sm:$0xff]
  %v209 = vld [vmem:[%s0 + $0x588] sm:$0xff]
  %v210 = vld [vmem:[%s0 + $0x590] sm:$0xff]
  %v211 = vld [vmem:[%s0 + $0x598] sm:$0xff]
  %v212 = vld [vmem:[%s0 + $0x5a0] sm:$0xff]
  %v213 = vld [vmem:[%s0 + $0x5a8] sm:$0xff]
  %v214 = vld [vmem:[%s0 + $0x5b0] sm:$0xff]
  %v215 = vld [vmem:[%s0 + $0x5b8] sm:$0xff]
  %v216 = vld [vmem:[%s0 + $0x5c0] sm:$0xff]
  %v217 = vld [vmem:[%s0 + $0x5c8] sm:$0xff]
  %v218 = vld [vmem:[%s0 + $0x5d0] sm:$0xff]
  %v219 = vld [vmem:[%s0 + $0x5d8] sm:$0xff]
  %v220 = vld [vmem:[%s0 + $0x5e0] sm:$0xff]
  %v221 = vld [vmem:[%s0 + $0x5e8] sm:$0xff]
  %v222 = vld [vmem:[%s0 + $0x5f0] sm:$0xff]
  %v223 = vld [vmem:[%s0 + $0x5f8] sm:$0xff]
  %v224 = vld [vmem:[%s0 + $0x600] sm:$0xff]
  %v225 = vld [vmem:[%s0 + $0x608] sm:$0xff]
  %v226 = vld [vmem:[%s0 + $0x610] sm:$0xff]
  %v227 = vld [vmem:[%s0 + $0x618] sm:$0xff]
  %v228 = vld [vmem:[%s0 + $0x620] sm:$0xff]
  %v229 = vld [vmem:[%s0 + $0x628] sm:$0xff]
  %v230 = vld [vmem:[%s0 + $0x630] sm:$0xff]
  %v231 = vld [vmem:[%s0 + $0x638] sm:$0xff]
  %v232 = vld [vmem:[%s1] sm:$0xff]
  %v233 = vld [vmem:[%s1 + $0x8] sm:$0xff]
  %v234 = vld [vmem:[%s1 + $0x10] sm:$0xff]
  %v235 = vld [vmem:[%s1 + $0x18] sm:$0xff]
  %v236 = vld [vmem:[%s1 + $0x20] sm:$0xff]
  %v237 = vld [vmem:[%s1 + $0x28] sm:$0xff]
  %v238 = vld [vmem:[%s1 + $0x30] sm:$0xff]
  %v239 = vld [vmem:[%s1 + $0x38] sm:$0xff]
  %v240 = vld [vmem:[%s1 + $0x40] sm:$0xff]
  %v241 = vld [vmem:[%s1 + $0x48] sm:$0xff]
  %v242 = vld [vmem:[%s1 + $0x50] sm:$0xff]
  %v243 = vld [vmem:[%s1 + $0x58] sm:$0xff]
  %v244 = vld [vmem:[%s1 + $0x60] sm:$0xff]
  %v245 = vld [vmem:[%s1 + $0x68] sm:$0xff]
  %v246 = vld [vmem:[%s1 + $0x70] sm:$0xff]
  %v247 = vld [vmem:[%s1 + $0x78] sm:$0xff]
  %v248 = vld [vmem:[%s1 + $0x80] sm:$0xff]
  %v249 = vld [vmem:[%s1 + $0x88] sm:$0xff]
  %v250 = vld [vmem:[%s1 + $0x90] sm:$0x3f]
  %vm251 = vcmask 179200
  %v253 = vsel %vm251, %v33, 0
  %v256 = vsel %vm251, %v35, 0
  %v259 = vsel %vm251, %v37, 0
  %v262 = vsel %vm251, %v39, 0
  %v265 = vsel %vm251, %v41, 0
  %v268 = vsel %vm251, %v43, 0
  %v271 = vsel %vm251, %v45, 0
  %v274 = vsel %vm251, %v47, 0
  %v277 = vsel %vm251, %v49, 0
  %v280 = vsel %vm251, %v51, 0
  %v283 = vsel %vm251, %v53, 0
  %v286 = vsel %vm251, %v55, 0
  %v289 = vsel %vm251, %v57, 0
  %v292 = vsel %vm251, %v59, 0
  %v295 = vsel %vm251, %v61, 0
  %v298 = vsel %vm251, %v63, 0
  %v301 = vsel %vm251, %v65, 0
  %v304 = vsel %vm251, %v67, 0
  %v307 = vsel %vm251, %v69, 0
  %v310 = vsel %vm251, %v71, 0
  %v313 = vsel %vm251, %v73, 0
  %v316 = vsel %vm251, %v75, 0
  %v319 = vsel %vm251, %v77, 0
  %v322 = vsel %vm251, %v79, 0
  %v325 = vsel %vm251, %v81, 0
  %v328 = vsel %vm251, %v83, 0
  %v331 = vsel %vm251, %v85, 0
  %v334 = vsel %vm251, %v87, 0
  %v337 = vsel %vm251, %v89, 0
  %v340 = vsel %vm251, %v91, 0
  %v343 = vsel %vm251, %v93, 0
  %v346 = vsel %vm251, %v95, 0
  %v349 = vsel %vm251, %v97, 0
  %v352 = vsel %vm251, %v99, 0
  %v355 = vsel %vm251, %v101, 0
  %v358 = vsel %vm251, %v103, 0
  %v361 = vsel %vm251, %v105, 0
  %v364 = vsel %vm251, %v107, 0
  %v367 = vsel %vm251, %v109, 0
  %v370 = vsel %vm251, %v111, 0
  %v373 = vsel %vm251, %v113, 0
  %v376 = vsel %vm251, %v115, 0
  %v379 = vsel %vm251, %v117, 0
  %v382 = vsel %vm251, %v119, 0
  %v385 = vsel %vm251, %v121, 0
  %v388 = vsel %vm251, %v123, 0
  %v391 = vsel %vm251, %v125, 0
  %v394 = vsel %vm251, %v127, 0
  %v397 = vsel %vm251, %v129, 0
  %v400 = vsel %vm251, %v131, 0
  %v403 = vsel %vm251, %v133, 0
  %v406 = vsel %vm251, %v135, 0
  %v409 = vsel %vm251, %v137, 0
  %v412 = vsel %vm251, %v139, 0
  %v415 = vsel %vm251, %v141, 0
  %v418 = vsel %vm251, %v143, 0
  %v421 = vsel %vm251, %v145, 0
  %v424 = vsel %vm251, %v147, 0
  %v427 = vsel %vm251, %v149, 0
  %v430 = vsel %vm251, %v151, 0
  %v433 = vsel %vm251, %v153, 0
  %v436 = vsel %vm251, %v155, 0
  %v439 = vsel %vm251, %v157, 0
  %v442 = vsel %vm251, %v159, 0
  %v445 = vsel %vm251, %v161, 0
  %v448 = vsel %vm251, %v163, 0
  %v451 = vsel %vm251, %v165, 0
  %v454 = vsel %vm251, %v167, 0
  %v457 = vsel %vm251, %v169, 0
  %v460 = vsel %vm251, %v171, 0
  %v463 = vsel %vm251, %v173, 0
  %v466 = vsel %vm251, %v175, 0
  %v469 = vsel %vm251, %v177, 0
  %v472 = vsel %vm251, %v179, 0
  %v475 = vsel %vm251, %v181, 0
  %v478 = vsel %vm251, %v183, 0
  %v481 = vsel %vm251, %v185, 0
  %v484 = vsel %vm251, %v187, 0
  %v487 = vsel %vm251, %v189, 0
  %v490 = vsel %vm251, %v191, 0
  %v493 = vsel %vm251, %v193, 0
  %v496 = vsel %vm251, %v195, 0
  %v499 = vsel %vm251, %v197, 0
  %v502 = vsel %vm251, %v199, 0
  %v505 = vsel %vm251, %v201, 0
  %v508 = vsel %vm251, %v203, 0
  %v511 = vsel %vm251, %v205, 0
  %v514 = vsel %vm251, %v207, 0
  %v517 = vsel %vm251, %v209, 0
  %v520 = vsel %vm251, %v211, 0
  %v523 = vsel %vm251, %v213, 0
  %v526 = vsel %vm251, %v215, 0
  %v529 = vsel %vm251, %v217, 0
  %v532 = vsel %vm251, %v219, 0
  %v535 = vsel %vm251, %v221, 0
  %v538 = vsel %vm251, %v223, 0
  %v541 = vsel %vm251, %v225, 0
  %v544 = vsel %vm251, %v227, 0
  %v547 = vsel %vm251, %v229, 0
  %v550 = vsel %vm251, %v231, 0
  %vm552 = vcmask 1045504
  %v554 = vsel %vm552, %v250, 0
  %556 = vmatprep.subr.mxu0 0.0
  %557 = vmatpush1.msra.mxu0 %v232
  %558 = vmatprep.subr.mxu0 0.0
  %559 = vmatpush1.msra.mxu0 %v233
  %560 = vmatprep.subr.mxu0 0.0
  %561 = vmatpush1.msra.mxu0 %v234
  %562 = vmatprep.subr.mxu0 0.0
  %563 = vmatpush1.msra.mxu0 %v235
  %564 = vmatprep.subr.mxu0 0.0
  %565 = vmatpush1.msra.mxu0 %v236
  %566 = vmatprep.subr.mxu0 0.0
  %567 = vmatpush1.msra.mxu0 %v237
  %568 = vmatprep.subr.mxu0 0.0
  %569 = vmatpush1.msra.mxu0 %v238
  %570 = vmatprep.subr.mxu0 0.0
  %571 = vmatpush1.msra.mxu0 %v239
  %572 = vmatprep.subr.mxu0 0.0
  %573 = vmatpush1.msra.mxu0 %v240
  %574 = vmatprep.subr.mxu0 0.0
  %575 = vmatpush1.msra.mxu0 %v241
  %576 = vmatprep.subr.mxu0 0.0
  %577 = vmatpush1.msra.mxu0 %v242
  %578 = vmatprep.subr.mxu0 0.0
  %579 = vmatpush1.msra.mxu0 %v243
  %580 = vmatprep.subr.mxu0 0.0
  %581 = vmatpush1.msra.mxu0 %v244
  %582 = vmatprep.subr.mxu0 0.0
  %583 = vmatpush1.msra.mxu0 %v245
  %584 = vmatprep.subr.mxu0 0.0
  %585 = vmatpush1.msra.mxu0 %v246
  %586 = vmatprep.subr.mxu0 0.0
  %587 = vmatpush1.msra.mxu0 %v247
  %588 = vmatprep.subr.mxu0 0.0
  %589 = vmatpush1.msra.mxu0 %v248
  %590 = vmatprep.subr.mxu0 0.0
  %591 = vmatpush1.msra.mxu0 %v249
  %592 = vmatprep.subr.mxu0 0.0
  %593 = vmatpush1.msra.mxu0 %v554
  %594 = vmatprep.subr.mxu0 0.0
  %595 = vmatpush1.msra.mxu0 0.0
  %596 = vmatprep.subr.mxu0 0.0
  %597 = vmatpush1.msra.mxu0 0.0
  %598 = vmatprep.subr.mxu0 0.0
  %599 = vmatpush1.msra.mxu0 0.0
  %600 = vmatprep.subr.mxu0 0.0
  %601 = vmatpush1.msra.mxu0 0.0
  %602 = vmatprep.subr.mxu0 0.0
  %603 = vmatpush1.msra.mxu0 0.0
  %604 = vmatprep.subr.mxu0 0.0
  %605 = vmatpush1.msra.mxu0 0.0
  %606 = vmatprep.subr.mxu0 0.0
  %607 = vmatpush1.msra.mxu0 0.0
  %608 = vmatprep.subr.mxu0 0.0
  %609 = vmatpush1.msra.mxu0 0.0
  %610 = vmatprep.subr.mxu0 0.0
  %611 = vmatpush1.msra.mxu0 0.0
  %612 = vmatprep.subr.mxu0 0.0
  %613 = vmatpush1.msra.mxu0 0.0
  %614 = vmatprep.subr.mxu0 0.0
  %615 = vmatpush1.msra.mxu0 0.0
  %616 = vmatprep.subr.mxu0 0.0
  %617 = vmatpush1.msra.mxu0 0.0
  %618 = vmatprep.subr.mxu0 0.0
  %619 = vmatpush1.msra.mxu0 0.0
  %620 = vmatprep.mubr.f32.mxu0 %v253
  %621 = vmatmul.mubr.f32.gmra.mrb[0].mxu0 %v32
  %v622 = vpop.f32.mrb[0].mxu0
  %v623 = vadd.f32 0.0, %v622
  %v624 = vpop.f32.mrb[0].mxu0
  %625 = vmatprep.mubr.f32.mxu0 %v256
  %626 = vmatmul.mubr.f32.gmra.mrb[0].mxu0 %v34
  %v627 = vpop.f32.mrb[0].mxu0
  %v628 = vadd.f32 0.0, %v627
  %v629 = vpop.f32.mrb[0].mxu0
  %630 = vmatprep.mubr.f32.mxu0 %v259
  %631 = vmatmul.mubr.f32.gmra.mrb[0].mxu0 %v36
  %v632 = vpop.f32.mrb[0].mxu0
  %v633 = vadd.f32 0.0, %v632
  %v634 = vpop.f32.mrb[0].mxu0
  %635 = vmatprep.mubr.f32.mxu0 %v262
  %636 = vmatmul.mubr.f32.gmra.mrb[0].mxu0 %v38
  %v637 = vpop.f32.mrb[0].mxu0
  %v638 = vadd.f32 0.0, %v637
  %v639 = vpop.f32.mrb[0].mxu0
  %640 = vmatprep.mubr.f32.mxu0 %v265
  %641 = vmatmul.mubr.f32.gmra.mrb[0].mxu0 %v40
  %v642 = vpop.f32.mrb[0].mxu0
  %v643 = vadd.f32 0.0, %v642
  %v644 = vpop.f32.mrb[0].mxu0
  %645 = vmatprep.mubr.f32.mxu0 %v268
  %646 = vmatmul.mubr.f32.gmra.mrb[0].mxu0 %v42
  %v647 = vpop.f32.mrb[0].mxu0
  %v648 = vadd.f32 0.0, %v647
  %v649 = vpop.f32.mrb[0].mxu0
  %650 = vmatprep.mubr.f32.mxu0 %v271
  %651 = vmatmul.mubr.f32.gmra.mrb[0].mxu0 %v44
  %v652 = vpop.f32.mrb[0].mxu0
  %v653 = vadd.f32 0.0, %v652
  %v654 = vpop.f32.mrb[0].mxu0
  %655 = vmatprep.mubr.f32.mxu0 %v274
  %656 = vmatmul.mubr.f32.gmra.mrb[0].mxu0 %v46
  %v657 = vpop.f32.mrb[0].mxu0
  %v658 = vadd.f32 0.0, %v657
  %v659 = vpop.f32.mrb[0].mxu0
  %660 = vmatprep.mubr.f32.mxu0 %v277
  %661 = vmatmul.mubr.f32.gmra.mrb[0].mxu0 %v48
  %v662 = vpop.f32.mrb[0].mxu0
  %v663 = vadd.f32 0.0, %v662
  %v664 = vpop.f32.mrb[0].mxu0
  %665 = vmatprep.mubr.f32.mxu0 %v280
  %666 = vmatmul.mubr.f32.gmra.mrb[0].mxu0 %v50
  %v667 = vpop.f32.mrb[0].mxu0
  %v668 = vadd.f32 0.0, %v667
  %v669 = vpop.f32.mrb[0].mxu0
  %670 = vmatprep.mubr.f32.mxu0 %v283
  %671 = vmatmul.mubr.f32.gmra.mrb[0].mxu0 %v52
  %v672 = vpop.f32.mrb[0].mxu0
  %v673 = vadd.f32 0.0, %v672
  %v674 = vpop.f32.mrb[0].mxu0
  %675 = vmatprep.mubr.f32.mxu0 %v286
  %676 = vmatmul.mubr.f32.gmra.mrb[0].mxu0 %v54
  %v677 = vpop.f32.mrb[0].mxu0
  %v678 = vadd.f32 0.0, %v677
  %v679 = vpop.f32.mrb[0].mxu0
  %680 = vmatprep.mubr.f32.mxu0 %v289
  %681 = vmatmul.mubr.f32.gmra.mrb[0].mxu0 %v56
  %v682 = vpop.f32.mrb[0].mxu0
  %v683 = vadd.f32 0.0, %v682
  %v684 = vpop.f32.mrb[0].mxu0
  %685 = vmatprep.mubr.f32.mxu0 %v292
  %686 = vmatmul.mubr.f32.gmra.mrb[0].mxu0 %v58
  %v687 = vpop.f32.mrb[0].mxu0
  %v688 = vadd.f32 0.0, %v687
  %v689 = vpop.f32.mrb[0].mxu0
  %690 = vmatprep.mubr.f32.mxu0 %v295
  %691 = vmatmul.mubr.f32.gmra.mrb[0].mxu0 %v60
  %v692 = vpop.f32.mrb[0].mxu0
  %v693 = vadd.f32 0.0, %v692
  %v694 = vpop.f32.mrb[0].mxu0
  %695 = vmatprep.mubr.f32.mxu0 %v298
  %696 = vmatmul.mubr.f32.gmra.mrb[0].mxu0 %v62
  %v697 = vpop.f32.mrb[0].mxu0
  %v698 = vadd.f32 0.0, %v697
  %v699 = vpop.f32.mrb[0].mxu0
  %700 = vmatprep.mubr.f32.mxu0 %v301
  %701 = vmatmul.mubr.f32.gmra.mrb[0].mxu0 %v64
  %v702 = vpop.f32.mrb[0].mxu0
  %v703 = vadd.f32 0.0, %v702
  %v704 = vpop.f32.mrb[0].mxu0
  %705 = vmatprep.mubr.f32.mxu0 %v304
  %706 = vmatmul.mubr.f32.gmra.mrb[0].mxu0 %v66
  %v707 = vpop.f32.mrb[0].mxu0
  %v708 = vadd.f32 0.0, %v707
  %v709 = vpop.f32.mrb[0].mxu0
  %710 = vmatprep.mubr.f32.mxu0 %v307
  %711 = vmatmul.mubr.f32.gmra.mrb[0].mxu0 %v68
  %v712 = vpop.f32.mrb[0].mxu0
  %v713 = vadd.f32 0.0, %v712
  %v714 = vpop.f32.mrb[0].mxu0
  %715 = vmatprep.mubr.f32.mxu0 %v310
  %716 = vmatmul.mubr.f32.gmra.mrb[0].mxu0 %v70
  %v717 = vpop.f32.mrb[0].mxu0
  %v718 = vadd.f32 0.0, %v717
  %v719 = vpop.f32.mrb[0].mxu0
  %720 = vmatprep.mubr.f32.mxu0 %v313
  %721 = vmatmul.mubr.f32.gmra.mrb[0].mxu0 %v72
  %v722 = vpop.f32.mrb[0].mxu0
  %v723 = vadd.f32 0.0, %v722
  %v724 = vpop.f32.mrb[0].mxu0
  %725 = vmatprep.mubr.f32.mxu0 %v316
  %726 = vmatmul.mubr.f32.gmra.mrb[0].mxu0 %v74
  %v727 = vpop.f32.mrb[0].mxu0
  %v728 = vadd.f32 0.0, %v727
  %v729 = vpop.f32.mrb[0].mxu0
  %730 = vmatprep.mubr.f32.mxu0 %v319
  %731 = vmatmul.mubr.f32.gmra.mrb[0].mxu0 %v76
  %v732 = vpop.f32.mrb[0].mxu0
  %v733 = vadd.f32 0.0, %v732
  %v734 = vpop.f32.mrb[0].mxu0
  %735 = vmatprep.mubr.f32.mxu0 %v322
  %736 = vmatmul.mubr.f32.gmra.mrb[0].mxu0 %v78
  %v737 = vpop.f32.mrb[0].mxu0
  %v738 = vadd.f32 0.0, %v737
  %v739 = vpop.f32.mrb[0].mxu0
  %740 = vmatprep.mubr.f32.mxu0 %v325
  %741 = vmatmul.mubr.f32.gmra.mrb[0].mxu0 %v80
  %v742 = vpop.f32.mrb[0].mxu0
  %v743 = vadd.f32 0.0, %v742
  %v744 = vpop.f32.mrb[0].mxu0
  %745 = vmatprep.mubr.f32.mxu0 %v328
  %746 = vmatmul.mubr.f32.gmra.mrb[0].mxu0 %v82
  %v747 = vpop.f32.mrb[0].mxu0
  %v748 = vadd.f32 0.0, %v747
  %v749 = vpop.f32.mrb[0].mxu0
  %750 = vmatprep.mubr.f32.mxu0 %v331
  %751 = vmatmul.mubr.f32.gmra.mrb[0].mxu0 %v84
  %v752 = vpop.f32.mrb[0].mxu0
  %v753 = vadd.f32 0.0, %v752
  %v754 = vpop.f32.mrb[0].mxu0
  %755 = vmatprep.mubr.f32.mxu0 %v334
  %756 = vmatmul.mubr.f32.gmra.mrb[0].mxu0 %v86
  %v757 = vpop.f32.mrb[0].mxu0
  %v758 = vadd.f32 0.0, %v757
  %v759 = vpop.f32.mrb[0].mxu0
  %760 = vmatprep.mubr.f32.mxu0 %v337
  %761 = vmatmul.mubr.f32.gmra.mrb[0].mxu0 %v88
  %v762 = vpop.f32.mrb[0].mxu0
  %v763 = vadd.f32 0.0, %v762
  %v764 = vpop.f32.mrb[0].mxu0
  %765 = vmatprep.mubr.f32.mxu0 %v340
  %766 = vmatmul.mubr.f32.gmra.mrb[0].mxu0 %v90
  %v767 = vpop.f32.mrb[0].mxu0
  %v768 = vadd.f32 0.0, %v767
  %v769 = vpop.f32.mrb[0].mxu0
  %770 = vmatprep.mubr.f32.mxu0 %v343
  %771 = vmatmul.mubr.f32.gmra.mrb[0].mxu0 %v92
  %v772 = vpop.f32.mrb[0].mxu0
  %v773 = vadd.f32 0.0, %v772
  %v774 = vpop.f32.mrb[0].mxu0
  %775 = vmatprep.mubr.f32.mxu0 %v346
  %776 = vmatmul.mubr.f32.gmra.mrb[0].mxu0 %v94
  %v777 = vpop.f32.mrb[0].mxu0
  %v778 = vadd.f32 0.0, %v777
  %v779 = vpop.f32.mrb[0].mxu0
  %780 = vmatprep.mubr.f32.mxu0 %v349
  %781 = vmatmul.mubr.f32.gmra.mrb[0].mxu0 %v96
  %v782 = vpop.f32.mrb[0].mxu0
  %v783 = vadd.f32 0.0, %v782
  %v784 = vpop.f32.mrb[0].mxu0
  %785 = vmatprep.mubr.f32.mxu0 %v352
  %786 = vmatmul.mubr.f32.gmra.mrb[0].mxu0 %v98
  %v787 = vpop.f32.mrb[0].mxu0
  %v788 = vadd.f32 0.0, %v787
  %v789 = vpop.f32.mrb[0].mxu0
  %790 = vmatprep.mubr.f32.mxu0 %v355
  %791 = vmatmul.mubr.f32.gmra.mrb[0].mxu0 %v100
  %v792 = vpop.f32.mrb[0].mxu0
  %v793 = vadd.f32 0.0, %v792
  %v794 = vpop.f32.mrb[0].mxu0
  %795 = vmatprep.mubr.f32.mxu0 %v358
  %796 = vmatmul.mubr.f32.gmra.mrb[0].mxu0 %v102
  %v797 = vpop.f32.mrb[0].mxu0
  %v798 = vadd.f32 0.0, %v797
  %v799 = vpop.f32.mrb[0].mxu0
  %800 = vmatprep.mubr.f32.mxu0 %v361
  %801 = vmatmul.mubr.f32.gmra.mrb[0].mxu0 %v104
  %v802 = vpop.f32.mrb[0].mxu0
  %v803 = vadd.f32 0.0, %v802
  %v804 = vpop.f32.mrb[0].mxu0
  %805 = vmatprep.mubr.f32.mxu0 %v364
  %806 = vmatmul.mubr.f32.gmra.mrb[0].mxu0 %v106
  %v807 = vpop.f32.mrb[0].mxu0
  %v808 = vadd.f32 0.0, %v807
  %v809 = vpop.f32.mrb[0].mxu0
  %810 = vmatprep.mubr.f32.mxu0 %v367
  %811 = vmatmul.mubr.f32.gmra.mrb[0].mxu0 %v108
  %v812 = vpop.f32.mrb[0].mxu0
  %v813 = vadd.f32 0.0, %v812
  %v814 = vpop.f32.mrb[0].mxu0
  %815 = vmatprep.mubr.f32.mxu0 %v370
  %816 = vmatmul.mubr.f32.gmra.mrb[0].mxu0 %v110
  %v817 = vpop.f32.mrb[0].mxu0
  %v818 = vadd.f32 0.0, %v817
  %v819 = vpop.f32.mrb[0].mxu0
  %820 = vmatprep.mubr.f32.mxu0 %v373
  %821 = vmatmul.mubr.f32.gmra.mrb[0].mxu0 %v112
  %v822 = vpop.f32.mrb[0].mxu0
  %v823 = vadd.f32 0.0, %v822
  %v824 = vpop.f32.mrb[0].mxu0
  %825 = vmatprep.mubr.f32.mxu0 %v376
  %826 = vmatmul.mubr.f32.gmra.mrb[0].mxu0 %v114
  %v827 = vpop.f32.mrb[0].mxu0
  %v828 = vadd.f32 0.0, %v827
  %v829 = vpop.f32.mrb[0].mxu0
  %830 = vmatprep.mubr.f32.mxu0 %v379
  %831 = vmatmul.mubr.f32.gmra.mrb[0].mxu0 %v116
  %v832 = vpop.f32.mrb[0].mxu0
  %v833 = vadd.f32 0.0, %v832
  %v834 = vpop.f32.mrb[0].mxu0
  %835 = vmatprep.mubr.f32.mxu0 %v382
  %836 = vmatmul.mubr.f32.gmra.mrb[0].mxu0 %v118
  %v837 = vpop.f32.mrb[0].mxu0
  %v838 = vadd.f32 0.0, %v837
  %v839 = vpop.f32.mrb[0].mxu0
  %840 = vmatprep.mubr.f32.mxu0 %v385
  %841 = vmatmul.mubr.f32.gmra.mrb[0].mxu0 %v120
  %v842 = vpop.f32.mrb[0].mxu0
  %v843 = vadd.f32 0.0, %v842
  %v844 = vpop.f32.mrb[0].mxu0
  %845 = vmatprep.mubr.f32.mxu0 %v388
  %846 = vmatmul.mubr.f32.gmra.mrb[0].mxu0 %v122
  %v847 = vpop.f32.mrb[0].mxu0
  %v848 = vadd.f32 0.0, %v847
  %v849 = vpop.f32.mrb[0].mxu0
  %850 = vmatprep.mubr.f32.mxu0 %v391
  %851 = vmatmul.mubr.f32.gmra.mrb[0].mxu0 %v124
  %v852 = vpop.f32.mrb[0].mxu0
  %v853 = vadd.f32 0.0, %v852
  %v854 = vpop.f32.mrb[0].mxu0
  %855 = vmatprep.mubr.f32.mxu0 %v394
  %856 = vmatmul.mubr.f32.gmra.mrb[0].mxu0 %v126
  %v857 = vpop.f32.mrb[0].mxu0
  %v858 = vadd.f32 0.0, %v857
  %v859 = vpop.f32.mrb[0].mxu0
  %860 = vmatprep.mubr.f32.mxu0 %v397
  %861 = vmatmul.mubr.f32.gmra.mrb[0].mxu0 %v128
  %v862 = vpop.f32.mrb[0].mxu0
  %v863 = vadd.f32 0.0, %v862
  %v864 = vpop.f32.mrb[0].mxu0
  %865 = vmatprep.mubr.f32.mxu0 %v400
  %866 = vmatmul.mubr.f32.gmra.mrb[0].mxu0 %v130
  %v867 = vpop.f32.mrb[0].mxu0
  %v868 = vadd.f32 0.0, %v867
  %v869 = vpop.f32.mrb[0].mxu0
  %870 = vmatprep.mubr.f32.mxu0 %v403
  %871 = vmatmul.mubr.f32.gmra.mrb[0].mxu0 %v132
  %v872 = vpop.f32.mrb[0].mxu0
  %v873 = vadd.f32 0.0, %v872
  %v874 = vpop.f32.mrb[0].mxu0
  %875 = vmatprep.mubr.f32.mxu0 %v406
  %876 = vmatmul.mubr.f32.gmra.mrb[0].mxu0 %v134
  %v877 = vpop.f32.mrb[0].mxu0
  %v878 = vadd.f32 0.0, %v877
  %v879 = vpop.f32.mrb[0].mxu0
  %880 = vmatprep.mubr.f32.mxu0 %v409
  %881 = vmatmul.mubr.f32.gmra.mrb[0].mxu0 %v136
  %v882 = vpop.f32.mrb[0].mxu0
  %v883 = vadd.f32 0.0, %v882
  %v884 = vpop.f32.mrb[0].mxu0
  %885 = vmatprep.mubr.f32.mxu0 %v412
  %886 = vmatmul.mubr.f32.gmra.mrb[0].mxu0 %v138
  %v887 = vpop.f32.mrb[0].mxu0
  %v888 = vadd.f32 0.0, %v887
  %v889 = vpop.f32.mrb[0].mxu0
  %890 = vmatprep.mubr.f32.mxu0 %v415
  %891 = vmatmul.mubr.f32.gmra.mrb[0].mxu0 %v140
  %v892 = vpop.f32.mrb[0].mxu0
  %v893 = vadd.f32 0.0, %v892
  %v894 = vpop.f32.mrb[0].mxu0
  %895 = vmatprep.mubr.f32.mxu0 %v418
  %896 = vmatmul.mubr.f32.gmra.mrb[0].mxu0 %v142
  %v897 = vpop.f32.mrb[0].mxu0
  %v898 = vadd.f32 0.0, %v897
  %v899 = vpop.f32.mrb[0].mxu0
  %900 = vmatprep.mubr.f32.mxu0 %v421
  %901 = vmatmul.mubr.f32.gmra.mrb[0].mxu0 %v144
  %v902 = vpop.f32.mrb[0].mxu0
  %v903 = vadd.f32 0.0, %v902
  %v904 = vpop.f32.mrb[0].mxu0
  %905 = vmatprep.mubr.f32.mxu0 %v424
  %906 = vmatmul.mubr.f32.gmra.mrb[0].mxu0 %v146
  %v907 = vpop.f32.mrb[0].mxu0
  %v908 = vadd.f32 0.0, %v907
  %v909 = vpop.f32.mrb[0].mxu0
  %910 = vmatprep.mubr.f32.mxu0 %v427
  %911 = vmatmul.mubr.f32.gmra.mrb[0].mxu0 %v148
  %v912 = vpop.f32.mrb[0].mxu0
  %v913 = vadd.f32 0.0, %v912
  %v914 = vpop.f32.mrb[0].mxu0
  %915 = vmatprep.mubr.f32.mxu0 %v430
  %916 = vmatmul.mubr.f32.gmra.mrb[0].mxu0 %v150
  %v917 = vpop.f32.mrb[0].mxu0
  %v918 = vadd.f32 0.0, %v917
  %v919 = vpop.f32.mrb[0].mxu0
  %920 = vmatprep.mubr.f32.mxu0 %v433
  %921 = vmatmul.mubr.f32.gmra.mrb[0].mxu0 %v152
  %v922 = vpop.f32.mrb[0].mxu0
  %v923 = vadd.f32 0.0, %v922
  %v924 = vpop.f32.mrb[0].mxu0
  %925 = vmatprep.mubr.f32.mxu0 %v436
  %926 = vmatmul.mubr.f32.gmra.mrb[0].mxu0 %v154
  %v927 = vpop.f32.mrb[0].mxu0
  %v928 = vadd.f32 0.0, %v927
  %v929 = vpop.f32.mrb[0].mxu0
  %930 = vmatprep.mubr.f32.mxu0 %v439
  %931 = vmatmul.mubr.f32.gmra.mrb[0].mxu0 %v156
  %v932 = vpop.f32.mrb[0].mxu0
  %v933 = vadd.f32 0.0, %v932
  %v934 = vpop.f32.mrb[0].mxu0
  %935 = vmatprep.mubr.f32.mxu0 %v442
  %936 = vmatmul.mubr.f32.gmra.mrb[0].mxu0 %v158
  %v937 = vpop.f32.mrb[0].mxu0
  %v938 = vadd.f32 0.0, %v937
  %v939 = vpop.f32.mrb[0].mxu0
  %940 = vmatprep.mubr.f32.mxu0 %v445
  %941 = vmatmul.mubr.f32.gmra.mrb[0].mxu0 %v160
  %v942 = vpop.f32.mrb[0].mxu0
  %v943 = vadd.f32 0.0, %v942
  %v944 = vpop.f32.mrb[0].mxu0
  %945 = vmatprep.mubr.f32.mxu0 %v448
  %946 = vmatmul.mubr.f32.gmra.mrb[0].mxu0 %v162
  %v947 = vpop.f32.mrb[0].mxu0
  %v948 = vadd.f32 0.0, %v947
  %v949 = vpop.f32.mrb[0].mxu0
  %950 = vmatprep.mubr.f32.mxu0 %v451
  %951 = vmatmul.mubr.f32.gmra.mrb[0].mxu0 %v164
  %v952 = vpop.f32.mrb[0].mxu0
  %v953 = vadd.f32 0.0, %v952
  %v954 = vpop.f32.mrb[0].mxu0
  %955 = vmatprep.mubr.f32.mxu0 %v454
  %956 = vmatmul.mubr.f32.gmra.mrb[0].mxu0 %v166
  %v957 = vpop.f32.mrb[0].mxu0
  %v958 = vadd.f32 0.0, %v957
  %v959 = vpop.f32.mrb[0].mxu0
  %960 = vmatprep.mubr.f32.mxu0 %v457
  %961 = vmatmul.mubr.f32.gmra.mrb[0].mxu0 %v168
  %v962 = vpop.f32.mrb[0].mxu0
  %v963 = vadd.f32 0.0, %v962
  %v964 = vpop.f32.mrb[0].mxu0
  %965 = vmatprep.mubr.f32.mxu0 %v460
  %966 = vmatmul.mubr.f32.gmra.mrb[0].mxu0 %v170
  %v967 = vpop.f32.mrb[0].mxu0
  %v968 = vadd.f32 0.0, %v967
  %v969 = vpop.f32.mrb[0].mxu0
  %970 = vmatprep.mubr.f32.mxu0 %v463
  %971 = vmatmul.mubr.f32.gmra.mrb[0].mxu0 %v172
  %v972 = vpop.f32.mrb[0].mxu0
  %v973 = vadd.f32 0.0, %v972
  %v974 = vpop.f32.mrb[0].mxu0
  %975 = vmatprep.mubr.f32.mxu0 %v466
  %976 = vmatmul.mubr.f32.gmra.mrb[0].mxu0 %v174
  %v977 = vpop.f32.mrb[0].mxu0
  %v978 = vadd.f32 0.0, %v977
  %v979 = vpop.f32.mrb[0].mxu0
  %980 = vmatprep.mubr.f32.mxu0 %v469
  %981 = vmatmul.mubr.f32.gmra.mrb[0].mxu0 %v176
  %v982 = vpop.f32.mrb[0].mxu0
  %v983 = vadd.f32 0.0, %v982
  %v984 = vpop.f32.mrb[0].mxu0
  %985 = vmatprep.mubr.f32.mxu0 %v472
  %986 = vmatmul.mubr.f32.gmra.mrb[0].mxu0 %v178
  %v987 = vpop.f32.mrb[0].mxu0
  %v988 = vadd.f32 0.0, %v987
  %v989 = vpop.f32.mrb[0].mxu0
  %990 = vmatprep.mubr.f32.mxu0 %v475
  %991 = vmatmul.mubr.f32.gmra.mrb[0].mxu0 %v180
  %v992 = vpop.f32.mrb[0].mxu0
  %v993 = vadd.f32 0.0, %v992
  %v994 = vpop.f32.mrb[0].mxu0
  %995 = vmatprep.mubr.f32.mxu0 %v478
  %996 = vmatmul.mubr.f32.gmra.mrb[0].mxu0 %v182
  %v997 = vpop.f32.mrb[0].mxu0
  %v998 = vadd.f32 0.0, %v997
  %v999 = vpop.f32.mrb[0].mxu0
  %1000 = vmatprep.mubr.f32.mxu0 %v481
  %1001 = vmatmul.mubr.f32.gmra.mrb[0].mxu0 %v184
  %v1002 = vpop.f32.mrb[0].mxu0
  %v1003 = vadd.f32 0.0, %v1002
  %v1004 = vpop.f32.mrb[0].mxu0
  %1005 = vmatprep.mubr.f32.mxu0 %v484
  %1006 = vmatmul.mubr.f32.gmra.mrb[0].mxu0 %v186
  %v1007 = vpop.f32.mrb[0].mxu0
  %v1008 = vadd.f32 0.0, %v1007
  %v1009 = vpop.f32.mrb[0].mxu0
  %1010 = vmatprep.mubr.f32.mxu0 %v487
  %1011 = vmatmul.mubr.f32.gmra.mrb[0].mxu0 %v188
  %v1012 = vpop.f32.mrb[0].mxu0
  %v1013 = vadd.f32 0.0, %v1012
  %v1014 = vpop.f32.mrb[0].mxu0
  %1015 = vmatprep.mubr.f32.mxu0 %v490
  %1016 = vmatmul.mubr.f32.gmra.mrb[0].mxu0 %v190
  %v1017 = vpop.f32.mrb[0].mxu0
  %v1018 = vadd.f32 0.0, %v1017
  %v1019 = vpop.f32.mrb[0].mxu0
  %1020 = vmatprep.mubr.f32.mxu0 %v493
  %1021 = vmatmul.mubr.f32.gmra.mrb[0].mxu0 %v192
  %v1022 = vpop.f32.mrb[0].mxu0
  %v1023 = vadd.f32 0.0, %v1022
  %v1024 = vpop.f32.mrb[0].mxu0
  %1025 = vmatprep.mubr.f32.mxu0 %v496
  %1026 = vmatmul.mubr.f32.gmra.mrb[0].mxu0 %v194
  %v1027 = vpop.f32.mrb[0].mxu0
  %v1028 = vadd.f32 0.0, %v1027
  %v1029 = vpop.f32.mrb[0].mxu0
  %1030 = vmatprep.mubr.f32.mxu0 %v499
  %1031 = vmatmul.mubr.f32.gmra.mrb[0].mxu0 %v196
  %v1032 = vpop.f32.mrb[0].mxu0
  %v1033 = vadd.f32 0.0, %v1032
  %v1034 = vpop.f32.mrb[0].mxu0
  %1035 = vmatprep.mubr.f32.mxu0 %v502
  %1036 = vmatmul.mubr.f32.gmra.mrb[0].mxu0 %v198
  %v1037 = vpop.f32.mrb[0].mxu0
  %v1038 = vadd.f32 0.0, %v1037
  %v1039 = vpop.f32.mrb[0].mxu0
  %1040 = vmatprep.mubr.f32.mxu0 %v505
  %1041 = vmatmul.mubr.f32.gmra.mrb[0].mxu0 %v200
  %v1042 = vpop.f32.mrb[0].mxu0
  %v1043 = vadd.f32 0.0, %v1042
  %v1044 = vpop.f32.mrb[0].mxu0
  %1045 = vmatprep.mubr.f32.mxu0 %v508
  %1046 = vmatmul.mubr.f32.gmra.mrb[0].mxu0 %v202
  %v1047 = vpop.f32.mrb[0].mxu0
  %v1048 = vadd.f32 0.0, %v1047
  %v1049 = vpop.f32.mrb[0].mxu0
  %1050 = vmatprep.mubr.f32.mxu0 %v511
  %1051 = vmatmul.mubr.f32.gmra.mrb[0].mxu0 %v204
  %v1052 = vpop.f32.mrb[0].mxu0
  %v1053 = vadd.f32 0.0, %v1052
  %v1054 = vpop.f32.mrb[0].mxu0
  %1055 = vmatprep.mubr.f32.mxu0 %v514
  %1056 = vmatmul.mubr.f32.gmra.mrb[0].mxu0 %v206
  %v1057 = vpop.f32.mrb[0].mxu0
  %v1058 = vadd.f32 0.0, %v1057
  %v1059 = vpop.f32.mrb[0].mxu0
  %1060 = vmatprep.mubr.f32.mxu0 %v517
  %1061 = vmatmul.mubr.f32.gmra.mrb[0].mxu0 %v208
  %v1062 = vpop.f32.mrb[0].mxu0
  %v1063 = vadd.f32 0.0, %v1062
  %v1064 = vpop.f32.mrb[0].mxu0
  %1065 = vmatprep.mubr.f32.mxu0 %v520
  %1066 = vmatmul.mubr.f32.gmra.mrb[0].mxu0 %v210
  %v1067 = vpop.f32.mrb[0].mxu0
  %v1068 = vadd.f32 0.0, %v1067
  %v1069 = vpop.f32.mrb[0].mxu0
  %1070 = vmatprep.mubr.f32.mxu0 %v523
  %1071 = vmatmul.mubr.f32.gmra.mrb[0].mxu0 %v212
  %v1072 = vpop.f32.mrb[0].mxu0
  %v1073 = vadd.f32 0.0, %v1072
  %v1074 = vpop.f32.mrb[0].mxu0
  %1075 = vmatprep.mubr.f32.mxu0 %v526
  %1076 = vmatmul.mubr.f32.gmra.mrb[0].mxu0 %v214
  %v1077 = vpop.f32.mrb[0].mxu0
  %v1078 = vadd.f32 0.0, %v1077
  %v1079 = vpop.f32.mrb[0].mxu0
  %1080 = vmatprep.mubr.f32.mxu0 %v529
  %1081 = vmatmul.mubr.f32.gmra.mrb[0].mxu0 %v216
  %v1082 = vpop.f32.mrb[0].mxu0
  %v1083 = vadd.f32 0.0, %v1082
  %v1084 = vpop.f32.mrb[0].mxu0
  %1085 = vmatprep.mubr.f32.mxu0 %v532
  %1086 = vmatmul.mubr.f32.gmra.mrb[0].mxu0 %v218
  %v1087 = vpop.f32.mrb[0].mxu0
  %v1088 = vadd.f32 0.0, %v1087
  %v1089 = vpop.f32.mrb[0].mxu0
  %1090 = vmatprep.mubr.f32.mxu0 %v535
  %1091 = vmatmul.mubr.f32.gmra.mrb[0].mxu0 %v220
  %v1092 = vpop.f32.mrb[0].mxu0
  %v1093 = vadd.f32 0.0, %v1092
  %v1094 = vpop.f32.mrb[0].mxu0
  %1095 = vmatprep.mubr.f32.mxu0 %v538
  %1096 = vmatmul.mubr.f32.gmra.mrb[0].mxu0 %v222
  %v1097 = vpop.f32.mrb[0].mxu0
  %v1098 = vadd.f32 0.0, %v1097
  %v1099 = vpop.f32.mrb[0].mxu0
  %1100 = vmatprep.mubr.f32.mxu0 %v541
  %1101 = vmatmul.mubr.f32.gmra.mrb[0].mxu0 %v224
  %v1102 = vpop.f32.mrb[0].mxu0
  %v1103 = vadd.f32 0.0, %v1102
  %v1104 = vpop.f32.mrb[0].mxu0
  %1105 = vmatprep.mubr.f32.mxu0 %v544
  %1106 = vmatmul.mubr.f32.gmra.mrb[0].mxu0 %v226
  %v1107 = vpop.f32.mrb[0].mxu0
  %v1108 = vadd.f32 0.0, %v1107
  %v1109 = vpop.f32.mrb[0].mxu0
  %1110 = vmatprep.mubr.f32.mxu0 %v547
  %1111 = vmatmul.mubr.f32.gmra.mrb[0].mxu0 %v228
  %v1112 = vpop.f32.mrb[0].mxu0
  %v1113 = vadd.f32 0.0, %v1112
  %v1114 = vpop.f32.mrb[0].mxu0
  %1115 = vmatprep.mubr.f32.mxu0 %v550
  %1116 = vmatmul.mubr.f32.gmra.mrb[0].mxu0 %v230
  %v1117 = vpop.f32.mrb[0].mxu0
  %v1118 = vadd.f32 0.0, %v1117
  %v1119 = vpop.f32.mrb[0].mxu0
  %1120 = vdwg.mxu0
  %v1121 = vmax.f32 %v623, %v748
  %v1122 = vmax.f32 %v628, %v753
  %v1123 = vmax.f32 %v633, %v758
  %v1124 = vmax.f32 %v638, %v763
  %v1125 = vmax.f32 %v643, %v768
  %v1126 = vmax.f32 %v648, %v773
  %v1127 = vmax.f32 %v653, %v778
  %v1128 = vmax.f32 %v658, %v783
  %v1129 = vmax.f32 %v663, %v788
  %v1130 = vmax.f32 %v668, %v793
  %v1131 = vmax.f32 %v673, %v798
  %v1132 = vmax.f32 %v678, %v803
  %v1133 = vmax.f32 %v683, %v808
  %v1134 = vmax.f32 %v688, %v813
  %v1135 = vmax.f32 %v693, %v818
  %v1136 = vmax.f32 %v698, %v823
  %v1137 = vmax.f32 %v703, %v828
  %v1138 = vmax.f32 %v708, %v833
  %v1139 = vmax.f32 %v713, %v838
  %v1140 = vmax.f32 %v718, %v843
  %v1141 = vmax.f32 %v723, %v848
  %v1142 = vmax.f32 %v728, %v853
  %v1143 = vmax.f32 %v733, %v858
  %v1144 = vmax.f32 %v738, %v863
  %v1145 = vmax.f32 %v743, %v868
  %v1146 = vmax.f32 %v873, %v998
  %v1147 = vmax.f32 %v878, %v1003
  %v1148 = vmax.f32 %v883, %v1008
  %v1149 = vmax.f32 %v888, %v1013
  %v1150 = vmax.f32 %v893, %v1018
  %v1151 = vmax.f32 %v898, %v1023
  %v1152 = vmax.f32 %v903, %v1028
  %v1153 = vmax.f32 %v908, %v1033
  %v1154 = vmax.f32 %v913, %v1038
  %v1155 = vmax.f32 %v918, %v1043
  %v1156 = vmax.f32 %v923, %v1048
  %v1157 = vmax.f32 %v928, %v1053
  %v1158 = vmax.f32 %v933, %v1058
  %v1159 = vmax.f32 %v938, %v1063
  %v1160 = vmax.f32 %v943, %v1068
  %v1161 = vmax.f32 %v948, %v1073
  %v1162 = vmax.f32 %v953, %v1078
  %v1163 = vmax.f32 %v958, %v1083
  %v1164 = vmax.f32 %v963, %v1088
  %v1165 = vmax.f32 %v968, %v1093
  %v1166 = vmax.f32 %v973, %v1098
  %v1167 = vmax.f32 %v978, %v1103
  %v1168 = vmax.f32 %v983, %v1108
  %v1169 = vmax.f32 %v988, %v1113
  %v1170 = vmax.f32 %v993, %v1118
  %v1171 = vmax.f32 %v1121, %v1146
  %v1172 = vmax.f32 %v1122, %v1147
  %v1173 = vmax.f32 %v1123, %v1148
  %v1174 = vmax.f32 %v1124, %v1149
  %v1175 = vmax.f32 %v1125, %v1150
  %v1176 = vmax.f32 %v1126, %v1151
  %v1177 = vmax.f32 %v1127, %v1152
  %v1178 = vmax.f32 %v1128, %v1153
  %v1179 = vmax.f32 %v1129, %v1154
  %v1180 = vmax.f32 %v1130, %v1155
  %v1181 = vmax.f32 %v1131, %v1156
  %v1182 = vmax.f32 %v1132, %v1157
  %v1183 = vmax.f32 %v1133, %v1158
  %v1184 = vmax.f32 %v1134, %v1159
  %v1185 = vmax.f32 %v1135, %v1160
  %v1186 = vmax.f32 %v1136, %v1161
  %v1187 = vmax.f32 %v1137, %v1162
  %v1188 = vmax.f32 %v1138, %v1163
  %v1189 = vmax.f32 %v1139, %v1164
  %v1190 = vmax.f32 %v1140, %v1165
  %v1191 = vmax.f32 %v1141, %v1166
  %v1192 = vmax.f32 %v1142, %v1167
  %v1193 = vmax.f32 %v1143, %v1168
  %v1194 = vmax.f32 %v1144, %v1169
  %v1195 = vmax.f32 %v1145, %v1170
  %v1196 = vld [vmem:[%s2] sm:$0x1]
  %v1198 = vlaneseq
  %v1199 = vshrl.u32 %v1198, 7
  %v1200 = vsub.s32 0, %v1199
  %v1201 = vrot.slane %v1196, %v1200
  %v1203 = vadd.f32 %v1171, %v1201
  %v1204 = vadd.f32 %v1172, %v1201
  %v1205 = vadd.f32 %v1173, %v1201
  %v1206 = vadd.f32 %v1174, %v1201
  %v1207 = vadd.f32 %v1175, %v1201
  %v1208 = vadd.f32 %v1176, %v1201
  %v1209 = vadd.f32 %v1177, %v1201
  %v1210 = vadd.f32 %v1178, %v1201
  %v1211 = vadd.f32 %v1179, %v1201
  %v1212 = vadd.f32 %v1180, %v1201
  %v1213 = vadd.f32 %v1181, %v1201
  %v1214 = vadd.f32 %v1182, %v1201
  %v1215 = vadd.f32 %v1183, %v1201
  %v1216 = vadd.f32 %v1184, %v1201
  %v1217 = vadd.f32 %v1185, %v1201
  %v1218 = vadd.f32 %v1186, %v1201
  %v1219 = vadd.f32 %v1187, %v1201
  %v1220 = vadd.f32 %v1188, %v1201
  %v1221 = vadd.f32 %v1189, %v1201
  %v1222 = vadd.f32 %v1190, %v1201
  %v1223 = vadd.f32 %v1191, %v1201
  %v1224 = vadd.f32 %v1192, %v1201
  %v1225 = vadd.f32 %v1193, %v1201
  %v1226 = vadd.f32 %v1194, %v1201
  %v1227 = vadd.f32 %v1195, %v1201
  %v1228 = vmax.f32 %v1203, 0.0
  %v1229 = vmax.f32 %v1204, 0.0
  %v1230 = vmax.f32 %v1205, 0.0
  %v1231 = vmax.f32 %v1206, 0.0
  %v1232 = vmax.f32 %v1207, 0.0
  %v1233 = vmax.f32 %v1208, 0.0
  %v1234 = vmax.f32 %v1209, 0.0
  %v1235 = vmax.f32 %v1210, 0.0
  %v1236 = vmax.f32 %v1211, 0.0
  %v1237 = vmax.f32 %v1212, 0.0
  %v1238 = vmax.f32 %v1213, 0.0
  %v1239 = vmax.f32 %v1214, 0.0
  %v1240 = vmax.f32 %v1215, 0.0
  %v1241 = vmax.f32 %v1216, 0.0
  %v1242 = vmax.f32 %v1217, 0.0
  %v1243 = vmax.f32 %v1218, 0.0
  %v1244 = vmax.f32 %v1219, 0.0
  %v1245 = vmax.f32 %v1220, 0.0
  %v1246 = vmax.f32 %v1221, 0.0
  %v1247 = vmax.f32 %v1222, 0.0
  %v1248 = vmax.f32 %v1223, 0.0
  %v1249 = vmax.f32 %v1224, 0.0
  %v1250 = vmax.f32 %v1225, 0.0
  %v1251 = vmax.f32 %v1226, 0.0
  %v1252 = vmax.f32 %v1227, 0.0
  %v1253 = vld [vmem:[%s3] sm:$0xff]
  %v1254 = vld [vmem:[%s3 + $0x8] sm:$0xff]
  %s1255 = scalar_lea.vmem %s3, 16
  %v1256 = vld [vmem:[%s1255] sm:$0xff]
  %v1257 = vld [vmem:[%s1255 + $0x8] sm:$0xff]
  %vm1258 = vcmask 130048
  %v1260 = vsel %vm1258, %v1229, 0
  %1262 = vmatprep.subr.mxu0 0.0
  %1263 = vmatpush1.msra.mxu0 %v1256
  %1264 = vmatprep.subr.mxu0 0.0
  %1265 = vmatpush1.msra.mxu0 %v1257
  %1266 = vmatprep.subr.mxu0 0.0
  %1267 = vmatpush1.msra.mxu0 0.0
  %1268 = vmatprep.subr.mxu0 0.0
  %1269 = vmatpush1.msra.mxu0 0.0
  %1270 = vmatprep.subr.mxu0 0.0
  %1271 = vmatpush1.msra.mxu0 0.0
  %1272 = vmatprep.subr.mxu0 0.0
  %1273 = vmatpush1.msra.mxu0 0.0
  %1274 = vmatprep.subr.mxu0 0.0
  %1275 = vmatpush1.msra.mxu0 0.0
  %1276 = vmatprep.subr.mxu0 0.0
  %1277 = vmatpush1.msra.mxu0 0.0
  %1278 = vmatprep.subr.mxu0 0.0
  %1279 = vmatpush1.msra.mxu0 0.0
  %1280 = vmatprep.subr.mxu0 0.0
  %1281 = vmatpush1.msra.mxu0 0.0
  %1282 = vmatprep.subr.mxu0 0.0
  %1283 = vmatpush1.msra.mxu0 0.0
  %1284 = vmatprep.subr.mxu0 0.0
  %1285 = vmatpush1.msra.mxu0 0.0
  %1286 = vmatprep.subr.mxu0 0.0
  %1287 = vmatpush1.msra.mxu0 0.0
  %1288 = vmatprep.subr.mxu0 0.0
  %1289 = vmatpush1.msra.mxu0 0.0
  %1290 = vmatprep.subr.mxu0 0.0
  %1291 = vmatpush1.msra.mxu0 0.0
  %1292 = vmatprep.subr.mxu0 0.0
  %1293 = vmatpush1.msra.mxu0 0.0
  %1294 = vmatprep.subr.mxu0 0.0
  %1295 = vmatpush1.msra.mxu0 0.0
  %1296 = vmatprep.subr.mxu0 0.0
  %1297 = vmatpush1.msra.mxu0 0.0
  %1298 = vmatprep.subr.mxu0 0.0
  %1299 = vmatpush1.msra.mxu0 0.0
  %1300 = vmatprep.subr.mxu0 0.0
  %1301 = vmatpush1.msra.mxu0 0.0
  %1302 = vmatprep.subr.mxu0 0.0
  %1303 = vmatpush1.msra.mxu0 0.0
  %1304 = vmatprep.subr.mxu0 0.0
  %1305 = vmatpush1.msra.mxu0 0.0
  %1306 = vmatprep.subr.mxu0 0.0
  %1307 = vmatpush1.msra.mxu0 0.0
  %1308 = vmatprep.subr.mxu0 0.0
  %1309 = vmatpush1.msra.mxu0 0.0
  %1310 = vmatprep.subr.mxu0 0.0
  %1311 = vmatpush1.msra.mxu0 0.0
  %1312 = vmatprep.subr.mxu0 0.0
  %1313 = vmatpush1.msra.mxu0 0.0
  %1314 = vmatprep.subr.mxu0 0.0
  %1315 = vmatpush1.msra.mxu0 0.0
  %1316 = vmatprep.subr.mxu0 0.0
  %1317 = vmatpush1.msra.mxu0 0.0
  %1318 = vmatprep.subr.mxu0 0.0
  %1319 = vmatpush1.msra.mxu0 0.0
  %1320 = vmatprep.subr.mxu0 0.0
  %1321 = vmatpush1.msra.mxu0 0.0
  %1322 = vmatprep.subr.mxu0 0.0
  %1323 = vmatpush1.msra.mxu0 0.0
  %1324 = vmatprep.subr.mxu0 0.0
  %1325 = vmatpush1.msra.mxu0 0.0
  %1326 = vmatprep.mubr.f32.mxu0 0.0
  %1327 = vmatmul.mubr.f32.gmra.mrb[0].mxu0 %v1260
  %v1328 = vpop.f32.mrb[0].mxu0
  %v1329 = vadd.f32 0.0, %v1328
  %v1330 = vpop.f32.mrb[0].mxu0
  %1331 = vdwg.mxu0
  %v1333 = vsel %vm1258, %v1228, 0
  %1335 = vmatprep.subr.mxu0 0.0
  %1336 = vmatpush1.msra.mxu0 %v1253
  %1337 = vmatprep.subr.mxu0 0.0
  %1338 = vmatpush1.msra.mxu0 %v1254
  %1339 = vmatprep.subr.mxu0 0.0
  %1340 = vmatpush1.msra.mxu0 0.0
  %1341 = vmatprep.subr.mxu0 0.0
  %1342 = vmatpush1.msra.mxu0 0.0
  %1343 = vmatprep.subr.mxu0 0.0
  %1344 = vmatpush1.msra.mxu0 0.0
  %1345 = vmatprep.subr.mxu0 0.0
  %1346 = vmatpush1.msra.mxu0 0.0
  %1347 = vmatprep.subr.mxu0 0.0
  %1348 = vmatpush1.msra.mxu0 0.0
  %1349 = vmatprep.subr.mxu0 0.0
  %1350 = vmatpush1.msra.mxu0 0.0
  %1351 = vmatprep.subr.mxu0 0.0
  %1352 = vmatpush1.msra.mxu0 0.0
  %1353 = vmatprep.subr.mxu0 0.0
  %1354 = vmatpush1.msra.mxu0 0.0
  %1355 = vmatprep.subr.mxu0 0.0
  %1356 = vmatpush1.msra.mxu0 0.0
  %1357 = vmatprep.subr.mxu0 0.0
  %1358 = vmatpush1.msra.mxu0 0.0
  %1359 = vmatprep.subr.mxu0 0.0
  %1360 = vmatpush1.msra.mxu0 0.0
  %1361 = vmatprep.subr.mxu0 0.0
  %1362 = vmatpush1.msra.mxu0 0.0
  %1363 = vmatprep.subr.mxu0 0.0
  %1364 = vmatpush1.msra.mxu0 0.0
  %1365 = vmatprep.subr.mxu0 0.0
  %1366 = vmatpush1.msra.mxu0 0.0
  %1367 = vmatprep.subr.mxu0 0.0
  %1368 = vmatpush1.msra.mxu0 0.0
  %1369 = vmatprep.subr.mxu0 0.0
  %1370 = vmatpush1.msra.mxu0 0.0
  %1371 = vmatprep.subr.mxu0 0.0
  %1372 = vmatpush1.msra.mxu0 0.0
  %1373 = vmatprep.subr.mxu0 0.0
  %1374 = vmatpush1.msra.mxu0 0.0
  %1375 = vmatprep.subr.mxu0 0.0
  %1376 = vmatpush1.msra.mxu0 0.0
  %1377 = vmatprep.subr.mxu0 0.0
  %1378 = vmatpush1.msra.mxu0 0.0
  %1379 = vmatprep.subr.mxu0 0.0
  %1380 = vmatpush1.msra.mxu0 0.0
  %1381 = vmatprep.subr.mxu0 0.0
  %1382 = vmatpush1.msra.mxu0 0.0
  %1383 = vmatprep.subr.mxu0 0.0
  %1384 = vmatpush1.msra.mxu0 0.0
  %1385 = vmatprep.subr.mxu0 0.0
  %1386 = vmatpush1.msra.mxu0 0.0
  %1387 = vmatprep.subr.mxu0 0.0
  %1388 = vmatpush1.msra.mxu0 0.0
  %1389 = vmatprep.subr.mxu0 0.0
  %1390 = vmatpush1.msra.mxu0 0.0
  %1391 = vmatprep.subr.mxu0 0.0
  %1392 = vmatpush1.msra.mxu0 0.0
  %1393 = vmatprep.subr.mxu0 0.0
  %1394 = vmatpush1.msra.mxu0 0.0
  %1395 = vmatprep.subr.mxu0 0.0
  %1396 = vmatpush1.msra.mxu0 0.0
  %1397 = vmatprep.subr.mxu0 0.0
  %1398 = vmatpush1.msra.mxu0 0.0
  %1399 = vmatprep.mubr.f32.mxu0 0.0
  %1400 = vmatmul.mubr.f32.gmra.mrb[0].mxu0 %v1333
  %v1401 = vpop.f32.mrb[0].mxu0
  %v1402 = vadd.f32 %v1329, %v1401
  %v1403 = vpop.f32.mrb[0].mxu0
  %1404 = vdwg.mxu0
  %s1405 = scalar_lea.vmem %s3, 32
  %v1406 = vld [vmem:[%s1405] sm:$0xff]
  %v1407 = vld [vmem:[%s1405 + $0x8] sm:$0xff]
  %v1409 = vsel %vm1258, %v1230, 0
  %1411 = vmatprep.subr.mxu0 0.0
  %1412 = vmatpush1.msra.mxu0 %v1406
  %1413 = vmatprep.subr.mxu0 0.0
  %1414 = vmatpush1.msra.mxu0 %v1407
  %1415 = vmatprep.subr.mxu0 0.0
  %1416 = vmatpush1.msra.mxu0 0.0
  %1417 = vmatprep.subr.mxu0 0.0
  %1418 = vmatpush1.msra.mxu0 0.0
  %1419 = vmatprep.subr.mxu0 0.0
  %1420 = vmatpush1.msra.mxu0 0.0
  %1421 = vmatprep.subr.mxu0 0.0
  %1422 = vmatpush1.msra.mxu0 0.0
  %1423 = vmatprep.subr.mxu0 0.0
  %1424 = vmatpush1.msra.mxu0 0.0
  %1425 = vmatprep.subr.mxu0 0.0
  %1426 = vmatpush1.msra.mxu0 0.0
  %1427 = vmatprep.subr.mxu0 0.0
  %1428 = vmatpush1.msra.mxu0 0.0
  %1429 = vmatprep.subr.mxu0 0.0
  %1430 = vmatpush1.msra.mxu0 0.0
  %1431 = vmatprep.subr.mxu0 0.0
  %1432 = vmatpush1.msra.mxu0 0.0
  %1433 = vmatprep.subr.mxu0 0.0
  %1434 = vmatpush1.msra.mxu0 0.0
  %1435 = vmatprep.subr.mxu0 0.0
  %1436 = vmatpush1.msra.mxu0 0.0
  %1437 = vmatprep.subr.mxu0 0.0
  %1438 = vmatpush1.msra.mxu0 0.0
  %1439 = vmatprep.subr.mxu0 0.0
  %1440 = vmatpush1.msra.mxu0 0.0
  %1441 = vmatprep.subr.mxu0 0.0
  %1442 = vmatpush1.msra.mxu0 0.0
  %1443 = vmatprep.subr.mxu0 0.0
  %1444 = vmatpush1.msra.mxu0 0.0
  %1445 = vmatprep.subr.mxu0 0.0
  %1446 = vmatpush1.msra.mxu0 0.0
  %1447 = vmatprep.subr.mxu0 0.0
  %1448 = vmatpush1.msra.mxu0 0.0
  %1449 = vmatprep.subr.mxu0 0.0
  %1450 = vmatpush1.msra.mxu0 0.0
  %1451 = vmatprep.subr.mxu0 0.0
  %1452 = vmatpush1.msra.mxu0 0.0
  %1453 = vmatprep.subr.mxu0 0.0
  %1454 = vmatpush1.msra.mxu0 0.0
  %1455 = vmatprep.subr.mxu0 0.0
  %1456 = vmatpush1.msra.mxu0 0.0
  %1457 = vmatprep.subr.mxu0 0.0
  %1458 = vmatpush1.msra.mxu0 0.0
  %1459 = vmatprep.subr.mxu0 0.0
  %1460 = vmatpush1.msra.mxu0 0.0
  %1461 = vmatprep.subr.mxu0 0.0
  %1462 = vmatpush1.msra.mxu0 0.0
  %1463 = vmatprep.subr.mxu0 0.0
  %1464 = vmatpush1.msra.mxu0 0.0
  %1465 = vmatprep.subr.mxu0 0.0
  %1466 = vmatpush1.msra.mxu0 0.0
  %1467 = vmatprep.subr.mxu0 0.0
  %1468 = vmatpush1.msra.mxu0 0.0
  %1469 = vmatprep.subr.mxu0 0.0
  %1470 = vmatpush1.msra.mxu0 0.0
  %1471 = vmatprep.subr.mxu0 0.0
  %1472 = vmatpush1.msra.mxu0 0.0
  %1473 = vmatprep.subr.mxu0 0.0
  %1474 = vmatpush1.msra.mxu0 0.0
  %1475 = vmatprep.mubr.f32.mxu0 0.0
  %1476 = vmatmul.mubr.f32.gmra.mrb[0].mxu0 %v1409
  %v1477 = vpop.f32.mrb[0].mxu0
  %v1478 = vadd.f32 0.0, %v1477
  %v1479 = vpop.f32.mrb[0].mxu0
  %1480 = vdwg.mxu0
  %v1481 = vadd.f32 %v1402, %v1478
  %s1482 = scalar_lea.vmem %s3, 48
  %v1483 = vld [vmem:[%s1482] sm:$0xff]
  %v1484 = vld [vmem:[%s1482 + $0x8] sm:$0xff]
  %v1486 = vsel %vm1258, %v1231, 0
  %1488 = vmatprep.subr.mxu0 0.0
  %1489 = vmatpush1.msra.mxu0 %v1483
  %1490 = vmatprep.subr.mxu0 0.0
  %1491 = vmatpush1.msra.mxu0 %v1484
  %1492 = vmatprep.subr.mxu0 0.0
  %1493 = vmatpush1.msra.mxu0 0.0
  %1494 = vmatprep.subr.mxu0 0.0
  %1495 = vmatpush1.msra.mxu0 0.0
  %1496 = vmatprep.subr.mxu0 0.0
  %1497 = vmatpush1.msra.mxu0 0.0
  %1498 = vmatprep.subr.mxu0 0.0
  %1499 = vmatpush1.msra.mxu0 0.0
  %1500 = vmatprep.subr.mxu0 0.0
  %1501 = vmatpush1.msra.mxu0 0.0
  %1502 = vmatprep.subr.mxu0 0.0
  %1503 = vmatpush1.msra.mxu0 0.0
  %1504 = vmatprep.subr.mxu0 0.0
  %1505 = vmatpush1.msra.mxu0 0.0
  %1506 = vmatprep.subr.mxu0 0.0
  %1507 = vmatpush1.msra.mxu0 0.0
  %1508 = vmatprep.subr.mxu0 0.0
  %1509 = vmatpush1.msra.mxu0 0.0
  %1510 = vmatprep.subr.mxu0 0.0
  %1511 = vmatpush1.msra.mxu0 0.0
  %1512 = vmatprep.subr.mxu0 0.0
  %1513 = vmatpush1.msra.mxu0 0.0
  %1514 = vmatprep.subr.mxu0 0.0
  %1515 = vmatpush1.msra.mxu0 0.0
  %1516 = vmatprep.subr.mxu0 0.0
  %1517 = vmatpush1.msra.mxu0 0.0
  %1518 = vmatprep.subr.mxu0 0.0
  %1519 = vmatpush1.msra.mxu0 0.0
  %1520 = vmatprep.subr.mxu0 0.0
  %1521 = vmatpush1.msra.mxu0 0.0
  %1522 = vmatprep.subr.mxu0 0.0
  %1523 = vmatpush1.msra.mxu0 0.0
  %1524 = vmatprep.subr.mxu0 0.0
  %1525 = vmatpush1.msra.mxu0 0.0
  %1526 = vmatprep.subr.mxu0 0.0
  %1527 = vmatpush1.msra.mxu0 0.0
  %1528 = vmatprep.subr.mxu0 0.0
  %1529 = vmatpush1.msra.mxu0 0.0
  %1530 = vmatprep.subr.mxu0 0.0
  %1531 = vmatpush1.msra.mxu0 0.0
  %1532 = vmatprep.subr.mxu0 0.0
  %1533 = vmatpush1.msra.mxu0 0.0
  %1534 = vmatprep.subr.mxu0 0.0
  %1535 = vmatpush1.msra.mxu0 0.0
  %1536 = vmatprep.subr.mxu0 0.0
  %1537 = vmatpush1.msra.mxu0 0.0
  %1538 = vmatprep.subr.mxu0 0.0
  %1539 = vmatpush1.msra.mxu0 0.0
  %1540 = vmatprep.subr.mxu0 0.0
  %1541 = vmatpush1.msra.mxu0 0.0
  %1542 = vmatprep.subr.mxu0 0.0
  %1543 = vmatpush1.msra.mxu0 0.0
  %1544 = vmatprep.subr.mxu0 0.0
  %1545 = vmatpush1.msra.mxu0 0.0
  %1546 = vmatprep.subr.mxu0 0.0
  %1547 = vmatpush1.msra.mxu0 0.0
  %1548 = vmatprep.subr.mxu0 0.0
  %1549 = vmatpush1.msra.mxu0 0.0
  %1550 = vmatprep.subr.mxu0 0.0
  %1551 = vmatpush1.msra.mxu0 0.0
  %1552 = vmatprep.mubr.f32.mxu0 0.0
  %1553 = vmatmul.mubr.f32.gmra.mrb[0].mxu0 %v1486
  %v1554 = vpop.f32.mrb[0].mxu0
  %v1555 = vadd.f32 0.0, %v1554
  %v1556 = vpop.f32.mrb[0].mxu0
  %1557 = vdwg.mxu0
  %v1558 = vadd.f32 %v1481, %v1555
  %s1559 = scalar_lea.vmem %s3, 64
  %v1560 = vld [vmem:[%s1559] sm:$0xff]
  %v1561 = vld [vmem:[%s1559 + $0x8] sm:$0xff]
  %v1563 = vsel %vm1258, %v1232, 0
  %1565 = vmatprep.subr.mxu0 0.0
  %1566 = vmatpush1.msra.mxu0 %v1560
  %1567 = vmatprep.subr.mxu0 0.0
  %1568 = vmatpush1.msra.mxu0 %v1561
  %1569 = vmatprep.subr.mxu0 0.0
  %1570 = vmatpush1.msra.mxu0 0.0
  %1571 = vmatprep.subr.mxu0 0.0
  %1572 = vmatpush1.msra.mxu0 0.0
  %1573 = vmatprep.subr.mxu0 0.0
  %1574 = vmatpush1.msra.mxu0 0.0
  %1575 = vmatprep.subr.mxu0 0.0
  %1576 = vmatpush1.msra.mxu0 0.0
  %1577 = vmatprep.subr.mxu0 0.0
  %1578 = vmatpush1.msra.mxu0 0.0
  %1579 = vmatprep.subr.mxu0 0.0
  %1580 = vmatpush1.msra.mxu0 0.0
  %1581 = vmatprep.subr.mxu0 0.0
  %1582 = vmatpush1.msra.mxu0 0.0
  %1583 = vmatprep.subr.mxu0 0.0
  %1584 = vmatpush1.msra.mxu0 0.0
  %1585 = vmatprep.subr.mxu0 0.0
  %1586 = vmatpush1.msra.mxu0 0.0
  %1587 = vmatprep.subr.mxu0 0.0
  %1588 = vmatpush1.msra.mxu0 0.0
  %1589 = vmatprep.subr.mxu0 0.0
  %1590 = vmatpush1.msra.mxu0 0.0
  %1591 = vmatprep.subr.mxu0 0.0
  %1592 = vmatpush1.msra.mxu0 0.0
  %1593 = vmatprep.subr.mxu0 0.0
  %1594 = vmatpush1.msra.mxu0 0.0
  %1595 = vmatprep.subr.mxu0 0.0
  %1596 = vmatpush1.msra.mxu0 0.0
  %1597 = vmatprep.subr.mxu0 0.0
  %1598 = vmatpush1.msra.mxu0 0.0
  %1599 = vmatprep.subr.mxu0 0.0
  %1600 = vmatpush1.msra.mxu0 0.0
  %1601 = vmatprep.subr.mxu0 0.0
  %1602 = vmatpush1.msra.mxu0 0.0
  %1603 = vmatprep.subr.mxu0 0.0
  %1604 = vmatpush1.msra.mxu0 0.0
  %1605 = vmatprep.subr.mxu0 0.0
  %1606 = vmatpush1.msra.mxu0 0.0
  %1607 = vmatprep.subr.mxu0 0.0
  %1608 = vmatpush1.msra.mxu0 0.0
  %1609 = vmatprep.subr.mxu0 0.0
  %1610 = vmatpush1.msra.mxu0 0.0
  %1611 = vmatprep.subr.mxu0 0.0
  %1612 = vmatpush1.msra.mxu0 0.0
  %1613 = vmatprep.subr.mxu0 0.0
  %1614 = vmatpush1.msra.mxu0 0.0
  %1615 = vmatprep.subr.mxu0 0.0
  %1616 = vmatpush1.msra.mxu0 0.0
  %1617 = vmatprep.subr.mxu0 0.0
  %1618 = vmatpush1.msra.mxu0 0.0
  %1619 = vmatprep.subr.mxu0 0.0
  %1620 = vmatpush1.msra.mxu0 0.0
  %1621 = vmatprep.subr.mxu0 0.0
  %1622 = vmatpush1.msra.mxu0 0.0
  %1623 = vmatprep.subr.mxu0 0.0
  %1624 = vmatpush1.msra.mxu0 0.0
  %1625 = vmatprep.subr.mxu0 0.0
  %1626 = vmatpush1.msra.mxu0 0.0
  %1627 = vmatprep.subr.mxu0 0.0
  %1628 = vmatpush1.msra.mxu0 0.0
  %1629 = vmatprep.mubr.f32.mxu0 0.0
  %1630 = vmatmul.mubr.f32.gmra.mrb[0].mxu0 %v1563
  %v1631 = vpop.f32.mrb[0].mxu0
  %v1632 = vadd.f32 0.0, %v1631
  %v1633 = vpop.f32.mrb[0].mxu0
  %1634 = vdwg.mxu0
  %v1635 = vadd.f32 %v1558, %v1632
  %s1636 = scalar_lea.vmem %s3, 80
  %v1637 = vld [vmem:[%s1636] sm:$0xff]
  %v1638 = vld [vmem:[%s1636 + $0x8] sm:$0xff]
  %v1640 = vsel %vm1258, %v1233, 0
  %1642 = vmatprep.subr.mxu0 0.0
  %1643 = vmatpush1.msra.mxu0 %v1637
  %1644 = vmatprep.subr.mxu0 0.0
  %1645 = vmatpush1.msra.mxu0 %v1638
  %1646 = vmatprep.subr.mxu0 0.0
  %1647 = vmatpush1.msra.mxu0 0.0
  %1648 = vmatprep.subr.mxu0 0.0
  %1649 = vmatpush1.msra.mxu0 0.0
  %1650 = vmatprep.subr.mxu0 0.0
  %1651 = vmatpush1.msra.mxu0 0.0
  %1652 = vmatprep.subr.mxu0 0.0
  %1653 = vmatpush1.msra.mxu0 0.0
  %1654 = vmatprep.subr.mxu0 0.0
  %1655 = vmatpush1.msra.mxu0 0.0
  %1656 = vmatprep.subr.mxu0 0.0
  %1657 = vmatpush1.msra.mxu0 0.0
  %1658 = vmatprep.subr.mxu0 0.0
  %1659 = vmatpush1.msra.mxu0 0.0
  %1660 = vmatprep.subr.mxu0 0.0
  %1661 = vmatpush1.msra.mxu0 0.0
  %1662 = vmatprep.subr.mxu0 0.0
  %1663 = vmatpush1.msra.mxu0 0.0
  %1664 = vmatprep.subr.mxu0 0.0
  %1665 = vmatpush1.msra.mxu0 0.0
  %1666 = vmatprep.subr.mxu0 0.0
  %1667 = vmatpush1.msra.mxu0 0.0
  %1668 = vmatprep.subr.mxu0 0.0
  %1669 = vmatpush1.msra.mxu0 0.0
  %1670 = vmatprep.subr.mxu0 0.0
  %1671 = vmatpush1.msra.mxu0 0.0
  %1672 = vmatprep.subr.mxu0 0.0
  %1673 = vmatpush1.msra.mxu0 0.0
  %1674 = vmatprep.subr.mxu0 0.0
  %1675 = vmatpush1.msra.mxu0 0.0
  %1676 = vmatprep.subr.mxu0 0.0
  %1677 = vmatpush1.msra.mxu0 0.0
  %1678 = vmatprep.subr.mxu0 0.0
  %1679 = vmatpush1.msra.mxu0 0.0
  %1680 = vmatprep.subr.mxu0 0.0
  %1681 = vmatpush1.msra.mxu0 0.0
  %1682 = vmatprep.subr.mxu0 0.0
  %1683 = vmatpush1.msra.mxu0 0.0
  %1684 = vmatprep.subr.mxu0 0.0
  %1685 = vmatpush1.msra.mxu0 0.0
  %1686 = vmatprep.subr.mxu0 0.0
  %1687 = vmatpush1.msra.mxu0 0.0
  %1688 = vmatprep.subr.mxu0 0.0
  %1689 = vmatpush1.msra.mxu0 0.0
  %1690 = vmatprep.subr.mxu0 0.0
  %1691 = vmatpush1.msra.mxu0 0.0
  %1692 = vmatprep.subr.mxu0 0.0
  %1693 = vmatpush1.msra.mxu0 0.0
  %1694 = vmatprep.subr.mxu0 0.0
  %1695 = vmatpush1.msra.mxu0 0.0
  %1696 = vmatprep.subr.mxu0 0.0
  %1697 = vmatpush1.msra.mxu0 0.0
  %1698 = vmatprep.subr.mxu0 0.0
  %1699 = vmatpush1.msra.mxu0 0.0
  %1700 = vmatprep.subr.mxu0 0.0
  %1701 = vmatpush1.msra.mxu0 0.0
  %1702 = vmatprep.subr.mxu0 0.0
  %1703 = vmatpush1.msra.mxu0 0.0
  %1704 = vmatprep.subr.mxu0 0.0
  %1705 = vmatpush1.msra.mxu0 0.0
  %1706 = vmatprep.mubr.f32.mxu0 0.0
  %1707 = vmatmul.mubr.f32.gmra.mrb[0].mxu0 %v1640
  %v1708 = vpop.f32.mrb[0].mxu0
  %v1709 = vadd.f32 0.0, %v1708
  %v1710 = vpop.f32.mrb[0].mxu0
  %1711 = vdwg.mxu0
  %v1712 = vadd.f32 %v1635, %v1709
  %s1713 = scalar_lea.vmem %s3, 96
  %v1714 = vld [vmem:[%s1713] sm:$0xff]
  %v1715 = vld [vmem:[%s1713 + $0x8] sm:$0xff]
  %v1717 = vsel %vm1258, %v1234, 0
  %1719 = vmatprep.subr.mxu0 0.0
  %1720 = vmatpush1.msra.mxu0 %v1714
  %1721 = vmatprep.subr.mxu0 0.0
  %1722 = vmatpush1.msra.mxu0 %v1715
  %1723 = vmatprep.subr.mxu0 0.0
  %1724 = vmatpush1.msra.mxu0 0.0
  %1725 = vmatprep.subr.mxu0 0.0
  %1726 = vmatpush1.msra.mxu0 0.0
  %1727 = vmatprep.subr.mxu0 0.0
  %1728 = vmatpush1.msra.mxu0 0.0
  %1729 = vmatprep.subr.mxu0 0.0
  %1730 = vmatpush1.msra.mxu0 0.0
  %1731 = vmatprep.subr.mxu0 0.0
  %1732 = vmatpush1.msra.mxu0 0.0
  %1733 = vmatprep.subr.mxu0 0.0
  %1734 = vmatpush1.msra.mxu0 0.0
  %1735 = vmatprep.subr.mxu0 0.0
  %1736 = vmatpush1.msra.mxu0 0.0
  %1737 = vmatprep.subr.mxu0 0.0
  %1738 = vmatpush1.msra.mxu0 0.0
  %1739 = vmatprep.subr.mxu0 0.0
  %1740 = vmatpush1.msra.mxu0 0.0
  %1741 = vmatprep.subr.mxu0 0.0
  %1742 = vmatpush1.msra.mxu0 0.0
  %1743 = vmatprep.subr.mxu0 0.0
  %1744 = vmatpush1.msra.mxu0 0.0
  %1745 = vmatprep.subr.mxu0 0.0
  %1746 = vmatpush1.msra.mxu0 0.0
  %1747 = vmatprep.subr.mxu0 0.0
  %1748 = vmatpush1.msra.mxu0 0.0
  %1749 = vmatprep.subr.mxu0 0.0
  %1750 = vmatpush1.msra.mxu0 0.0
  %1751 = vmatprep.subr.mxu0 0.0
  %1752 = vmatpush1.msra.mxu0 0.0
  %1753 = vmatprep.subr.mxu0 0.0
  %1754 = vmatpush1.msra.mxu0 0.0
  %1755 = vmatprep.subr.mxu0 0.0
  %1756 = vmatpush1.msra.mxu0 0.0
  %1757 = vmatprep.subr.mxu0 0.0
  %1758 = vmatpush1.msra.mxu0 0.0
  %1759 = vmatprep.subr.mxu0 0.0
  %1760 = vmatpush1.msra.mxu0 0.0
  %1761 = vmatprep.subr.mxu0 0.0
  %1762 = vmatpush1.msra.mxu0 0.0
  %1763 = vmatprep.subr.mxu0 0.0
  %1764 = vmatpush1.msra.mxu0 0.0
  %1765 = vmatprep.subr.mxu0 0.0
  %1766 = vmatpush1.msra.mxu0 0.0
  %1767 = vmatprep.subr.mxu0 0.0
  %1768 = vmatpush1.msra.mxu0 0.0
  %1769 = vmatprep.subr.mxu0 0.0
  %1770 = vmatpush1.msra.mxu0 0.0
  %1771 = vmatprep.subr.mxu0 0.0
  %1772 = vmatpush1.msra.mxu0 0.0
  %1773 = vmatprep.subr.mxu0 0.0
  %1774 = vmatpush1.msra.mxu0 0.0
  %1775 = vmatprep.subr.mxu0 0.0
  %1776 = vmatpush1.msra.mxu0 0.0
  %1777 = vmatprep.subr.mxu0 0.0
  %1778 = vmatpush1.msra.mxu0 0.0
  %1779 = vmatprep.subr.mxu0 0.0
  %1780 = vmatpush1.msra.mxu0 0.0
  %1781 = vmatprep.subr.mxu0 0.0
  %1782 = vmatpush1.msra.mxu0 0.0
  %1783 = vmatprep.mubr.f32.mxu0 0.0
  %1784 = vmatmul.mubr.f32.gmra.mrb[0].mxu0 %v1717
  %v1785 = vpop.f32.mrb[0].mxu0
  %v1786 = vadd.f32 0.0, %v1785
  %v1787 = vpop.f32.mrb[0].mxu0
  %1788 = vdwg.mxu0
  %v1789 = vadd.f32 %v1712, %v1786
  %s1790 = scalar_lea.vmem %s3, 112
  %v1791 = vld [vmem:[%s1790] sm:$0xff]
  %v1792 = vld [vmem:[%s1790 + $0x8] sm:$0xff]
  %v1794 = vsel %vm1258, %v1235, 0
  %1796 = vmatprep.subr.mxu0 0.0
  %1797 = vmatpush1.msra.mxu0 %v1791
  %1798 = vmatprep.subr.mxu0 0.0
  %1799 = vmatpush1.msra.mxu0 %v1792
  %1800 = vmatprep.subr.mxu0 0.0
  %1801 = vmatpush1.msra.mxu0 0.0
  %1802 = vmatprep.subr.mxu0 0.0
  %1803 = vmatpush1.msra.mxu0 0.0
  %1804 = vmatprep.subr.mxu0 0.0
  %1805 = vmatpush1.msra.mxu0 0.0
  %1806 = vmatprep.subr.mxu0 0.0
  %1807 = vmatpush1.msra.mxu0 0.0
  %1808 = vmatprep.subr.mxu0 0.0
  %1809 = vmatpush1.msra.mxu0 0.0
  %1810 = vmatprep.subr.mxu0 0.0
  %1811 = vmatpush1.msra.mxu0 0.0
  %1812 = vmatprep.subr.mxu0 0.0
  %1813 = vmatpush1.msra.mxu0 0.0
  %1814 = vmatprep.subr.mxu0 0.0
  %1815 = vmatpush1.msra.mxu0 0.0
  %1816 = vmatprep.subr.mxu0 0.0
  %1817 = vmatpush1.msra.mxu0 0.0
  %1818 = vmatprep.subr.mxu0 0.0
  %1819 = vmatpush1.msra.mxu0 0.0
  %1820 = vmatprep.subr.mxu0 0.0
  %1821 = vmatpush1.msra.mxu0 0.0
  %1822 = vmatprep.subr.mxu0 0.0
  %1823 = vmatpush1.msra.mxu0 0.0
  %1824 = vmatprep.subr.mxu0 0.0
  %1825 = vmatpush1.msra.mxu0 0.0
  %1826 = vmatprep.subr.mxu0 0.0
  %1827 = vmatpush1.msra.mxu0 0.0
  %1828 = vmatprep.subr.mxu0 0.0
  %1829 = vmatpush1.msra.mxu0 0.0
  %1830 = vmatprep.subr.mxu0 0.0
  %1831 = vmatpush1.msra.mxu0 0.0
  %1832 = vmatprep.subr.mxu0 0.0
  %1833 = vmatpush1.msra.mxu0 0.0
  %1834 = vmatprep.subr.mxu0 0.0
  %1835 = vmatpush1.msra.mxu0 0.0
  %1836 = vmatprep.subr.mxu0 0.0
  %1837 = vmatpush1.msra.mxu0 0.0
  %1838 = vmatprep.subr.mxu0 0.0
  %1839 = vmatpush1.msra.mxu0 0.0
  %1840 = vmatprep.subr.mxu0 0.0
  %1841 = vmatpush1.msra.mxu0 0.0
  %1842 = vmatprep.subr.mxu0 0.0
  %1843 = vmatpush1.msra.mxu0 0.0
  %1844 = vmatprep.subr.mxu0 0.0
  %1845 = vmatpush1.msra.mxu0 0.0
  %1846 = vmatprep.subr.mxu0 0.0
  %1847 = vmatpush1.msra.mxu0 0.0
  %1848 = vmatprep.subr.mxu0 0.0
  %1849 = vmatpush1.msra.mxu0 0.0
  %1850 = vmatprep.subr.mxu0 0.0
  %1851 = vmatpush1.msra.mxu0 0.0
  %1852 = vmatprep.subr.mxu0 0.0
  %1853 = vmatpush1.msra.mxu0 0.0
  %1854 = vmatprep.subr.mxu0 0.0
  %1855 = vmatpush1.msra.mxu0 0.0
  %1856 = vmatprep.subr.mxu0 0.0
  %1857 = vmatpush1.msra.mxu0 0.0
  %1858 = vmatprep.subr.mxu0 0.0
  %1859 = vmatpush1.msra.mxu0 0.0
  %1860 = vmatprep.mubr.f32.mxu0 0.0
  %1861 = vmatmul.mubr.f32.gmra.mrb[0].mxu0 %v1794
  %v1862 = vpop.f32.mrb[0].mxu0
  %v1863 = vadd.f32 0.0, %v1862
  %v1864 = vpop.f32.mrb[0].mxu0
  %1865 = vdwg.mxu0
  %v1866 = vadd.f32 %v1789, %v1863
  %s1867 = scalar_lea.vmem %s3, 128
  %v1868 = vld [vmem:[%s1867] sm:$0xff]
  %v1869 = vld [vmem:[%s1867 + $0x8] sm:$0xff]
  %v1871 = vsel %vm1258, %v1236, 0
  %1873 = vmatprep.subr.mxu0 0.0
  %1874 = vmatpush1.msra.mxu0 %v1868
  %1875 = vmatprep.subr.mxu0 0.0
  %1876 = vmatpush1.msra.mxu0 %v1869
  %1877 = vmatprep.subr.mxu0 0.0
  %1878 = vmatpush1.msra.mxu0 0.0
  %1879 = vmatprep.subr.mxu0 0.0
  %1880 = vmatpush1.msra.mxu0 0.0
  %1881 = vmatprep.subr.mxu0 0.0
  %1882 = vmatpush1.msra.mxu0 0.0
  %1883 = vmatprep.subr.mxu0 0.0
  %1884 = vmatpush1.msra.mxu0 0.0
  %1885 = vmatprep.subr.mxu0 0.0
  %1886 = vmatpush1.msra.mxu0 0.0
  %1887 = vmatprep.subr.mxu0 0.0
  %1888 = vmatpush1.msra.mxu0 0.0
  %1889 = vmatprep.subr.mxu0 0.0
  %1890 = vmatpush1.msra.mxu0 0.0
  %1891 = vmatprep.subr.mxu0 0.0
  %1892 = vmatpush1.msra.mxu0 0.0
  %1893 = vmatprep.subr.mxu0 0.0
  %1894 = vmatpush1.msra.mxu0 0.0
  %1895 = vmatprep.subr.mxu0 0.0
  %1896 = vmatpush1.msra.mxu0 0.0
  %1897 = vmatprep.subr.mxu0 0.0
  %1898 = vmatpush1.msra.mxu0 0.0
  %1899 = vmatprep.subr.mxu0 0.0
  %1900 = vmatpush1.msra.mxu0 0.0
  %1901 = vmatprep.subr.mxu0 0.0
  %1902 = vmatpush1.msra.mxu0 0.0
  %1903 = vmatprep.subr.mxu0 0.0
  %1904 = vmatpush1.msra.mxu0 0.0
  %1905 = vmatprep.subr.mxu0 0.0
  %1906 = vmatpush1.msra.mxu0 0.0
  %1907 = vmatprep.subr.mxu0 0.0
  %1908 = vmatpush1.msra.mxu0 0.0
  %1909 = vmatprep.subr.mxu0 0.0
  %1910 = vmatpush1.msra.mxu0 0.0
  %1911 = vmatprep.subr.mxu0 0.0
  %1912 = vmatpush1.msra.mxu0 0.0
  %1913 = vmatprep.subr.mxu0 0.0
  %1914 = vmatpush1.msra.mxu0 0.0
  %1915 = vmatprep.subr.mxu0 0.0
  %1916 = vmatpush1.msra.mxu0 0.0
  %1917 = vmatprep.subr.mxu0 0.0
  %1918 = vmatpush1.msra.mxu0 0.0
  %1919 = vmatprep.subr.mxu0 0.0
  %1920 = vmatpush1.msra.mxu0 0.0
  %1921 = vmatprep.subr.mxu0 0.0
  %1922 = vmatpush1.msra.mxu0 0.0
  %1923 = vmatprep.subr.mxu0 0.0
  %1924 = vmatpush1.msra.mxu0 0.0
  %1925 = vmatprep.subr.mxu0 0.0
  %1926 = vmatpush1.msra.mxu0 0.0
  %1927 = vmatprep.subr.mxu0 0.0
  %1928 = vmatpush1.msra.mxu0 0.0
  %1929 = vmatprep.subr.mxu0 0.0
  %1930 = vmatpush1.msra.mxu0 0.0
  %1931 = vmatprep.subr.mxu0 0.0
  %1932 = vmatpush1.msra.mxu0 0.0
  %1933 = vmatprep.subr.mxu0 0.0
  %1934 = vmatpush1.msra.mxu0 0.0
  %1935 = vmatprep.subr.mxu0 0.0
  %1936 = vmatpush1.msra.mxu0 0.0
  %1937 = vmatprep.mubr.f32.mxu0 0.0
  %1938 = vmatmul.mubr.f32.gmra.mrb[0].mxu0 %v1871
  %v1939 = vpop.f32.mrb[0].mxu0
  %v1940 = vadd.f32 0.0, %v1939
  %v1941 = vpop.f32.mrb[0].mxu0
  %1942 = vdwg.mxu0
  %v1943 = vadd.f32 %v1866, %v1940
  %s1944 = scalar_lea.vmem %s3, 144
  %v1945 = vld [vmem:[%s1944] sm:$0xff]
  %v1946 = vld [vmem:[%s1944 + $0x8] sm:$0xff]
  %v1948 = vsel %vm1258, %v1237, 0
  %1950 = vmatprep.subr.mxu0 0.0
  %1951 = vmatpush1.msra.mxu0 %v1945
  %1952 = vmatprep.subr.mxu0 0.0
  %1953 = vmatpush1.msra.mxu0 %v1946
  %1954 = vmatprep.subr.mxu0 0.0
  %1955 = vmatpush1.msra.mxu0 0.0
  %1956 = vmatprep.subr.mxu0 0.0
  %1957 = vmatpush1.msra.mxu0 0.0
  %1958 = vmatprep.subr.mxu0 0.0
  %1959 = vmatpush1.msra.mxu0 0.0
  %1960 = vmatprep.subr.mxu0 0.0
  %1961 = vmatpush1.msra.mxu0 0.0
  %1962 = vmatprep.subr.mxu0 0.0
  %1963 = vmatpush1.msra.mxu0 0.0
  %1964 = vmatprep.subr.mxu0 0.0
  %1965 = vmatpush1.msra.mxu0 0.0
  %1966 = vmatprep.subr.mxu0 0.0
  %1967 = vmatpush1.msra.mxu0 0.0
  %1968 = vmatprep.subr.mxu0 0.0
  %1969 = vmatpush1.msra.mxu0 0.0
  %1970 = vmatprep.subr.mxu0 0.0
  %1971 = vmatpush1.msra.mxu0 0.0
  %1972 = vmatprep.subr.mxu0 0.0
  %1973 = vmatpush1.msra.mxu0 0.0
  %1974 = vmatprep.subr.mxu0 0.0
  %1975 = vmatpush1.msra.mxu0 0.0
  %1976 = vmatprep.subr.mxu0 0.0
  %1977 = vmatpush1.msra.mxu0 0.0
  %1978 = vmatprep.subr.mxu0 0.0
  %1979 = vmatpush1.msra.mxu0 0.0
  %1980 = vmatprep.subr.mxu0 0.0
  %1981 = vmatpush1.msra.mxu0 0.0
  %1982 = vmatprep.subr.mxu0 0.0
  %1983 = vmatpush1.msra.mxu0 0.0
  %1984 = vmatprep.subr.mxu0 0.0
  %1985 = vmatpush1.msra.mxu0 0.0
  %1986 = vmatprep.subr.mxu0 0.0
  %1987 = vmatpush1.msra.mxu0 0.0
  %1988 = vmatprep.subr.mxu0 0.0
  %1989 = vmatpush1.msra.mxu0 0.0
  %1990 = vmatprep.subr.mxu0 0.0
  %1991 = vmatpush1.msra.mxu0 0.0
  %1992 = vmatprep.subr.mxu0 0.0
  %1993 = vmatpush1.msra.mxu0 0.0
  %1994 = vmatprep.subr.mxu0 0.0
  %1995 = vmatpush1.msra.mxu0 0.0
  %1996 = vmatprep.subr.mxu0 0.0
  %1997 = vmatpush1.msra.mxu0 0.0
  %1998 = vmatprep.subr.mxu0 0.0
  %1999 = vmatpush1.msra.mxu0 0.0
  %2000 = vmatprep.subr.mxu0 0.0
  %2001 = vmatpush1.msra.mxu0 0.0
  %2002 = vmatprep.subr.mxu0 0.0
  %2003 = vmatpush1.msra.mxu0 0.0
  %2004 = vmatprep.subr.mxu0 0.0
  %2005 = vmatpush1.msra.mxu0 0.0
  %2006 = vmatprep.subr.mxu0 0.0
  %2007 = vmatpush1.msra.mxu0 0.0
  %2008 = vmatprep.subr.mxu0 0.0
  %2009 = vmatpush1.msra.mxu0 0.0
  %2010 = vmatprep.subr.mxu0 0.0
  %2011 = vmatpush1.msra.mxu0 0.0
  %2012 = vmatprep.subr.mxu0 0.0
  %2013 = vmatpush1.msra.mxu0 0.0
  %2014 = vmatprep.mubr.f32.mxu0 0.0
  %2015 = vmatmul.mubr.f32.gmra.mrb[0].mxu0 %v1948
  %v2016 = vpop.f32.mrb[0].mxu0
  %v2017 = vadd.f32 0.0, %v2016
  %v2018 = vpop.f32.mrb[0].mxu0
  %2019 = vdwg.mxu0
  %v2020 = vadd.f32 %v1943, %v2017
  %s2021 = scalar_lea.vmem %s3, 160
  %v2022 = vld [vmem:[%s2021] sm:$0xff]
  %v2023 = vld [vmem:[%s2021 + $0x8] sm:$0xff]
  %v2025 = vsel %vm1258, %v1238, 0
  %2027 = vmatprep.subr.mxu0 0.0
  %2028 = vmatpush1.msra.mxu0 %v2022
  %2029 = vmatprep.subr.mxu0 0.0
  %2030 = vmatpush1.msra.mxu0 %v2023
  %2031 = vmatprep.subr.mxu0 0.0
  %2032 = vmatpush1.msra.mxu0 0.0
  %2033 = vmatprep.subr.mxu0 0.0
  %2034 = vmatpush1.msra.mxu0 0.0
  %2035 = vmatprep.subr.mxu0 0.0
  %2036 = vmatpush1.msra.mxu0 0.0
  %2037 = vmatprep.subr.mxu0 0.0
  %2038 = vmatpush1.msra.mxu0 0.0
  %2039 = vmatprep.subr.mxu0 0.0
  %2040 = vmatpush1.msra.mxu0 0.0
  %2041 = vmatprep.subr.mxu0 0.0
  %2042 = vmatpush1.msra.mxu0 0.0
  %2043 = vmatprep.subr.mxu0 0.0
  %2044 = vmatpush1.msra.mxu0 0.0
  %2045 = vmatprep.subr.mxu0 0.0
  %2046 = vmatpush1.msra.mxu0 0.0
  %2047 = vmatprep.subr.mxu0 0.0
  %2048 = vmatpush1.msra.mxu0 0.0
  %2049 = vmatprep.subr.mxu0 0.0
  %2050 = vmatpush1.msra.mxu0 0.0
  %2051 = vmatprep.subr.mxu0 0.0
  %2052 = vmatpush1.msra.mxu0 0.0
  %2053 = vmatprep.subr.mxu0 0.0
  %2054 = vmatpush1.msra.mxu0 0.0
  %2055 = vmatprep.subr.mxu0 0.0
  %2056 = vmatpush1.msra.mxu0 0.0
  %2057 = vmatprep.subr.mxu0 0.0
  %2058 = vmatpush1.msra.mxu0 0.0
  %2059 = vmatprep.subr.mxu0 0.0
  %2060 = vmatpush1.msra.mxu0 0.0
  %2061 = vmatprep.subr.mxu0 0.0
  %2062 = vmatpush1.msra.mxu0 0.0
  %2063 = vmatprep.subr.mxu0 0.0
  %2064 = vmatpush1.msra.mxu0 0.0
  %2065 = vmatprep.subr.mxu0 0.0
  %2066 = vmatpush1.msra.mxu0 0.0
  %2067 = vmatprep.subr.mxu0 0.0
  %2068 = vmatpush1.msra.mxu0 0.0
  %2069 = vmatprep.subr.mxu0 0.0
  %2070 = vmatpush1.msra.mxu0 0.0
  %2071 = vmatprep.subr.mxu0 0.0
  %2072 = vmatpush1.msra.mxu0 0.0
  %2073 = vmatprep.subr.mxu0 0.0
  %2074 = vmatpush1.msra.mxu0 0.0
  %2075 = vmatprep.subr.mxu0 0.0
  %2076 = vmatpush1.msra.mxu0 0.0
  %2077 = vmatprep.subr.mxu0 0.0
  %2078 = vmatpush1.msra.mxu0 0.0
  %2079 = vmatprep.subr.mxu0 0.0
  %2080 = vmatpush1.msra.mxu0 0.0
  %2081 = vmatprep.subr.mxu0 0.0
  %2082 = vmatpush1.msra.mxu0 0.0
  %2083 = vmatprep.subr.mxu0 0.0
  %2084 = vmatpush1.msra.mxu0 0.0
  %2085 = vmatprep.subr.mxu0 0.0
  %2086 = vmatpush1.msra.mxu0 0.0
  %2087 = vmatprep.subr.mxu0 0.0
  %2088 = vmatpush1.msra.mxu0 0.0
  %2089 = vmatprep.subr.mxu0 0.0
  %2090 = vmatpush1.msra.mxu0 0.0
  %2091 = vmatprep.mubr.f32.mxu0 0.0
  %2092 = vmatmul.mubr.f32.gmra.mrb[0].mxu0 %v2025
  %v2093 = vpop.f32.mrb[0].mxu0
  %v2094 = vadd.f32 0.0, %v2093
  %v2095 = vpop.f32.mrb[0].mxu0
  %2096 = vdwg.mxu0
  %v2097 = vadd.f32 %v2020, %v2094
  %s2098 = scalar_lea.vmem %s3, 176
  %v2099 = vld [vmem:[%s2098] sm:$0xff]
  %v2100 = vld [vmem:[%s2098 + $0x8] sm:$0xff]
  %v2102 = vsel %vm1258, %v1239, 0
  %2104 = vmatprep.subr.mxu0 0.0
  %2105 = vmatpush1.msra.mxu0 %v2099
  %2106 = vmatprep.subr.mxu0 0.0
  %2107 = vmatpush1.msra.mxu0 %v2100
  %2108 = vmatprep.subr.mxu0 0.0
  %2109 = vmatpush1.msra.mxu0 0.0
  %2110 = vmatprep.subr.mxu0 0.0
  %2111 = vmatpush1.msra.mxu0 0.0
  %2112 = vmatprep.subr.mxu0 0.0
  %2113 = vmatpush1.msra.mxu0 0.0
  %2114 = vmatprep.subr.mxu0 0.0
  %2115 = vmatpush1.msra.mxu0 0.0
  %2116 = vmatprep.subr.mxu0 0.0
  %2117 = vmatpush1.msra.mxu0 0.0
  %2118 = vmatprep.subr.mxu0 0.0
  %2119 = vmatpush1.msra.mxu0 0.0
  %2120 = vmatprep.subr.mxu0 0.0
  %2121 = vmatpush1.msra.mxu0 0.0
  %2122 = vmatprep.subr.mxu0 0.0
  %2123 = vmatpush1.msra.mxu0 0.0
  %2124 = vmatprep.subr.mxu0 0.0
  %2125 = vmatpush1.msra.mxu0 0.0
  %2126 = vmatprep.subr.mxu0 0.0
  %2127 = vmatpush1.msra.mxu0 0.0
  %2128 = vmatprep.subr.mxu0 0.0
  %2129 = vmatpush1.msra.mxu0 0.0
  %2130 = vmatprep.subr.mxu0 0.0
  %2131 = vmatpush1.msra.mxu0 0.0
  %2132 = vmatprep.subr.mxu0 0.0
  %2133 = vmatpush1.msra.mxu0 0.0
  %2134 = vmatprep.subr.mxu0 0.0
  %2135 = vmatpush1.msra.mxu0 0.0
  %2136 = vmatprep.subr.mxu0 0.0
  %2137 = vmatpush1.msra.mxu0 0.0
  %2138 = vmatprep.subr.mxu0 0.0
  %2139 = vmatpush1.msra.mxu0 0.0
  %2140 = vmatprep.subr.mxu0 0.0
  %2141 = vmatpush1.msra.mxu0 0.0
  %2142 = vmatprep.subr.mxu0 0.0
  %2143 = vmatpush1.msra.mxu0 0.0
  %2144 = vmatprep.subr.mxu0 0.0
  %2145 = vmatpush1.msra.mxu0 0.0
  %2146 = vmatprep.subr.mxu0 0.0
  %2147 = vmatpush1.msra.mxu0 0.0
  %2148 = vmatprep.subr.mxu0 0.0
  %2149 = vmatpush1.msra.mxu0 0.0
  %2150 = vmatprep.subr.mxu0 0.0
  %2151 = vmatpush1.msra.mxu0 0.0
  %2152 = vmatprep.subr.mxu0 0.0
  %2153 = vmatpush1.msra.mxu0 0.0
  %2154 = vmatprep.subr.mxu0 0.0
  %2155 = vmatpush1.msra.mxu0 0.0
  %2156 = vmatprep.subr.mxu0 0.0
  %2157 = vmatpush1.msra.mxu0 0.0
  %2158 = vmatprep.subr.mxu0 0.0
  %2159 = vmatpush1.msra.mxu0 0.0
  %2160 = vmatprep.subr.mxu0 0.0
  %2161 = vmatpush1.msra.mxu0 0.0
  %2162 = vmatprep.subr.mxu0 0.0
  %2163 = vmatpush1.msra.mxu0 0.0
  %2164 = vmatprep.subr.mxu0 0.0
  %2165 = vmatpush1.msra.mxu0 0.0
  %2166 = vmatprep.subr.mxu0 0.0
  %2167 = vmatpush1.msra.mxu0 0.0
  %2168 = vmatprep.mubr.f32.mxu0 0.0
  %2169 = vmatmul.mubr.f32.gmra.mrb[0].mxu0 %v2102
  %v2170 = vpop.f32.mrb[0].mxu0
  %v2171 = vadd.f32 0.0, %v2170
  %v2172 = vpop.f32.mrb[0].mxu0
  %2173 = vdwg.mxu0
  %v2174 = vadd.f32 %v2097, %v2171
  %s2175 = scalar_lea.vmem %s3, 192
  %v2176 = vld [vmem:[%s2175] sm:$0xff]
  %v2177 = vld [vmem:[%s2175 + $0x8] sm:$0xff]
  %v2179 = vsel %vm1258, %v1240, 0
  %2181 = vmatprep.subr.mxu0 0.0
  %2182 = vmatpush1.msra.mxu0 %v2176
  %2183 = vmatprep.subr.mxu0 0.0
  %2184 = vmatpush1.msra.mxu0 %v2177
  %2185 = vmatprep.subr.mxu0 0.0
  %2186 = vmatpush1.msra.mxu0 0.0
  %2187 = vmatprep.subr.mxu0 0.0
  %2188 = vmatpush1.msra.mxu0 0.0
  %2189 = vmatprep.subr.mxu0 0.0
  %2190 = vmatpush1.msra.mxu0 0.0
  %2191 = vmatprep.subr.mxu0 0.0
  %2192 = vmatpush1.msra.mxu0 0.0
  %2193 = vmatprep.subr.mxu0 0.0
  %2194 = vmatpush1.msra.mxu0 0.0
  %2195 = vmatprep.subr.mxu0 0.0
  %2196 = vmatpush1.msra.mxu0 0.0
  %2197 = vmatprep.subr.mxu0 0.0
  %2198 = vmatpush1.msra.mxu0 0.0
  %2199 = vmatprep.subr.mxu0 0.0
  %2200 = vmatpush1.msra.mxu0 0.0
  %2201 = vmatprep.subr.mxu0 0.0
  %2202 = vmatpush1.msra.mxu0 0.0
  %2203 = vmatprep.subr.mxu0 0.0
  %2204 = vmatpush1.msra.mxu0 0.0
  %2205 = vmatprep.subr.mxu0 0.0
  %2206 = vmatpush1.msra.mxu0 0.0
  %2207 = vmatprep.subr.mxu0 0.0
  %2208 = vmatpush1.msra.mxu0 0.0
  %2209 = vmatprep.subr.mxu0 0.0
  %2210 = vmatpush1.msra.mxu0 0.0
  %2211 = vmatprep.subr.mxu0 0.0
  %2212 = vmatpush1.msra.mxu0 0.0
  %2213 = vmatprep.subr.mxu0 0.0
  %2214 = vmatpush1.msra.mxu0 0.0
  %2215 = vmatprep.subr.mxu0 0.0
  %2216 = vmatpush1.msra.mxu0 0.0
  %2217 = vmatprep.subr.mxu0 0.0
  %2218 = vmatpush1.msra.mxu0 0.0
  %2219 = vmatprep.subr.mxu0 0.0
  %2220 = vmatpush1.msra.mxu0 0.0
  %2221 = vmatprep.subr.mxu0 0.0
  %2222 = vmatpush1.msra.mxu0 0.0
  %2223 = vmatprep.subr.mxu0 0.0
  %2224 = vmatpush1.msra.mxu0 0.0
  %2225 = vmatprep.subr.mxu0 0.0
  %2226 = vmatpush1.msra.mxu0 0.0
  %2227 = vmatprep.subr.mxu0 0.0
  %2228 = vmatpush1.msra.mxu0 0.0
  %2229 = vmatprep.subr.mxu0 0.0
  %2230 = vmatpush1.msra.mxu0 0.0
  %2231 = vmatprep.subr.mxu0 0.0
  %2232 = vmatpush1.msra.mxu0 0.0
  %2233 = vmatprep.subr.mxu0 0.0
  %2234 = vmatpush1.msra.mxu0 0.0
  %2235 = vmatprep.subr.mxu0 0.0
  %2236 = vmatpush1.msra.mxu0 0.0
  %2237 = vmatprep.subr.mxu0 0.0
  %2238 = vmatpush1.msra.mxu0 0.0
  %2239 = vmatprep.subr.mxu0 0.0
  %2240 = vmatpush1.msra.mxu0 0.0
  %2241 = vmatprep.subr.mxu0 0.0
  %2242 = vmatpush1.msra.mxu0 0.0
  %2243 = vmatprep.subr.mxu0 0.0
  %2244 = vmatpush1.msra.mxu0 0.0
  %2245 = vmatprep.mubr.f32.mxu0 0.0
  %2246 = vmatmul.mubr.f32.gmra.mrb[0].mxu0 %v2179
  %v2247 = vpop.f32.mrb[0].mxu0
  %v2248 = vadd.f32 0.0, %v2247
  %v2249 = vpop.f32.mrb[0].mxu0
  %2250 = vdwg.mxu0
  %v2251 = vadd.f32 %v2174, %v2248
  %s2252 = scalar_lea.vmem %s3, 208
  %v2253 = vld [vmem:[%s2252] sm:$0xff]
  %v2254 = vld [vmem:[%s2252 + $0x8] sm:$0xff]
  %v2256 = vsel %vm1258, %v1241, 0
  %2258 = vmatprep.subr.mxu0 0.0
  %2259 = vmatpush1.msra.mxu0 %v2253
  %2260 = vmatprep.subr.mxu0 0.0
  %2261 = vmatpush1.msra.mxu0 %v2254
  %2262 = vmatprep.subr.mxu0 0.0
  %2263 = vmatpush1.msra.mxu0 0.0
  %2264 = vmatprep.subr.mxu0 0.0
  %2265 = vmatpush1.msra.mxu0 0.0
  %2266 = vmatprep.subr.mxu0 0.0
  %2267 = vmatpush1.msra.mxu0 0.0
  %2268 = vmatprep.subr.mxu0 0.0
  %2269 = vmatpush1.msra.mxu0 0.0
  %2270 = vmatprep.subr.mxu0 0.0
  %2271 = vmatpush1.msra.mxu0 0.0
  %2272 = vmatprep.subr.mxu0 0.0
  %2273 = vmatpush1.msra.mxu0 0.0
  %2274 = vmatprep.subr.mxu0 0.0
  %2275 = vmatpush1.msra.mxu0 0.0
  %2276 = vmatprep.subr.mxu0 0.0
  %2277 = vmatpush1.msra.mxu0 0.0
  %2278 = vmatprep.subr.mxu0 0.0
  %2279 = vmatpush1.msra.mxu0 0.0
  %2280 = vmatprep.subr.mxu0 0.0
  %2281 = vmatpush1.msra.mxu0 0.0
  %2282 = vmatprep.subr.mxu0 0.0
  %2283 = vmatpush1.msra.mxu0 0.0
  %2284 = vmatprep.subr.mxu0 0.0
  %2285 = vmatpush1.msra.mxu0 0.0
  %2286 = vmatprep.subr.mxu0 0.0
  %2287 = vmatpush1.msra.mxu0 0.0
  %2288 = vmatprep.subr.mxu0 0.0
  %2289 = vmatpush1.msra.mxu0 0.0
  %2290 = vmatprep.subr.mxu0 0.0
  %2291 = vmatpush1.msra.mxu0 0.0
  %2292 = vmatprep.subr.mxu0 0.0
  %2293 = vmatpush1.msra.mxu0 0.0
  %2294 = vmatprep.subr.mxu0 0.0
  %2295 = vmatpush1.msra.mxu0 0.0
  %2296 = vmatprep.subr.mxu0 0.0
  %2297 = vmatpush1.msra.mxu0 0.0
  %2298 = vmatprep.subr.mxu0 0.0
  %2299 = vmatpush1.msra.mxu0 0.0
  %2300 = vmatprep.subr.mxu0 0.0
  %2301 = vmatpush1.msra.mxu0 0.0
  %2302 = vmatprep.subr.mxu0 0.0
  %2303 = vmatpush1.msra.mxu0 0.0
  %2304 = vmatprep.subr.mxu0 0.0
  %2305 = vmatpush1.msra.mxu0 0.0
  %2306 = vmatprep.subr.mxu0 0.0
  %2307 = vmatpush1.msra.mxu0 0.0
  %2308 = vmatprep.subr.mxu0 0.0
  %2309 = vmatpush1.msra.mxu0 0.0
  %2310 = vmatprep.subr.mxu0 0.0
  %2311 = vmatpush1.msra.mxu0 0.0
  %2312 = vmatprep.subr.mxu0 0.0
  %2313 = vmatpush1.msra.mxu0 0.0
  %2314 = vmatprep.subr.mxu0 0.0
  %2315 = vmatpush1.msra.mxu0 0.0
  %2316 = vmatprep.subr.mxu0 0.0
  %2317 = vmatpush1.msra.mxu0 0.0
  %2318 = vmatprep.subr.mxu0 0.0
  %2319 = vmatpush1.msra.mxu0 0.0
  %2320 = vmatprep.subr.mxu0 0.0
  %2321 = vmatpush1.msra.mxu0 0.0
  %2322 = vmatprep.mubr.f32.mxu0 0.0
  %2323 = vmatmul.mubr.f32.gmra.mrb[0].mxu0 %v2256
  %v2324 = vpop.f32.mrb[0].mxu0
  %v2325 = vadd.f32 0.0, %v2324
  %v2326 = vpop.f32.mrb[0].mxu0
  %2327 = vdwg.mxu0
  %v2328 = vadd.f32 %v2251, %v2325
  %s2329 = scalar_lea.vmem %s3, 224
  %v2330 = vld [vmem:[%s2329] sm:$0xff]
  %v2331 = vld [vmem:[%s2329 + $0x8] sm:$0xff]
  %v2333 = vsel %vm1258, %v1242, 0
  %2335 = vmatprep.subr.mxu0 0.0
  %2336 = vmatpush1.msra.mxu0 %v2330
  %2337 = vmatprep.subr.mxu0 0.0
  %2338 = vmatpush1.msra.mxu0 %v2331
  %2339 = vmatprep.subr.mxu0 0.0
  %2340 = vmatpush1.msra.mxu0 0.0
  %2341 = vmatprep.subr.mxu0 0.0
  %2342 = vmatpush1.msra.mxu0 0.0
  %2343 = vmatprep.subr.mxu0 0.0
  %2344 = vmatpush1.msra.mxu0 0.0
  %2345 = vmatprep.subr.mxu0 0.0
  %2346 = vmatpush1.msra.mxu0 0.0
  %2347 = vmatprep.subr.mxu0 0.0
  %2348 = vmatpush1.msra.mxu0 0.0
  %2349 = vmatprep.subr.mxu0 0.0
  %2350 = vmatpush1.msra.mxu0 0.0
  %2351 = vmatprep.subr.mxu0 0.0
  %2352 = vmatpush1.msra.mxu0 0.0
  %2353 = vmatprep.subr.mxu0 0.0
  %2354 = vmatpush1.msra.mxu0 0.0
  %2355 = vmatprep.subr.mxu0 0.0
  %2356 = vmatpush1.msra.mxu0 0.0
  %2357 = vmatprep.subr.mxu0 0.0
  %2358 = vmatpush1.msra.mxu0 0.0
  %2359 = vmatprep.subr.mxu0 0.0
  %2360 = vmatpush1.msra.mxu0 0.0
  %2361 = vmatprep.subr.mxu0 0.0
  %2362 = vmatpush1.msra.mxu0 0.0
  %2363 = vmatprep.subr.mxu0 0.0
  %2364 = vmatpush1.msra.mxu0 0.0
  %2365 = vmatprep.subr.mxu0 0.0
  %2366 = vmatpush1.msra.mxu0 0.0
  %2367 = vmatprep.subr.mxu0 0.0
  %2368 = vmatpush1.msra.mxu0 0.0
  %2369 = vmatprep.subr.mxu0 0.0
  %2370 = vmatpush1.msra.mxu0 0.0
  %2371 = vmatprep.subr.mxu0 0.0
  %2372 = vmatpush1.msra.mxu0 0.0
  %2373 = vmatprep.subr.mxu0 0.0
  %2374 = vmatpush1.msra.mxu0 0.0
  %2375 = vmatprep.subr.mxu0 0.0
  %2376 = vmatpush1.msra.mxu0 0.0
  %2377 = vmatprep.subr.mxu0 0.0
  %2378 = vmatpush1.msra.mxu0 0.0
  %2379 = vmatprep.subr.mxu0 0.0
  %2380 = vmatpush1.msra.mxu0 0.0
  %2381 = vmatprep.subr.mxu0 0.0
  %2382 = vmatpush1.msra.mxu0 0.0
  %2383 = vmatprep.subr.mxu0 0.0
  %2384 = vmatpush1.msra.mxu0 0.0
  %2385 = vmatprep.subr.mxu0 0.0
  %2386 = vmatpush1.msra.mxu0 0.0
  %2387 = vmatprep.subr.mxu0 0.0
  %2388 = vmatpush1.msra.mxu0 0.0
  %2389 = vmatprep.subr.mxu0 0.0
  %2390 = vmatpush1.msra.mxu0 0.0
  %2391 = vmatprep.subr.mxu0 0.0
  %2392 = vmatpush1.msra.mxu0 0.0
  %2393 = vmatprep.subr.mxu0 0.0
  %2394 = vmatpush1.msra.mxu0 0.0
  %2395 = vmatprep.subr.mxu0 0.0
  %2396 = vmatpush1.msra.mxu0 0.0
  %2397 = vmatprep.subr.mxu0 0.0
  %2398 = vmatpush1.msra.mxu0 0.0
  %2399 = vmatprep.mubr.f32.mxu0 0.0
  %2400 = vmatmul.mubr.f32.gmra.mrb[0].mxu0 %v2333
  %v2401 = vpop.f32.mrb[0].mxu0
  %v2402 = vadd.f32 0.0, %v2401
  %v2403 = vpop.f32.mrb[0].mxu0
  %2404 = vdwg.mxu0
  %v2405 = vadd.f32 %v2328, %v2402
  %s2406 = scalar_lea.vmem %s3, 240
  %v2407 = vld [vmem:[%s2406] sm:$0xff]
  %v2408 = vld [vmem:[%s2406 + $0x8] sm:$0xff]
  %v2410 = vsel %vm1258, %v1243, 0
  %2412 = vmatprep.subr.mxu0 0.0
  %2413 = vmatpush1.msra.mxu0 %v2407
  %2414 = vmatprep.subr.mxu0 0.0
  %2415 = vmatpush1.msra.mxu0 %v2408
  %2416 = vmatprep.subr.mxu0 0.0
  %2417 = vmatpush1.msra.mxu0 0.0
  %2418 = vmatprep.subr.mxu0 0.0
  %2419 = vmatpush1.msra.mxu0 0.0
  %2420 = vmatprep.subr.mxu0 0.0
  %2421 = vmatpush1.msra.mxu0 0.0
  %2422 = vmatprep.subr.mxu0 0.0
  %2423 = vmatpush1.msra.mxu0 0.0
  %2424 = vmatprep.subr.mxu0 0.0
  %2425 = vmatpush1.msra.mxu0 0.0
  %2426 = vmatprep.subr.mxu0 0.0
  %2427 = vmatpush1.msra.mxu0 0.0
  %2428 = vmatprep.subr.mxu0 0.0
  %2429 = vmatpush1.msra.mxu0 0.0
  %2430 = vmatprep.subr.mxu0 0.0
  %2431 = vmatpush1.msra.mxu0 0.0
  %2432 = vmatprep.subr.mxu0 0.0
  %2433 = vmatpush1.msra.mxu0 0.0
  %2434 = vmatprep.subr.mxu0 0.0
  %2435 = vmatpush1.msra.mxu0 0.0
  %2436 = vmatprep.subr.mxu0 0.0
  %2437 = vmatpush1.msra.mxu0 0.0
  %2438 = vmatprep.subr.mxu0 0.0
  %2439 = vmatpush1.msra.mxu0 0.0
  %2440 = vmatprep.subr.mxu0 0.0
  %2441 = vmatpush1.msra.mxu0 0.0
  %2442 = vmatprep.subr.mxu0 0.0
  %2443 = vmatpush1.msra.mxu0 0.0
  %2444 = vmatprep.subr.mxu0 0.0
  %2445 = vmatpush1.msra.mxu0 0.0
  %2446 = vmatprep.subr.mxu0 0.0
  %2447 = vmatpush1.msra.mxu0 0.0
  %2448 = vmatprep.subr.mxu0 0.0
  %2449 = vmatpush1.msra.mxu0 0.0
  %2450 = vmatprep.subr.mxu0 0.0
  %2451 = vmatpush1.msra.mxu0 0.0
  %2452 = vmatprep.subr.mxu0 0.0
  %2453 = vmatpush1.msra.mxu0 0.0
  %2454 = vmatprep.subr.mxu0 0.0
  %2455 = vmatpush1.msra.mxu0 0.0
  %2456 = vmatprep.subr.mxu0 0.0
  %2457 = vmatpush1.msra.mxu0 0.0
  %2458 = vmatprep.subr.mxu0 0.0
  %2459 = vmatpush1.msra.mxu0 0.0
  %2460 = vmatprep.subr.mxu0 0.0
  %2461 = vmatpush1.msra.mxu0 0.0
  %2462 = vmatprep.subr.mxu0 0.0
  %2463 = vmatpush1.msra.mxu0 0.0
  %2464 = vmatprep.subr.mxu0 0.0
  %2465 = vmatpush1.msra.mxu0 0.0
  %2466 = vmatprep.subr.mxu0 0.0
  %2467 = vmatpush1.msra.mxu0 0.0
  %2468 = vmatprep.subr.mxu0 0.0
  %2469 = vmatpush1.msra.mxu0 0.0
  %2470 = vmatprep.subr.mxu0 0.0
  %2471 = vmatpush1.msra.mxu0 0.0
  %2472 = vmatprep.subr.mxu0 0.0
  %2473 = vmatpush1.msra.mxu0 0.0
  %2474 = vmatprep.subr.mxu0 0.0
  %2475 = vmatpush1.msra.mxu0 0.0
  %2476 = vmatprep.mubr.f32.mxu0 0.0
  %2477 = vmatmul.mubr.f32.gmra.mrb[0].mxu0 %v2410
  %v2478 = vpop.f32.mrb[0].mxu0
  %v2479 = vadd.f32 0.0, %v2478
  %v2480 = vpop.f32.mrb[0].mxu0
  %2481 = vdwg.mxu0
  %v2482 = vadd.f32 %v2405, %v2479
  %s2483 = scalar_lea.vmem %s3, 256
  %v2484 = vld [vmem:[%s2483] sm:$0xff]
  %v2485 = vld [vmem:[%s2483 + $0x8] sm:$0xff]
  %v2487 = vsel %vm1258, %v1244, 0
  %2489 = vmatprep.subr.mxu0 0.0
  %2490 = vmatpush1.msra.mxu0 %v2484
  %2491 = vmatprep.subr.mxu0 0.0
  %2492 = vmatpush1.msra.mxu0 %v2485
  %2493 = vmatprep.subr.mxu0 0.0
  %2494 = vmatpush1.msra.mxu0 0.0
  %2495 = vmatprep.subr.mxu0 0.0
  %2496 = vmatpush1.msra.mxu0 0.0
  %2497 = vmatprep.subr.mxu0 0.0
  %2498 = vmatpush1.msra.mxu0 0.0
  %2499 = vmatprep.subr.mxu0 0.0
  %2500 = vmatpush1.msra.mxu0 0.0
  %2501 = vmatprep.subr.mxu0 0.0
  %2502 = vmatpush1.msra.mxu0 0.0
  %2503 = vmatprep.subr.mxu0 0.0
  %2504 = vmatpush1.msra.mxu0 0.0
  %2505 = vmatprep.subr.mxu0 0.0
  %2506 = vmatpush1.msra.mxu0 0.0
  %2507 = vmatprep.subr.mxu0 0.0
  %2508 = vmatpush1.msra.mxu0 0.0
  %2509 = vmatprep.subr.mxu0 0.0
  %2510 = vmatpush1.msra.mxu0 0.0
  %2511 = vmatprep.subr.mxu0 0.0
  %2512 = vmatpush1.msra.mxu0 0.0
  %2513 = vmatprep.subr.mxu0 0.0
  %2514 = vmatpush1.msra.mxu0 0.0
  %2515 = vmatprep.subr.mxu0 0.0
  %2516 = vmatpush1.msra.mxu0 0.0
  %2517 = vmatprep.subr.mxu0 0.0
  %2518 = vmatpush1.msra.mxu0 0.0
  %2519 = vmatprep.subr.mxu0 0.0
  %2520 = vmatpush1.msra.mxu0 0.0
  %2521 = vmatprep.subr.mxu0 0.0
  %2522 = vmatpush1.msra.mxu0 0.0
  %2523 = vmatprep.subr.mxu0 0.0
  %2524 = vmatpush1.msra.mxu0 0.0
  %2525 = vmatprep.subr.mxu0 0.0
  %2526 = vmatpush1.msra.mxu0 0.0
  %2527 = vmatprep.subr.mxu0 0.0
  %2528 = vmatpush1.msra.mxu0 0.0
  %2529 = vmatprep.subr.mxu0 0.0
  %2530 = vmatpush1.msra.mxu0 0.0
  %2531 = vmatprep.subr.mxu0 0.0
  %2532 = vmatpush1.msra.mxu0 0.0
  %2533 = vmatprep.subr.mxu0 0.0
  %2534 = vmatpush1.msra.mxu0 0.0
  %2535 = vmatprep.subr.mxu0 0.0
  %2536 = vmatpush1.msra.mxu0 0.0
  %2537 = vmatprep.subr.mxu0 0.0
  %2538 = vmatpush1.msra.mxu0 0.0
  %2539 = vmatprep.subr.mxu0 0.0
  %2540 = vmatpush1.msra.mxu0 0.0
  %2541 = vmatprep.subr.mxu0 0.0
  %2542 = vmatpush1.msra.mxu0 0.0
  %2543 = vmatprep.subr.mxu0 0.0
  %2544 = vmatpush1.msra.mxu0 0.0
  %2545 = vmatprep.subr.mxu0 0.0
  %2546 = vmatpush1.msra.mxu0 0.0
  %2547 = vmatprep.subr.mxu0 0.0
  %2548 = vmatpush1.msra.mxu0 0.0
  %2549 = vmatprep.subr.mxu0 0.0
  %2550 = vmatpush1.msra.mxu0 0.0
  %2551 = vmatprep.subr.mxu0 0.0
  %2552 = vmatpush1.msra.mxu0 0.0
  %2553 = vmatprep.mubr.f32.mxu0 0.0
  %2554 = vmatmul.mubr.f32.gmra.mrb[0].mxu0 %v2487
  %v2555 = vpop.f32.mrb[0].mxu0
  %v2556 = vadd.f32 0.0, %v2555
  %v2557 = vpop.f32.mrb[0].mxu0
  %2558 = vdwg.mxu0
  %v2559 = vadd.f32 %v2482, %v2556
  %s2560 = scalar_lea.vmem %s3, 272
  %v2561 = vld [vmem:[%s2560] sm:$0xff]
  %v2562 = vld [vmem:[%s2560 + $0x8] sm:$0xff]
  %v2564 = vsel %vm1258, %v1245, 0
  %2566 = vmatprep.subr.mxu0 0.0
  %2567 = vmatpush1.msra.mxu0 %v2561
  %2568 = vmatprep.subr.mxu0 0.0
  %2569 = vmatpush1.msra.mxu0 %v2562
  %2570 = vmatprep.subr.mxu0 0.0
  %2571 = vmatpush1.msra.mxu0 0.0
  %2572 = vmatprep.subr.mxu0 0.0
  %2573 = vmatpush1.msra.mxu0 0.0
  %2574 = vmatprep.subr.mxu0 0.0
  %2575 = vmatpush1.msra.mxu0 0.0
  %2576 = vmatprep.subr.mxu0 0.0
  %2577 = vmatpush1.msra.mxu0 0.0
  %2578 = vmatprep.subr.mxu0 0.0
  %2579 = vmatpush1.msra.mxu0 0.0
  %2580 = vmatprep.subr.mxu0 0.0
  %2581 = vmatpush1.msra.mxu0 0.0
  %2582 = vmatprep.subr.mxu0 0.0
  %2583 = vmatpush1.msra.mxu0 0.0
  %2584 = vmatprep.subr.mxu0 0.0
  %2585 = vmatpush1.msra.mxu0 0.0
  %2586 = vmatprep.subr.mxu0 0.0
  %2587 = vmatpush1.msra.mxu0 0.0
  %2588 = vmatprep.subr.mxu0 0.0
  %2589 = vmatpush1.msra.mxu0 0.0
  %2590 = vmatprep.subr.mxu0 0.0
  %2591 = vmatpush1.msra.mxu0 0.0
  %2592 = vmatprep.subr.mxu0 0.0
  %2593 = vmatpush1.msra.mxu0 0.0
  %2594 = vmatprep.subr.mxu0 0.0
  %2595 = vmatpush1.msra.mxu0 0.0
  %2596 = vmatprep.subr.mxu0 0.0
  %2597 = vmatpush1.msra.mxu0 0.0
  %2598 = vmatprep.subr.mxu0 0.0
  %2599 = vmatpush1.msra.mxu0 0.0
  %2600 = vmatprep.subr.mxu0 0.0
  %2601 = vmatpush1.msra.mxu0 0.0
  %2602 = vmatprep.subr.mxu0 0.0
  %2603 = vmatpush1.msra.mxu0 0.0
  %2604 = vmatprep.subr.mxu0 0.0
  %2605 = vmatpush1.msra.mxu0 0.0
  %2606 = vmatprep.subr.mxu0 0.0
  %2607 = vmatpush1.msra.mxu0 0.0
  %2608 = vmatprep.subr.mxu0 0.0
  %2609 = vmatpush1.msra.mxu0 0.0
  %2610 = vmatprep.subr.mxu0 0.0
  %2611 = vmatpush1.msra.mxu0 0.0
  %2612 = vmatprep.subr.mxu0 0.0
  %2613 = vmatpush1.msra.mxu0 0.0
  %2614 = vmatprep.subr.mxu0 0.0
  %2615 = vmatpush1.msra.mxu0 0.0
  %2616 = vmatprep.subr.mxu0 0.0
  %2617 = vmatpush1.msra.mxu0 0.0
  %2618 = vmatprep.subr.mxu0 0.0
  %2619 = vmatpush1.msra.mxu0 0.0
  %2620 = vmatprep.subr.mxu0 0.0
  %2621 = vmatpush1.msra.mxu0 0.0
  %2622 = vmatprep.subr.mxu0 0.0
  %2623 = vmatpush1.msra.mxu0 0.0
  %2624 = vmatprep.subr.mxu0 0.0
  %2625 = vmatpush1.msra.mxu0 0.0
  %2626 = vmatprep.subr.mxu0 0.0
  %2627 = vmatpush1.msra.mxu0 0.0
  %2628 = vmatprep.subr.mxu0 0.0
  %2629 = vmatpush1.msra.mxu0 0.0
  %2630 = vmatprep.mubr.f32.mxu0 0.0
  %2631 = vmatmul.mubr.f32.gmra.mrb[0].mxu0 %v2564
  %v2632 = vpop.f32.mrb[0].mxu0
  %v2633 = vadd.f32 0.0, %v2632
  %v2634 = vpop.f32.mrb[0].mxu0
  %2635 = vdwg.mxu0
  %v2636 = vadd.f32 %v2559, %v2633
  %s2637 = scalar_lea.vmem %s3, 288
  %v2638 = vld [vmem:[%s2637] sm:$0xff]
  %v2639 = vld [vmem:[%s2637 + $0x8] sm:$0xff]
  %v2641 = vsel %vm1258, %v1246, 0
  %2643 = vmatprep.subr.mxu0 0.0
  %2644 = vmatpush1.msra.mxu0 %v2638
  %2645 = vmatprep.subr.mxu0 0.0
  %2646 = vmatpush1.msra.mxu0 %v2639
  %2647 = vmatprep.subr.mxu0 0.0
  %2648 = vmatpush1.msra.mxu0 0.0
  %2649 = vmatprep.subr.mxu0 0.0
  %2650 = vmatpush1.msra.mxu0 0.0
  %2651 = vmatprep.subr.mxu0 0.0
  %2652 = vmatpush1.msra.mxu0 0.0
  %2653 = vmatprep.subr.mxu0 0.0
  %2654 = vmatpush1.msra.mxu0 0.0
  %2655 = vmatprep.subr.mxu0 0.0
  %2656 = vmatpush1.msra.mxu0 0.0
  %2657 = vmatprep.subr.mxu0 0.0
  %2658 = vmatpush1.msra.mxu0 0.0
  %2659 = vmatprep.subr.mxu0 0.0
  %2660 = vmatpush1.msra.mxu0 0.0
  %2661 = vmatprep.subr.mxu0 0.0
  %2662 = vmatpush1.msra.mxu0 0.0
  %2663 = vmatprep.subr.mxu0 0.0
  %2664 = vmatpush1.msra.mxu0 0.0
  %2665 = vmatprep.subr.mxu0 0.0
  %2666 = vmatpush1.msra.mxu0 0.0
  %2667 = vmatprep.subr.mxu0 0.0
  %2668 = vmatpush1.msra.mxu0 0.0
  %2669 = vmatprep.subr.mxu0 0.0
  %2670 = vmatpush1.msra.mxu0 0.0
  %2671 = vmatprep.subr.mxu0 0.0
  %2672 = vmatpush1.msra.mxu0 0.0
  %2673 = vmatprep.subr.mxu0 0.0
  %2674 = vmatpush1.msra.mxu0 0.0
  %2675 = vmatprep.subr.mxu0 0.0
  %2676 = vmatpush1.msra.mxu0 0.0
  %2677 = vmatprep.subr.mxu0 0.0
  %2678 = vmatpush1.msra.mxu0 0.0
  %2679 = vmatprep.subr.mxu0 0.0
  %2680 = vmatpush1.msra.mxu0 0.0
  %2681 = vmatprep.subr.mxu0 0.0
  %2682 = vmatpush1.msra.mxu0 0.0
  %2683 = vmatprep.subr.mxu0 0.0
  %2684 = vmatpush1.msra.mxu0 0.0
  %2685 = vmatprep.subr.mxu0 0.0
  %2686 = vmatpush1.msra.mxu0 0.0
  %2687 = vmatprep.subr.mxu0 0.0
  %2688 = vmatpush1.msra.mxu0 0.0
  %2689 = vmatprep.subr.mxu0 0.0
  %2690 = vmatpush1.msra.mxu0 0.0
  %2691 = vmatprep.subr.mxu0 0.0
  %2692 = vmatpush1.msra.mxu0 0.0
  %2693 = vmatprep.subr.mxu0 0.0
  %2694 = vmatpush1.msra.mxu0 0.0
  %2695 = vmatprep.subr.mxu0 0.0
  %2696 = vmatpush1.msra.mxu0 0.0
  %2697 = vmatprep.subr.mxu0 0.0
  %2698 = vmatpush1.msra.mxu0 0.0
  %2699 = vmatprep.subr.mxu0 0.0
  %2700 = vmatpush1.msra.mxu0 0.0
  %2701 = vmatprep.subr.mxu0 0.0
  %2702 = vmatpush1.msra.mxu0 0.0
  %2703 = vmatprep.subr.mxu0 0.0
  %2704 = vmatpush1.msra.mxu0 0.0
  %2705 = vmatprep.subr.mxu0 0.0
  %2706 = vmatpush1.msra.mxu0 0.0
  %2707 = vmatprep.mubr.f32.mxu0 0.0
  %2708 = vmatmul.mubr.f32.gmra.mrb[0].mxu0 %v2641
  %v2709 = vpop.f32.mrb[0].mxu0
  %v2710 = vadd.f32 0.0, %v2709
  %v2711 = vpop.f32.mrb[0].mxu0
  %2712 = vdwg.mxu0
  %v2713 = vadd.f32 %v2636, %v2710
  %s2714 = scalar_lea.vmem %s3, 304
  %v2715 = vld [vmem:[%s2714] sm:$0xff]
  %v2716 = vld [vmem:[%s2714 + $0x8] sm:$0xff]
  %v2718 = vsel %vm1258, %v1247, 0
  %2720 = vmatprep.subr.mxu0 0.0
  %2721 = vmatpush1.msra.mxu0 %v2715
  %2722 = vmatprep.subr.mxu0 0.0
  %2723 = vmatpush1.msra.mxu0 %v2716
  %2724 = vmatprep.subr.mxu0 0.0
  %2725 = vmatpush1.msra.mxu0 0.0
  %2726 = vmatprep.subr.mxu0 0.0
  %2727 = vmatpush1.msra.mxu0 0.0
  %2728 = vmatprep.subr.mxu0 0.0
  %2729 = vmatpush1.msra.mxu0 0.0
  %2730 = vmatprep.subr.mxu0 0.0
  %2731 = vmatpush1.msra.mxu0 0.0
  %2732 = vmatprep.subr.mxu0 0.0
  %2733 = vmatpush1.msra.mxu0 0.0
  %2734 = vmatprep.subr.mxu0 0.0
  %2735 = vmatpush1.msra.mxu0 0.0
  %2736 = vmatprep.subr.mxu0 0.0
  %2737 = vmatpush1.msra.mxu0 0.0
  %2738 = vmatprep.subr.mxu0 0.0
  %2739 = vmatpush1.msra.mxu0 0.0
  %2740 = vmatprep.subr.mxu0 0.0
  %2741 = vmatpush1.msra.mxu0 0.0
  %2742 = vmatprep.subr.mxu0 0.0
  %2743 = vmatpush1.msra.mxu0 0.0
  %2744 = vmatprep.subr.mxu0 0.0
  %2745 = vmatpush1.msra.mxu0 0.0
  %2746 = vmatprep.subr.mxu0 0.0
  %2747 = vmatpush1.msra.mxu0 0.0
  %2748 = vmatprep.subr.mxu0 0.0
  %2749 = vmatpush1.msra.mxu0 0.0
  %2750 = vmatprep.subr.mxu0 0.0
  %2751 = vmatpush1.msra.mxu0 0.0
  %2752 = vmatprep.subr.mxu0 0.0
  %2753 = vmatpush1.msra.mxu0 0.0
  %2754 = vmatprep.subr.mxu0 0.0
  %2755 = vmatpush1.msra.mxu0 0.0
  %2756 = vmatprep.subr.mxu0 0.0
  %2757 = vmatpush1.msra.mxu0 0.0
  %2758 = vmatprep.subr.mxu0 0.0
  %2759 = vmatpush1.msra.mxu0 0.0
  %2760 = vmatprep.subr.mxu0 0.0
  %2761 = vmatpush1.msra.mxu0 0.0
  %2762 = vmatprep.subr.mxu0 0.0
  %2763 = vmatpush1.msra.mxu0 0.0
  %2764 = vmatprep.subr.mxu0 0.0
  %2765 = vmatpush1.msra.mxu0 0.0
  %2766 = vmatprep.subr.mxu0 0.0
  %2767 = vmatpush1.msra.mxu0 0.0
  %2768 = vmatprep.subr.mxu0 0.0
  %2769 = vmatpush1.msra.mxu0 0.0
  %2770 = vmatprep.subr.mxu0 0.0
  %2771 = vmatpush1.msra.mxu0 0.0
  %2772 = vmatprep.subr.mxu0 0.0
  %2773 = vmatpush1.msra.mxu0 0.0
  %2774 = vmatprep.subr.mxu0 0.0
  %2775 = vmatpush1.msra.mxu0 0.0
  %2776 = vmatprep.subr.mxu0 0.0
  %2777 = vmatpush1.msra.mxu0 0.0
  %2778 = vmatprep.subr.mxu0 0.0
  %2779 = vmatpush1.msra.mxu0 0.0
  %2780 = vmatprep.subr.mxu0 0.0
  %2781 = vmatpush1.msra.mxu0 0.0
  %2782 = vmatprep.subr.mxu0 0.0
  %2783 = vmatpush1.msra.mxu0 0.0
  %2784 = vmatprep.mubr.f32.mxu0 0.0
  %2785 = vmatmul.mubr.f32.gmra.mrb[0].mxu0 %v2718
  %v2786 = vpop.f32.mrb[0].mxu0
  %v2787 = vadd.f32 0.0, %v2786
  %v2788 = vpop.f32.mrb[0].mxu0
  %2789 = vdwg.mxu0
  %v2790 = vadd.f32 %v2713, %v2787
  %s2791 = scalar_lea.vmem %s3, 320
  %v2792 = vld [vmem:[%s2791] sm:$0xff]
  %v2793 = vld [vmem:[%s2791 + $0x8] sm:$0xff]
  %v2795 = vsel %vm1258, %v1248, 0
  %2797 = vmatprep.subr.mxu0 0.0
  %2798 = vmatpush1.msra.mxu0 %v2792
  %2799 = vmatprep.subr.mxu0 0.0
  %2800 = vmatpush1.msra.mxu0 %v2793
  %2801 = vmatprep.subr.mxu0 0.0
  %2802 = vmatpush1.msra.mxu0 0.0
  %2803 = vmatprep.subr.mxu0 0.0
  %2804 = vmatpush1.msra.mxu0 0.0
  %2805 = vmatprep.subr.mxu0 0.0
  %2806 = vmatpush1.msra.mxu0 0.0
  %2807 = vmatprep.subr.mxu0 0.0
  %2808 = vmatpush1.msra.mxu0 0.0
  %2809 = vmatprep.subr.mxu0 0.0
  %2810 = vmatpush1.msra.mxu0 0.0
  %2811 = vmatprep.subr.mxu0 0.0
  %2812 = vmatpush1.msra.mxu0 0.0
  %2813 = vmatprep.subr.mxu0 0.0
  %2814 = vmatpush1.msra.mxu0 0.0
  %2815 = vmatprep.subr.mxu0 0.0
  %2816 = vmatpush1.msra.mxu0 0.0
  %2817 = vmatprep.subr.mxu0 0.0
  %2818 = vmatpush1.msra.mxu0 0.0
  %2819 = vmatprep.subr.mxu0 0.0
  %2820 = vmatpush1.msra.mxu0 0.0
  %2821 = vmatprep.subr.mxu0 0.0
  %2822 = vmatpush1.msra.mxu0 0.0
  %2823 = vmatprep.subr.mxu0 0.0
  %2824 = vmatpush1.msra.mxu0 0.0
  %2825 = vmatprep.subr.mxu0 0.0
  %2826 = vmatpush1.msra.mxu0 0.0
  %2827 = vmatprep.subr.mxu0 0.0
  %2828 = vmatpush1.msra.mxu0 0.0
  %2829 = vmatprep.subr.mxu0 0.0
  %2830 = vmatpush1.msra.mxu0 0.0
  %2831 = vmatprep.subr.mxu0 0.0
  %2832 = vmatpush1.msra.mxu0 0.0
  %2833 = vmatprep.subr.mxu0 0.0
  %2834 = vmatpush1.msra.mxu0 0.0
  %2835 = vmatprep.subr.mxu0 0.0
  %2836 = vmatpush1.msra.mxu0 0.0
  %2837 = vmatprep.subr.mxu0 0.0
  %2838 = vmatpush1.msra.mxu0 0.0
  %2839 = vmatprep.subr.mxu0 0.0
  %2840 = vmatpush1.msra.mxu0 0.0
  %2841 = vmatprep.subr.mxu0 0.0
  %2842 = vmatpush1.msra.mxu0 0.0
  %2843 = vmatprep.subr.mxu0 0.0
  %2844 = vmatpush1.msra.mxu0 0.0
  %2845 = vmatprep.subr.mxu0 0.0
  %2846 = vmatpush1.msra.mxu0 0.0
  %2847 = vmatprep.subr.mxu0 0.0
  %2848 = vmatpush1.msra.mxu0 0.0
  %2849 = vmatprep.subr.mxu0 0.0
  %2850 = vmatpush1.msra.mxu0 0.0
  %2851 = vmatprep.subr.mxu0 0.0
  %2852 = vmatpush1.msra.mxu0 0.0
  %2853 = vmatprep.subr.mxu0 0.0
  %2854 = vmatpush1.msra.mxu0 0.0
  %2855 = vmatprep.subr.mxu0 0.0
  %2856 = vmatpush1.msra.mxu0 0.0
  %2857 = vmatprep.subr.mxu0 0.0
  %2858 = vmatpush1.msra.mxu0 0.0
  %2859 = vmatprep.subr.mxu0 0.0
  %2860 = vmatpush1.msra.mxu0 0.0
  %2861 = vmatprep.mubr.f32.mxu0 0.0
  %2862 = vmatmul.mubr.f32.gmra.mrb[0].mxu0 %v2795
  %v2863 = vpop.f32.mrb[0].mxu0
  %v2864 = vadd.f32 0.0, %v2863
  %v2865 = vpop.f32.mrb[0].mxu0
  %2866 = vdwg.mxu0
  %v2867 = vadd.f32 %v2790, %v2864
  %s2868 = scalar_lea.vmem %s3, 336
  %v2869 = vld [vmem:[%s2868] sm:$0xff]
  %v2870 = vld [vmem:[%s2868 + $0x8] sm:$0xff]
  %v2872 = vsel %vm1258, %v1249, 0
  %2874 = vmatprep.subr.mxu0 0.0
  %2875 = vmatpush1.msra.mxu0 %v2869
  %2876 = vmatprep.subr.mxu0 0.0
  %2877 = vmatpush1.msra.mxu0 %v2870
  %2878 = vmatprep.subr.mxu0 0.0
  %2879 = vmatpush1.msra.mxu0 0.0
  %2880 = vmatprep.subr.mxu0 0.0
  %2881 = vmatpush1.msra.mxu0 0.0
  %2882 = vmatprep.subr.mxu0 0.0
  %2883 = vmatpush1.msra.mxu0 0.0
  %2884 = vmatprep.subr.mxu0 0.0
  %2885 = vmatpush1.msra.mxu0 0.0
  %2886 = vmatprep.subr.mxu0 0.0
  %2887 = vmatpush1.msra.mxu0 0.0
  %2888 = vmatprep.subr.mxu0 0.0
  %2889 = vmatpush1.msra.mxu0 0.0
  %2890 = vmatprep.subr.mxu0 0.0
  %2891 = vmatpush1.msra.mxu0 0.0
  %2892 = vmatprep.subr.mxu0 0.0
  %2893 = vmatpush1.msra.mxu0 0.0
  %2894 = vmatprep.subr.mxu0 0.0
  %2895 = vmatpush1.msra.mxu0 0.0
  %2896 = vmatprep.subr.mxu0 0.0
  %2897 = vmatpush1.msra.mxu0 0.0
  %2898 = vmatprep.subr.mxu0 0.0
  %2899 = vmatpush1.msra.mxu0 0.0
  %2900 = vmatprep.subr.mxu0 0.0
  %2901 = vmatpush1.msra.mxu0 0.0
  %2902 = vmatprep.subr.mxu0 0.0
  %2903 = vmatpush1.msra.mxu0 0.0
  %2904 = vmatprep.subr.mxu0 0.0
  %2905 = vmatpush1.msra.mxu0 0.0
  %2906 = vmatprep.subr.mxu0 0.0
  %2907 = vmatpush1.msra.mxu0 0.0
  %2908 = vmatprep.subr.mxu0 0.0
  %2909 = vmatpush1.msra.mxu0 0.0
  %2910 = vmatprep.subr.mxu0 0.0
  %2911 = vmatpush1.msra.mxu0 0.0
  %2912 = vmatprep.subr.mxu0 0.0
  %2913 = vmatpush1.msra.mxu0 0.0
  %2914 = vmatprep.subr.mxu0 0.0
  %2915 = vmatpush1.msra.mxu0 0.0
  %2916 = vmatprep.subr.mxu0 0.0
  %2917 = vmatpush1.msra.mxu0 0.0
  %2918 = vmatprep.subr.mxu0 0.0
  %2919 = vmatpush1.msra.mxu0 0.0
  %2920 = vmatprep.subr.mxu0 0.0
  %2921 = vmatpush1.msra.mxu0 0.0
  %2922 = vmatprep.subr.mxu0 0.0
  %2923 = vmatpush1.msra.mxu0 0.0
  %2924 = vmatprep.subr.mxu0 0.0
  %2925 = vmatpush1.msra.mxu0 0.0
  %2926 = vmatprep.subr.mxu0 0.0
  %2927 = vmatpush1.msra.mxu0 0.0
  %2928 = vmatprep.subr.mxu0 0.0
  %2929 = vmatpush1.msra.mxu0 0.0
  %2930 = vmatprep.subr.mxu0 0.0
  %2931 = vmatpush1.msra.mxu0 0.0
  %2932 = vmatprep.subr.mxu0 0.0
  %2933 = vmatpush1.msra.mxu0 0.0
  %2934 = vmatprep.subr.mxu0 0.0
  %2935 = vmatpush1.msra.mxu0 0.0
  %2936 = vmatprep.subr.mxu0 0.0
  %2937 = vmatpush1.msra.mxu0 0.0
  %2938 = vmatprep.mubr.f32.mxu0 0.0
  %2939 = vmatmul.mubr.f32.gmra.mrb[0].mxu0 %v2872
  %v2940 = vpop.f32.mrb[0].mxu0
  %v2941 = vadd.f32 0.0, %v2940
  %v2942 = vpop.f32.mrb[0].mxu0
  %2943 = vdwg.mxu0
  %v2944 = vadd.f32 %v2867, %v2941
  %s2945 = scalar_lea.vmem %s3, 352
  %v2946 = vld [vmem:[%s2945] sm:$0xff]
  %v2947 = vld [vmem:[%s2945 + $0x8] sm:$0xff]
  %v2949 = vsel %vm1258, %v1250, 0
  %2951 = vmatprep.subr.mxu0 0.0
  %2952 = vmatpush1.msra.mxu0 %v2946
  %2953 = vmatprep.subr.mxu0 0.0
  %2954 = vmatpush1.msra.mxu0 %v2947
  %2955 = vmatprep.subr.mxu0 0.0
  %2956 = vmatpush1.msra.mxu0 0.0
  %2957 = vmatprep.subr.mxu0 0.0
  %2958 = vmatpush1.msra.mxu0 0.0
  %2959 = vmatprep.subr.mxu0 0.0
  %2960 = vmatpush1.msra.mxu0 0.0
  %2961 = vmatprep.subr.mxu0 0.0
  %2962 = vmatpush1.msra.mxu0 0.0
  %2963 = vmatprep.subr.mxu0 0.0
  %2964 = vmatpush1.msra.mxu0 0.0
  %2965 = vmatprep.subr.mxu0 0.0
  %2966 = vmatpush1.msra.mxu0 0.0
  %2967 = vmatprep.subr.mxu0 0.0
  %2968 = vmatpush1.msra.mxu0 0.0
  %2969 = vmatprep.subr.mxu0 0.0
  %2970 = vmatpush1.msra.mxu0 0.0
  %2971 = vmatprep.subr.mxu0 0.0
  %2972 = vmatpush1.msra.mxu0 0.0
  %2973 = vmatprep.subr.mxu0 0.0
  %2974 = vmatpush1.msra.mxu0 0.0
  %2975 = vmatprep.subr.mxu0 0.0
  %2976 = vmatpush1.msra.mxu0 0.0
  %2977 = vmatprep.subr.mxu0 0.0
  %2978 = vmatpush1.msra.mxu0 0.0
  %2979 = vmatprep.subr.mxu0 0.0
  %2980 = vmatpush1.msra.mxu0 0.0
  %2981 = vmatprep.subr.mxu0 0.0
  %2982 = vmatpush1.msra.mxu0 0.0
  %2983 = vmatprep.subr.mxu0 0.0
  %2984 = vmatpush1.msra.mxu0 0.0
  %2985 = vmatprep.subr.mxu0 0.0
  %2986 = vmatpush1.msra.mxu0 0.0
  %2987 = vmatprep.subr.mxu0 0.0
  %2988 = vmatpush1.msra.mxu0 0.0
  %2989 = vmatprep.subr.mxu0 0.0
  %2990 = vmatpush1.msra.mxu0 0.0
  %2991 = vmatprep.subr.mxu0 0.0
  %2992 = vmatpush1.msra.mxu0 0.0
  %2993 = vmatprep.subr.mxu0 0.0
  %2994 = vmatpush1.msra.mxu0 0.0
  %2995 = vmatprep.subr.mxu0 0.0
  %2996 = vmatpush1.msra.mxu0 0.0
  %2997 = vmatprep.subr.mxu0 0.0
  %2998 = vmatpush1.msra.mxu0 0.0
  %2999 = vmatprep.subr.mxu0 0.0
  %3000 = vmatpush1.msra.mxu0 0.0
  %3001 = vmatprep.subr.mxu0 0.0
  %3002 = vmatpush1.msra.mxu0 0.0
  %3003 = vmatprep.subr.mxu0 0.0
  %3004 = vmatpush1.msra.mxu0 0.0
  %3005 = vmatprep.subr.mxu0 0.0
  %3006 = vmatpush1.msra.mxu0 0.0
  %3007 = vmatprep.subr.mxu0 0.0
  %3008 = vmatpush1.msra.mxu0 0.0
  %3009 = vmatprep.subr.mxu0 0.0
  %3010 = vmatpush1.msra.mxu0 0.0
  %3011 = vmatprep.subr.mxu0 0.0
  %3012 = vmatpush1.msra.mxu0 0.0
  %3013 = vmatprep.subr.mxu0 0.0
  %3014 = vmatpush1.msra.mxu0 0.0
  %3015 = vmatprep.mubr.f32.mxu0 0.0
  %3016 = vmatmul.mubr.f32.gmra.mrb[0].mxu0 %v2949
  %v3017 = vpop.f32.mrb[0].mxu0
  %v3018 = vadd.f32 0.0, %v3017
  %v3019 = vpop.f32.mrb[0].mxu0
  %3020 = vdwg.mxu0
  %v3021 = vadd.f32 %v2944, %v3018
  %s3022 = scalar_lea.vmem %s3, 368
  %v3023 = vld [vmem:[%s3022] sm:$0xff]
  %v3024 = vld [vmem:[%s3022 + $0x8] sm:$0xff]
  %v3026 = vsel %vm1258, %v1251, 0
  %3028 = vmatprep.subr.mxu0 0.0
  %3029 = vmatpush1.msra.mxu0 %v3023
  %3030 = vmatprep.subr.mxu0 0.0
  %3031 = vmatpush1.msra.mxu0 %v3024
  %3032 = vmatprep.subr.mxu0 0.0
  %3033 = vmatpush1.msra.mxu0 0.0
  %3034 = vmatprep.subr.mxu0 0.0
  %3035 = vmatpush1.msra.mxu0 0.0
  %3036 = vmatprep.subr.mxu0 0.0
  %3037 = vmatpush1.msra.mxu0 0.0
  %3038 = vmatprep.subr.mxu0 0.0
  %3039 = vmatpush1.msra.mxu0 0.0
  %3040 = vmatprep.subr.mxu0 0.0
  %3041 = vmatpush1.msra.mxu0 0.0
  %3042 = vmatprep.subr.mxu0 0.0
  %3043 = vmatpush1.msra.mxu0 0.0
  %3044 = vmatprep.subr.mxu0 0.0
  %3045 = vmatpush1.msra.mxu0 0.0
  %3046 = vmatprep.subr.mxu0 0.0
  %3047 = vmatpush1.msra.mxu0 0.0
  %3048 = vmatprep.subr.mxu0 0.0
  %3049 = vmatpush1.msra.mxu0 0.0
  %3050 = vmatprep.subr.mxu0 0.0
  %3051 = vmatpush1.msra.mxu0 0.0
  %3052 = vmatprep.subr.mxu0 0.0
  %3053 = vmatpush1.msra.mxu0 0.0
  %3054 = vmatprep.subr.mxu0 0.0
  %3055 = vmatpush1.msra.mxu0 0.0
  %3056 = vmatprep.subr.mxu0 0.0
  %3057 = vmatpush1.msra.mxu0 0.0
  %3058 = vmatprep.subr.mxu0 0.0
  %3059 = vmatpush1.msra.mxu0 0.0
  %3060 = vmatprep.subr.mxu0 0.0
  %3061 = vmatpush1.msra.mxu0 0.0
  %3062 = vmatprep.subr.mxu0 0.0
  %3063 = vmatpush1.msra.mxu0 0.0
  %3064 = vmatprep.subr.mxu0 0.0
  %3065 = vmatpush1.msra.mxu0 0.0
  %3066 = vmatprep.subr.mxu0 0.0
  %3067 = vmatpush1.msra.mxu0 0.0
  %3068 = vmatprep.subr.mxu0 0.0
  %3069 = vmatpush1.msra.mxu0 0.0
  %3070 = vmatprep.subr.mxu0 0.0
  %3071 = vmatpush1.msra.mxu0 0.0
  %3072 = vmatprep.subr.mxu0 0.0
  %3073 = vmatpush1.msra.mxu0 0.0
  %3074 = vmatprep.subr.mxu0 0.0
  %3075 = vmatpush1.msra.mxu0 0.0
  %3076 = vmatprep.subr.mxu0 0.0
  %3077 = vmatpush1.msra.mxu0 0.0
  %3078 = vmatprep.subr.mxu0 0.0
  %3079 = vmatpush1.msra.mxu0 0.0
  %3080 = vmatprep.subr.mxu0 0.0
  %3081 = vmatpush1.msra.mxu0 0.0
  %3082 = vmatprep.subr.mxu0 0.0
  %3083 = vmatpush1.msra.mxu0 0.0
  %3084 = vmatprep.subr.mxu0 0.0
  %3085 = vmatpush1.msra.mxu0 0.0
  %3086 = vmatprep.subr.mxu0 0.0
  %3087 = vmatpush1.msra.mxu0 0.0
  %3088 = vmatprep.subr.mxu0 0.0
  %3089 = vmatpush1.msra.mxu0 0.0
  %3090 = vmatprep.subr.mxu0 0.0
  %3091 = vmatpush1.msra.mxu0 0.0
  %3092 = vmatprep.mubr.f32.mxu0 0.0
  %3093 = vmatmul.mubr.f32.gmra.mrb[0].mxu0 %v3026
  %v3094 = vpop.f32.mrb[0].mxu0
  %v3095 = vadd.f32 0.0, %v3094
  %v3096 = vpop.f32.mrb[0].mxu0
  %3097 = vdwg.mxu0
  %v3098 = vadd.f32 %v3021, %v3095
  %s3099 = scalar_lea.vmem %s3, 384
  %v3100 = vld [vmem:[%s3099] sm:$0xff]
  %v3101 = vld [vmem:[%s3099 + $0x8] sm:$0xff]
  %v3103 = vsel %vm1258, %v1252, 0
  %3105 = vmatprep.subr.mxu0 0.0
  %3106 = vmatpush1.msra.mxu0 %v3100
  %3107 = vmatprep.subr.mxu0 0.0
  %3108 = vmatpush1.msra.mxu0 %v3101
  %3109 = vmatprep.subr.mxu0 0.0
  %3110 = vmatpush1.msra.mxu0 0.0
  %3111 = vmatprep.subr.mxu0 0.0
  %3112 = vmatpush1.msra.mxu0 0.0
  %3113 = vmatprep.subr.mxu0 0.0
  %3114 = vmatpush1.msra.mxu0 0.0
  %3115 = vmatprep.subr.mxu0 0.0
  %3116 = vmatpush1.msra.mxu0 0.0
  %3117 = vmatprep.subr.mxu0 0.0
  %3118 = vmatpush1.msra.mxu0 0.0
  %3119 = vmatprep.subr.mxu0 0.0
  %3120 = vmatpush1.msra.mxu0 0.0
  %3121 = vmatprep.subr.mxu0 0.0
  %3122 = vmatpush1.msra.mxu0 0.0
  %3123 = vmatprep.subr.mxu0 0.0
  %3124 = vmatpush1.msra.mxu0 0.0
  %3125 = vmatprep.subr.mxu0 0.0
  %3126 = vmatpush1.msra.mxu0 0.0
  %3127 = vmatprep.subr.mxu0 0.0
  %3128 = vmatpush1.msra.mxu0 0.0
  %3129 = vmatprep.subr.mxu0 0.0
  %3130 = vmatpush1.msra.mxu0 0.0
  %3131 = vmatprep.subr.mxu0 0.0
  %3132 = vmatpush1.msra.mxu0 0.0
  %3133 = vmatprep.subr.mxu0 0.0
  %3134 = vmatpush1.msra.mxu0 0.0
  %3135 = vmatprep.subr.mxu0 0.0
  %3136 = vmatpush1.msra.mxu0 0.0
  %3137 = vmatprep.subr.mxu0 0.0
  %3138 = vmatpush1.msra.mxu0 0.0
  %3139 = vmatprep.subr.mxu0 0.0
  %3140 = vmatpush1.msra.mxu0 0.0
  %3141 = vmatprep.subr.mxu0 0.0
  %3142 = vmatpush1.msra.mxu0 0.0
  %3143 = vmatprep.subr.mxu0 0.0
  %3144 = vmatpush1.msra.mxu0 0.0
  %3145 = vmatprep.subr.mxu0 0.0
  %3146 = vmatpush1.msra.mxu0 0.0
  %3147 = vmatprep.subr.mxu0 0.0
  %3148 = vmatpush1.msra.mxu0 0.0
  %3149 = vmatprep.subr.mxu0 0.0
  %3150 = vmatpush1.msra.mxu0 0.0
  %3151 = vmatprep.subr.mxu0 0.0
  %3152 = vmatpush1.msra.mxu0 0.0
  %3153 = vmatprep.subr.mxu0 0.0
  %3154 = vmatpush1.msra.mxu0 0.0
  %3155 = vmatprep.subr.mxu0 0.0
  %3156 = vmatpush1.msra.mxu0 0.0
  %3157 = vmatprep.subr.mxu0 0.0
  %3158 = vmatpush1.msra.mxu0 0.0
  %3159 = vmatprep.subr.mxu0 0.0
  %3160 = vmatpush1.msra.mxu0 0.0
  %3161 = vmatprep.subr.mxu0 0.0
  %3162 = vmatpush1.msra.mxu0 0.0
  %3163 = vmatprep.subr.mxu0 0.0
  %3164 = vmatpush1.msra.mxu0 0.0
  %3165 = vmatprep.subr.mxu0 0.0
  %3166 = vmatpush1.msra.mxu0 0.0
  %3167 = vmatprep.subr.mxu0 0.0
  %3168 = vmatpush1.msra.mxu0 0.0
  %3169 = vmatprep.mubr.f32.mxu0 0.0
  %3170 = vmatmul.mubr.f32.gmra.mrb[0].mxu0 %v3103
  %v3171 = vpop.f32.mrb[0].mxu0
  %v3172 = vadd.f32 0.0, %v3171
  %v3173 = vpop.f32.mrb[0].mxu0
  %3174 = vdwg.mxu0
  %v3175 = vadd.f32 %v3098, %v3172
  %v3176 = vld [vmem:[%s4] sm:$0x1]
  %v3178 = vlaneseq
  %v3179 = vshrl.u32 %v3178, 7
  %v3180 = vsub.s32 0, %v3179
  %v3181 = vrot.slane %v3176, %v3180
  %v3183 = vadd.f32 %v3175, %v3181
  %v3184 = vmax.f32 %v3183, 0.0
  %v3185 = vld [vmem:[%s5] sm:$0xff]
  %v3186 = vld [vmem:[%s5 + $0x8] sm:$0xff]
  %v3187 = vld [vmem:[%s5 + $0x10] sm:$0xff]
  %v3188 = vld [vmem:[%s5 + $0x18] sm:$0xff]
  %v3189 = vld [vmem:[%s5 + $0x20] sm:$0xff]
  %v3190 = vld [vmem:[%s5 + $0x28] sm:$0xff]
  %v3191 = vld [vmem:[%s5 + $0x30] sm:$0xff]
  %v3192 = vld [vmem:[%s5 + $0x38] sm:$0xff]
  %v3193 = vld [vmem:[%s5 + $0x40] sm:$0xff]
  %v3194 = vld [vmem:[%s5 + $0x48] sm:$0xff]
  %v3195 = vld [vmem:[%s5 + $0x50] sm:$0xff]
  %v3196 = vld [vmem:[%s5 + $0x58] sm:$0xff]
  %v3197 = vld [vmem:[%s5 + $0x60] sm:$0xff]
  %v3198 = vld [vmem:[%s5 + $0x68] sm:$0xff]
  %v3199 = vld [vmem:[%s5 + $0x70] sm:$0xff]
  %v3200 = vld [vmem:[%s6] sm:$0x1]
  %v3202 = vlaneseq
  %v3203 = vshrl.u32 %v3202, 7
  %v3204 = vsub.s32 0, %v3203
  %v3205 = vrot.slane %v3200, %v3204
  %vm3207 = vcmask 982016
  %v3209 = vsel %vm3207, %v3184, 0
  %3211 = vmatprep.subr.mxu0 0.0
  %3212 = vmatpush1.msra.mxu0 %v3185
  %3213 = vmatprep.subr.mxu0 0.0
  %3214 = vmatpush1.msra.mxu0 %v3186
  %3215 = vmatprep.subr.mxu0 0.0
  %3216 = vmatpush1.msra.mxu0 %v3187
  %3217 = vmatprep.subr.mxu0 0.0
  %3218 = vmatpush1.msra.mxu0 %v3188
  %3219 = vmatprep.subr.mxu0 0.0
  %3220 = vmatpush1.msra.mxu0 %v3189
  %3221 = vmatprep.subr.mxu0 0.0
  %3222 = vmatpush1.msra.mxu0 %v3190
  %3223 = vmatprep.subr.mxu0 0.0
  %3224 = vmatpush1.msra.mxu0 %v3191
  %3225 = vmatprep.subr.mxu0 0.0
  %3226 = vmatpush1.msra.mxu0 %v3192
  %3227 = vmatprep.subr.mxu0 0.0
  %3228 = vmatpush1.msra.mxu0 %v3193
  %3229 = vmatprep.subr.mxu0 0.0
  %3230 = vmatpush1.msra.mxu0 %v3194
  %3231 = vmatprep.subr.mxu0 0.0
  %3232 = vmatpush1.msra.mxu0 %v3195
  %3233 = vmatprep.subr.mxu0 0.0
  %3234 = vmatpush1.msra.mxu0 %v3196
  %3235 = vmatprep.subr.mxu0 0.0
  %3236 = vmatpush1.msra.mxu0 %v3197
  %3237 = vmatprep.subr.mxu0 0.0
  %3238 = vmatpush1.msra.mxu0 %v3198
  %3239 = vmatprep.subr.mxu0 0.0
  %3240 = vmatpush1.msra.mxu0 %v3199
  %3241 = vmatprep.subr.mxu0 0.0
  %3242 = vmatpush1.msra.mxu0 0.0
  %3243 = vmatprep.subr.mxu0 0.0
  %3244 = vmatpush1.msra.mxu0 0.0
  %3245 = vmatprep.subr.mxu0 0.0
  %3246 = vmatpush1.msra.mxu0 0.0
  %3247 = vmatprep.subr.mxu0 0.0
  %3248 = vmatpush1.msra.mxu0 0.0
  %3249 = vmatprep.subr.mxu0 0.0
  %3250 = vmatpush1.msra.mxu0 0.0
  %3251 = vmatprep.subr.mxu0 0.0
  %3252 = vmatpush1.msra.mxu0 0.0
  %3253 = vmatprep.subr.mxu0 0.0
  %3254 = vmatpush1.msra.mxu0 0.0
  %3255 = vmatprep.subr.mxu0 0.0
  %3256 = vmatpush1.msra.mxu0 0.0
  %3257 = vmatprep.subr.mxu0 0.0
  %3258 = vmatpush1.msra.mxu0 0.0
  %3259 = vmatprep.subr.mxu0 0.0
  %3260 = vmatpush1.msra.mxu0 0.0
  %3261 = vmatprep.subr.mxu0 0.0
  %3262 = vmatpush1.msra.mxu0 0.0
  %3263 = vmatprep.subr.mxu0 0.0
  %3264 = vmatpush1.msra.mxu0 0.0
  %3265 = vmatprep.subr.mxu0 0.0
  %3266 = vmatpush1.msra.mxu0 0.0
  %3267 = vmatprep.subr.mxu0 0.0
  %3268 = vmatpush1.msra.mxu0 0.0
  %3269 = vmatprep.subr.mxu0 0.0
  %3270 = vmatpush1.msra.mxu0 0.0
  %3271 = vmatprep.subr.mxu0 0.0
  %3272 = vmatpush1.msra.mxu0 0.0
  %3273 = vmatprep.subr.mxu0 0.0
  %3274 = vmatpush1.msra.mxu0 0.0
  %3275 = vmatprep.mubr.f32.mxu0 0.0
  %3276 = vmatmul.mubr.f32.gmra.mrb[0].mxu0 %v3209
  %v3277 = vpop.f32.mrb[0].mxu0
  %v3278 = vadd.f32 %v3205, %v3277
  %v3279 = vpop.f32.mrb[0].mxu0
  %3280 = vdwg.mxu0
  %v3281 = vmax.f32 %v3278, 0.0
  %v3282 = vld [vmem:[%s7] sm:$0xff]
  %v3283 = vld [vmem:[%s7 + $0x8] sm:$0xff]
  %v3284 = vld [vmem:[%s7 + $0x10] sm:$0xff]
  %v3285 = vld [vmem:[%s7 + $0x18] sm:$0xff]
  %v3286 = vld [vmem:[%s7 + $0x20] sm:$0xff]
  %v3287 = vld [vmem:[%s7 + $0x28] sm:$0xff]
  %v3288 = vld [vmem:[%s7 + $0x30] sm:$0xff]
  %v3289 = vld [vmem:[%s7 + $0x38] sm:$0xff]
  %v3290 = vld [vmem:[%s7 + $0x40] sm:$0xff]
  %v3291 = vld [vmem:[%s7 + $0x48] sm:$0xff]
  %v3292 = vld [vmem:[%s7 + $0x50] sm:$0xf]
  %v3293 = vld [vmem:[%s8] sm:$0x1]
  %v3295 = vlaneseq
  %v3296 = vshrl.u32 %v3295, 7
  %v3297 = vsub.s32 0, %v3296
  %v3298 = vrot.slane %v3293, %v3297
  %vm3300 = vcmask 687104
  %v3302 = vsel %vm3300, %v3281, 0
  %vm3304 = vcmask 1043456
  %v3306 = vsel %vm3304, %v3292, 0
  %3308 = vmatprep.subr.mxu0 0.0
  %3309 = vmatpush1.msra.mxu0 %v3282
  %3310 = vmatprep.subr.mxu0 0.0
  %3311 = vmatpush1.msra.mxu0 %v3283
  %3312 = vmatprep.subr.mxu0 0.0
  %3313 = vmatpush1.msra.mxu0 %v3284
  %3314 = vmatprep.subr.mxu0 0.0
  %3315 = vmatpush1.msra.mxu0 %v3285
  %3316 = vmatprep.subr.mxu0 0.0
  %3317 = vmatpush1.msra.mxu0 %v3286
  %3318 = vmatprep.subr.mxu0 0.0
  %3319 = vmatpush1.msra.mxu0 %v3287
  %3320 = vmatprep.subr.mxu0 0.0
  %3321 = vmatpush1.msra.mxu0 %v3288
  %3322 = vmatprep.subr.mxu0 0.0
  %3323 = vmatpush1.msra.mxu0 %v3289
  %3324 = vmatprep.subr.mxu0 0.0
  %3325 = vmatpush1.msra.mxu0 %v3290
  %3326 = vmatprep.subr.mxu0 0.0
  %3327 = vmatpush1.msra.mxu0 %v3291
  %3328 = vmatprep.subr.mxu0 0.0
  %3329 = vmatpush1.msra.mxu0 %v3306
  %3330 = vmatprep.subr.mxu0 0.0
  %3331 = vmatpush1.msra.mxu0 0.0
  %3332 = vmatprep.subr.mxu0 0.0
  %3333 = vmatpush1.msra.mxu0 0.0
  %3334 = vmatprep.subr.mxu0 0.0
  %3335 = vmatpush1.msra.mxu0 0.0
  %3336 = vmatprep.subr.mxu0 0.0
  %3337 = vmatpush1.msra.mxu0 0.0
  %3338 = vmatprep.subr.mxu0 0.0
  %3339 = vmatpush1.msra.mxu0 0.0
  %3340 = vmatprep.subr.mxu0 0.0
  %3341 = vmatpush1.msra.mxu0 0.0
  %3342 = vmatprep.subr.mxu0 0.0
  %3343 = vmatpush1.msra.mxu0 0.0
  %3344 = vmatprep.subr.mxu0 0.0
  %3345 = vmatpush1.msra.mxu0 0.0
  %3346 = vmatprep.subr.mxu0 0.0
  %3347 = vmatpush1.msra.mxu0 0.0
  %3348 = vmatprep.subr.mxu0 0.0
  %3349 = vmatpush1.msra.mxu0 0.0
  %3350 = vmatprep.subr.mxu0 0.0
  %3351 = vmatpush1.msra.mxu0 0.0
  %3352 = vmatprep.subr.mxu0 0.0
  %3353 = vmatpush1.msra.mxu0 0.0
  %3354 = vmatprep.subr.mxu0 0.0
  %3355 = vmatpush1.msra.mxu0 0.0
  %3356 = vmatprep.subr.mxu0 0.0
  %3357 = vmatpush1.msra.mxu0 0.0
  %3358 = vmatprep.subr.mxu0 0.0
  %3359 = vmatpush1.msra.mxu0 0.0
  %3360 = vmatprep.subr.mxu0 0.0
  %3361 = vmatpush1.msra.mxu0 0.0
  %3362 = vmatprep.subr.mxu0 0.0
  %3363 = vmatpush1.msra.mxu0 0.0
  %3364 = vmatprep.subr.mxu0 0.0
  %3365 = vmatpush1.msra.mxu0 0.0
  %3366 = vmatprep.subr.mxu0 0.0
  %3367 = vmatpush1.msra.mxu0 0.0
  %3368 = vmatprep.subr.mxu0 0.0
  %3369 = vmatpush1.msra.mxu0 0.0
  %3370 = vmatprep.subr.mxu0 0.0
  %3371 = vmatpush1.msra.mxu0 0.0
  %3372 = vmatprep.mubr.f32.mxu0 0.0
  %3373 = vmatmul.mubr.f32.gmra.mrb[0].mxu0 %v3302
  %v3374 = vpop.f32.mrb[0].mxu0
  %v3375 = vadd.f32 %v3298, %v3374
  %v3376 = vpop.f32.mrb[0].mxu0
  %3377 = vdwg.mxu0
  %vm3378 = vcmask 80896
  %3379 = vst.msk [vmem:[%s9] sm:$0xff] %vm3378, %v3375
  // Predicated region
  $region38: #{net_forward.3} parent=0 // pred_check
    _
  $region39: #{net_forward.3} parent=0 // pred_check_branch
    %3381 = sbr.rel (0) target = $region41
  $region40: #{net_forward.3} parent=0 // pred_region
    _
  $region41: #{net_forward.3} parent=0 // pred_fallthru
    _
  // Predicated region
  $region42: #{net_forward.3} parent=0 // pred_check
    _
  $region43: #{net_forward.3} parent=0 // pred_check_branch
    %3383 = sbr.rel (0) target = $region45
  $region44: #{net_forward.3} parent=0 // pred_region
    _
  $region45: #{net_forward.3} parent=0 // pred_fallthru
    _

</llo_original>
